<compile_context>
chip_gen: v5e
topology: v5e:2x2
jax: 0.10.0
libtpu: 0.0.40
codegen_flags: <defaults>
</compile_context>

<pallas_src>
import functools
import math

import jax
import jax.numpy as jnp
from jax.experimental import pallas as pl
from jax.experimental.pallas import tpu as pltpu


# ----------------------------------------------------------------------------
# Helpers
# ----------------------------------------------------------------------------

def _exact_gelu(x):
    # PyTorch F.gelu default (erf-based, exact). Kept in f32 (VPU/EUP path).
    return 0.5 * x * (1.0 + jax.lax.erf(x * 0.7071067811865476))


def _pick_tile(dim, max_tile, quantum):
    """Largest tile <= max_tile that is a multiple of `quantum` and evenly
    divides `dim`; falls back to the full dimension (always a legal block)."""
    if dim <= max_tile:
        return dim
    t = (max_tile // quantum) * quantum
    while t >= quantum:
        if dim % t == 0:
            return t
        t -= quantum
    return dim


# ----------------------------------------------------------------------------
# Tiled matmul + bias (+ GELU) (+ fused residual add)
# ----------------------------------------------------------------------------

def _matmul_bias_kernel(*refs, activation, n_k, has_residual):
    if has_residual:
        x_ref, w_ref, b_ref, r_ref, o_ref, acc_ref = refs
    else:
        x_ref, w_ref, b_ref, o_ref, acc_ref = refs
        r_ref = None

    @pl.when(pl.program_id(2) == 0)
    def _():
        acc_ref[...] = jnp.zeros_like(acc_ref)

    # bf16 MXU inputs, f32 accumulation.
    acc_ref[...] += jnp.dot(
        x_ref[...].astype(jnp.bfloat16),
        w_ref[...].astype(jnp.bfloat16),
        preferred_element_type=jnp.float32)

    @pl.when(pl.program_id(2) == n_k - 1)
    def _():
        acc = acc_ref[...] + b_ref[...].astype(jnp.float32)
        if activation == "gelu":
            acc = _exact_gelu(acc)
        if r_ref is not None:
            acc = acc + r_ref[...].astype(jnp.float32)
        o_ref[...] = acc.astype(o_ref.dtype)


def matmul_bias(x, w, b, activation=None, residual=None,
                tm=256, tn=256, tk=512):
    """o = act(x @ w + b) [+ residual]; x:(M,K) w:(K,N) b:(N,) residual:(M,N)."""
    M, K = x.shape
    K2, N = w.shape
    assert K == K2
    tm = _pick_tile(M, tm, 8)     # sublane-dim tile: multiple of 8 (or full)
    tn = _pick_tile(N, tn, 128)   # lane-dim tile: multiple of 128 (or full)
    tk = _pick_tile(K, tk, 128)
    grid = (M // tm, N // tn, K // tk)
    n_k = grid[2]

    in_specs = [
        pl.BlockSpec((tm, tk), lambda i, j, k: (i, k)),
        pl.BlockSpec((tk, tn), lambda i, j, k: (k, j)),
        pl.BlockSpec((1, tn), lambda i, j, k: (0, j)),
    ]
    args = [x, w, b.reshape(1, N)]
    if residual is not None:
        in_specs.append(pl.BlockSpec((tm, tn), lambda i, j, k: (i, j)))
        args.append(residual)

    kern = functools.partial(
        _matmul_bias_kernel, activation=activation, n_k=n_k,
        has_residual=residual is not None)

    return pl.pallas_call(
        kern,
        out_shape=jax.ShapeDtypeStruct((M, N), x.dtype),
        grid=grid,
        in_specs=in_specs,
        out_specs=pl.BlockSpec((tm, tn), lambda i, j, k: (i, j)),
        scratch_shapes=[pltpu.VMEM((tm, tn), jnp.float32)],
        compiler_params=pltpu.CompilerParams(
            dimension_semantics=("parallel", "parallel", "arbitrary")),
    )(*args)


# ----------------------------------------------------------------------------
# Row-tiled LayerNorm
# ----------------------------------------------------------------------------

def _layernorm_kernel(x_ref, g_ref, b_ref, o_ref, *, eps):
    x = x_ref[...].astype(jnp.float32)
    mean = jnp.mean(x, axis=-1, keepdims=True)
    xc = x - mean
    var = jnp.mean(xc * xc, axis=-1, keepdims=True)
    y = xc * jax.lax.rsqrt(var + eps)
    o_ref[...] = (y * g_ref[...] + b_ref[...]).astype(o_ref.dtype)


def layernorm(x, gamma, beta, eps=1e-5, tm=512):
    """LayerNorm over the last axis; x:(M,D), tiled over rows."""
    M, D = x.shape
    tm = _pick_tile(M, tm, 8)
    kern = functools.partial(_layernorm_kernel, eps=eps)
    return pl.pallas_call(
        kern,
        out_shape=jax.ShapeDtypeStruct((M, D), x.dtype),
        grid=(M // tm,),
        in_specs=[
            pl.BlockSpec((tm, D), lambda i: (i, 0)),
            pl.BlockSpec((1, D), lambda i: (0, 0)),
            pl.BlockSpec((1, D), lambda i: (0, 0)),
        ],
        out_specs=pl.BlockSpec((tm, D), lambda i: (i, 0)),
        compiler_params=pltpu.CompilerParams(
            dimension_semantics=("parallel",)),
    )(x, gamma.reshape(1, D), beta.reshape(1, D))


# ----------------------------------------------------------------------------
# Flash attention (online softmax, no (T, T) scores in HBM)
# ----------------------------------------------------------------------------

def _flash_attn_kernel(q_ref, k_ref, v_ref, o_ref, m_sc, l_sc, acc_sc, *, scale):
    kv = pl.program_id(2)

    @pl.when(kv == 0)
    def _():
        m_sc[...] = jnp.full_like(m_sc, -jnp.inf)
        l_sc[...] = jnp.zeros_like(l_sc)
        acc_sc[...] = jnp.zeros_like(acc_sc)

    q = (q_ref[0].astype(jnp.float32) * scale).astype(jnp.bfloat16)  # (tq, Dh)
    k = k_ref[0].astype(jnp.bfloat16)                                # (tkv, Dh)
    s = jnp.dot(q, k.T, preferred_element_type=jnp.float32)          # (tq, tkv)

    m_prev = m_sc[...]
    m_new = jnp.maximum(m_prev, jnp.max(s, axis=-1, keepdims=True))
    alpha = jnp.exp(m_prev - m_new)
    p = jnp.exp(s - m_new)
    l_sc[...] = alpha * l_sc[...] + jnp.sum(p, axis=-1, keepdims=True)
    acc_sc[...] = alpha * acc_sc[...] + jnp.dot(
        p.astype(jnp.bfloat16), v_ref[0].astype(jnp.bfloat16),
        preferred_element_type=jnp.float32)
    m_sc[...] = m_new

    @pl.when(kv == pl.num_programs(2) - 1)
    def _():
        o_ref[0] = (acc_sc[...] * pl.reciprocal(l_sc[...], approx=True)
                    ).astype(o_ref.dtype)


def flash_attention(q, k, v, scale, tq=256, tkv=256):
    """q,k,v: (B*H, T, Dh) -> (B*H, T, Dh), softmax over keys (online)."""
    BH, T, Dh = q.shape
    tq = _pick_tile(T, tq, 8)
    tkv = _pick_tile(T, tkv, 8)
    grid = (BH, T // tq, T // tkv)
    kern = functools.partial(_flash_attn_kernel, scale=scale)
    q_spec = pl.BlockSpec((1, tq, Dh), lambda b, qi, ki: (b, qi, 0))
    kv_spec = pl.BlockSpec((1, tkv, Dh), lambda b, qi, ki: (b, ki, 0))
    return pl.pallas_call(
        kern,
        out_shape=jax.ShapeDtypeStruct((BH, T, Dh), q.dtype),
        grid=grid,
        in_specs=[q_spec, kv_spec, kv_spec],
        out_specs=pl.BlockSpec((1, tq, Dh), lambda b, qi, ki: (b, qi, 0)),
        scratch_shapes=[
            pltpu.VMEM((tq, 1), jnp.float32),
            pltpu.VMEM((tq, 1), jnp.float32),
            pltpu.VMEM((tq, Dh), jnp.float32),
        ],
        compiler_params=pltpu.CompilerParams(
            dimension_semantics=("parallel", "parallel", "arbitrary")),
    )(q, k, v)


# ----------------------------------------------------------------------------
# Conv front-end (k=3, pad=1) as shifted-slice patches + fused matmul+GELU
# ----------------------------------------------------------------------------

def conv1d_gelu(x_nwc, w, b, stride):
    """Conv1d(k=3, pad=1, stride) + exact GELU.  x_nwc:(B,T,C); w:(O,C,K)
    in PyTorch layout.  Patch order is (k, c); weight is transposed to match."""
    B, T, C = x_nwc.shape
    O, C2, K = w.shape
    assert C == C2 and K == 3
    pad = 1
    xp = jnp.pad(x_nwc, ((0, 0), (pad, pad), (0, 0)))
    T_out = (T + 2 * pad - K) // stride + 1
    # TODO(synk): the shifted slices still materialize a (B, T_out, K*C) patch
    # tensor in HBM; a 3-tap accumulating matmul kernel would remove that.
    patches = jnp.concatenate(
        [xp[:, k: k + stride * (T_out - 1) + 1: stride, :] for k in range(K)],
        axis=-1)                                           # (B, T_out, K*C)
    wm = jnp.transpose(w, (2, 1, 0)).reshape(K * C, O)     # (k, c) -> O
    y = matmul_bias(patches.reshape(B * T_out, K * C), wm, b, activation="gelu")
    return y.reshape(B, T_out, O)


# ----------------------------------------------------------------------------
# Glue (positional embeddings, parameter init)
# ----------------------------------------------------------------------------

def sinusoid_position_embedding(length, channels):
    """Whisper encoder sinusoidal positional embeddings."""
    half = channels // 2
    log_timescale_increment = math.log(10000.0) / (half - 1)
    inv_timescales = jnp.exp(
        -log_timescale_increment * jnp.arange(half, dtype=jnp.float32))
    scaled_time = (jnp.arange(length, dtype=jnp.float32)[:, None]
                   * inv_timescales[None, :])
    return jnp.concatenate([jnp.sin(scaled_time), jnp.cos(scaled_time)], axis=1)


def init_params(key, n_mels, d_model, n_layers, d_ff):
    keys = jax.random.split(key, 2 + n_layers)

    def norm(k, shape, scale=0.02):
        return jax.random.normal(k, shape, jnp.float32) * scale

    params = {
        "conv1_w": norm(keys[0], (d_model, n_mels, 3)),
        "conv1_b": jnp.zeros((d_model,), jnp.float32),
        "conv2_w": norm(keys[1], (d_model, d_model, 3)),
        "conv2_b": jnp.zeros((d_model,), jnp.float32),
        "ln_f_g": jnp.ones((d_model,), jnp.float32),
        "ln_f_b": jnp.zeros((d_model,), jnp.float32),
        "layers": [],
    }
    for li in range(n_layers):
        lk = jax.random.split(keys[2 + li], 6)
        lp = {
            "ln1_g": jnp.ones((d_model,), jnp.float32),
            "ln1_b": jnp.zeros((d_model,), jnp.float32),
            "q_w": norm(lk[0], (d_model, d_model)), "q_b": jnp.zeros((d_model,), jnp.float32),
            "k_w": norm(lk[1], (d_model, d_model)),  # Whisper k_proj has no bias
            "v_w": norm(lk[2], (d_model, d_model)), "v_b": jnp.zeros((d_model,), jnp.float32),
            "o_w": norm(lk[3], (d_model, d_model)), "o_b": jnp.zeros((d_model,), jnp.float32),
            "ln2_g": jnp.ones((d_model,), jnp.float32),
            "ln2_b": jnp.zeros((d_model,), jnp.float32),
            "fc1_w": norm(lk[4], (d_model, d_ff)), "fc1_b": jnp.zeros((d_ff,), jnp.float32),
            "fc2_w": norm(lk[5], (d_ff, d_model)), "fc2_b": jnp.zeros((d_model,), jnp.float32),
        }
        params["layers"].append(lp)
    return params


# ----------------------------------------------------------------------------
# Forward pass (Whisper encoder)
# ----------------------------------------------------------------------------

def encoder_layer(h, lp, n_heads):
    B, T, D = h.shape
    Dh = D // n_heads
    M = B * T
    h2 = h.reshape(M, D)

    # --- self-attention (pre-norm) ---
    hn = layernorm(h2, lp["ln1_g"], lp["ln1_b"])

    # Fused QKV projection; k_proj's (structurally zero) bias folded in.
    w_qkv = jnp.concatenate([lp["q_w"], lp["k_w"], lp["v_w"]], axis=1)   # (D, 3D)
    b_qkv = jnp.concatenate(
        [lp["q_b"], jnp.zeros((D,), lp["q_b"].dtype), lp["v_b"]])        # (3D,)
    qkv = matmul_bias(hn, w_qkv, b_qkv)                                  # (M, 3D)
    q, k, v = qkv[:, :D], qkv[:, D:2 * D], qkv[:, 2 * D:]

    # TODO(synk): head split/merge still uses XLA transposes; a head-indexed
    # BlockSpec would remove them but needs Dh-wide lane blocks (< 128 here).
    def split_heads(x):
        return (x.reshape(B, T, n_heads, Dh)
                 .transpose(0, 2, 1, 3)
                 .reshape(B * n_heads, T, Dh))

    o = flash_attention(split_heads(q), split_heads(k), split_heads(v),
                        scale=Dh ** -0.5)
    o = (o.reshape(B, n_heads, T, Dh)
          .transpose(0, 2, 1, 3)
          .reshape(M, D))
    # o-projection with residual add fused into the matmul epilogue.
    h2 = matmul_bias(o, lp["o_w"], lp["o_b"], residual=h2)

    # --- feed-forward (pre-norm) ---
    hn = layernorm(h2, lp["ln2_g"], lp["ln2_b"])
    f = matmul_bias(hn, lp["fc1_w"], lp["fc1_b"], activation="gelu")
    h2 = matmul_bias(f, lp["fc2_w"], lp["fc2_b"], residual=h2)
    return h2.reshape(B, T, D)


def whisper_encoder_feats(x_mel, params, n_heads):
    """x_mel: (B, n_mels, T) log-mel features (PyTorch Conv1d NCW layout).
    Returns encoder hidden states (B, T//2, d_model)."""
    B, C, T = x_mel.shape
    D = params["conv1_w"].shape[0]

    # Single NCW -> NWC transpose; everything downstream is lane-dense NWC.
    x = jnp.transpose(x_mel, (0, 2, 1))                                   # (B, T, C)

    # conv1: Conv1d(n_mels, D, k=3, stride=1, pad=1) + GELU
    h = conv1d_gelu(x, params["conv1_w"], params["conv1_b"], stride=1)    # (B, T, D)
    # conv2: Conv1d(D, D, k=3, stride=2, pad=1) + GELU  (no transpose needed)
    h = conv1d_gelu(h, params["conv2_w"], params["conv2_b"], stride=2)    # (B, T//2, D)
    T2 = h.shape[1]

    # + sinusoidal positional embeddings
    h = h + sinusoid_position_embedding(T2, D)[None].astype(h.dtype)

    # transformer encoder layers
    for lp in params["layers"]:
        h = encoder_layer(h, lp, n_heads)

    # final layer norm
    h = layernorm(h.reshape(B * T2, D),
                  params["ln_f_g"], params["ln_f_b"]).reshape(B, T2, D)
    return h


# ----------------------------------------------------------------------------
# Main
# ----------------------------------------------------------------------------

if __name__ == "__main__":
    B, n_mels, T = 2, 16, 64          # small synthetic shapes (Whisper uses 80 mels)
    d_model, n_layers, n_heads, d_ff = 32, 2, 4, 64

    key = jax.random.PRNGKey(0)
    pkey, xkey = jax.random.split(key)
    params = init_params(pkey, n_mels, d_model, n_layers, d_ff)
    x = jax.random.normal(xkey, (B, n_mels, T), jnp.float32)    # log-mel features

    fwd = jax.jit(functools.partial(whisper_encoder_feats, n_heads=n_heads))
    out = fwd(x, params)
    out = jax.block_until_ready(out)
    assert out.shape == (B, T // 2, d_model), out.shape
    assert bool(jnp.all(jnp.isfinite(out)))
    print("KERNEL_OK")
</pallas_src>

<mosaic_0001>
module attributes {stable_mosaic.version = 11 : i64} {
  func.func @_matmul_bias_kernel(%arg0: i32, %arg1: i32, %arg2: i32, %arg3: memref<128x48xf32, #tpu.memory_space<vmem>>, %arg4: memref<48x32xf32, #tpu.memory_space<vmem>>, %arg5: memref<1x32xf32, #tpu.memory_space<vmem>>, %arg6: memref<128x32xf32, #tpu.memory_space<vmem>>, %arg7: memref<128x32xf32, #tpu.memory_space<vmem>>) attributes {dimension_semantics = [#tpu.dimension_semantics<parallel>, #tpu.dimension_semantics<parallel>, #tpu.dimension_semantics<arbitrary>], iteration_bounds = array<i64: 1, 1, 1>, scalar_prefetch = 0 : i64, scratch_operands = 1 : i64, tpu.core_type = #tpu.core_type<tc>, window_params = [{transform_indices = @transform_0, window_bounds = array<i64: 128, 48>}, {transform_indices = @transform_1, window_bounds = array<i64: 48, 32>}, {transform_indices = @transform_2, window_bounds = array<i64: 1, 32>}, {transform_indices = @transform_3, window_bounds = array<i64: 128, 32>}]} {
    %c0_i32 = arith.constant 0 : i32
    %0 = arith.cmpi eq, %arg2, %c0_i32 : i32
    %1 = arith.extui %0 : i1 to i32
    %c0_i32_0 = arith.constant 0 : i32
    %2 = arith.cmpi ne, %1, %c0_i32_0 : i32
    scf.if %2 {
      %cst_10 = arith.constant 0.000000e+00 : f32
      %14 = vector.broadcast %cst_10 : f32 to vector<128x32xf32>
      %c0_11 = arith.constant 0 : index
      %c0_12 = arith.constant 0 : index
      %15 = vector.load %arg7[%c0_11, %c0_12] : memref<128x32xf32, #tpu.memory_space<vmem>>, vector<128x32xf32>
      tpu.vector_store %arg7[%c0_11, %c0_12], %14 {strides = array<i32>} : memref<128x32xf32, #tpu.memory_space<vmem>>, vector<128x32xf32>,
    } else {
    }
    %c0 = arith.constant 0 : index
    %c0_1 = arith.constant 0 : index
    %3 = vector.load %arg7[%c0, %c0_1] : memref<128x32xf32, #tpu.memory_space<vmem>>, vector<128x32xf32>
    %c0_2 = arith.constant 0 : index
    %c0_3 = arith.constant 0 : index
    %4 = vector.load %arg3[%c0_2, %c0_3] : memref<128x48xf32, #tpu.memory_space<vmem>>, vector<128x48xf32>
    %5 = arith.truncf %4 : vector<128x48xf32> to vector<128x48xbf16>
    %c0_4 = arith.constant 0 : index
    %c0_5 = arith.constant 0 : index
    %6 = vector.load %arg4[%c0_4, %c0_5] : memref<48x32xf32, #tpu.memory_space<vmem>>, vector<48x32xf32>
    %7 = arith.truncf %6 : vector<48x32xf32> to vector<48x32xbf16>
    %cst = arith.constant dense<0.000000e+00> : vector<128x32xf32>
    %8 = tpu.matmul %5, %7, %cst {dimension_numbers = #tpu.dot_dimension_numbers<[1], [0], [0], [1], [0, 0, 1, 1], [], []>} : vector<128x48xbf16>, vector<48x32xbf16>, vector<128x32xf32> -> vector<128x32xf32>
    %9 = arith.addf %3, %8 : vector<128x32xf32>
    %c0_6 = arith.constant 0 : index
    %c0_7 = arith.constant 0 : index
    %10 = vector.load %arg7[%c0_6, %c0_7] : memref<128x32xf32, #tpu.memory_space<vmem>>, vector<128x32xf32>
    tpu.vector_store %arg7[%c0_6, %c0_7], %9 {strides = array<i32>} : memref<128x32xf32, #tpu.memory_space<vmem>>, vector<128x32xf32>,
    %c0_i32_8 = arith.constant 0 : i32
    %11 = arith.cmpi eq, %arg2, %c0_i32_8 : i32
    %12 = arith.extui %11 : i1 to i32
    %c0_i32_9 = arith.constant 0 : i32
    %13 = arith.cmpi ne, %12, %c0_i32_9 : i32
    scf.if %13 {
      %c0_10 = arith.constant 0 : index
      %c0_11 = arith.constant 0 : index
      %14 = vector.load %arg7[%c0_10, %c0_11] : memref<128x32xf32, #tpu.memory_space<vmem>>, vector<128x32xf32>
      %c0_12 = arith.constant 0 : index
      %c0_13 = arith.constant 0 : index
      %15 = vector.load %arg5[%c0_12, %c0_13] : memref<1x32xf32, #tpu.memory_space<vmem>>, vector<1x32xf32>
      %16 = vector.broadcast %15 : vector<1x32xf32> to vector<128x32xf32>
      %17 = arith.addf %14, %16 : vector<128x32xf32>
      %cst_14 = arith.constant 5.000000e-01 : f32
      %18 = vector.broadcast %cst_14 : f32 to vector<128x32xf32>
      %19 = arith.mulf %18, %17 : vector<128x32xf32>
      %cst_15 = arith.constant 0.707106769 : f32
      %20 = vector.broadcast %cst_15 : f32 to vector<128x32xf32>
      %21 = arith.mulf %17, %20 : vector<128x32xf32>
      %22 = math.erf %21 : vector<128x32xf32>
      %cst_16 = arith.constant 1.000000e+00 : f32
      %23 = vector.broadcast %cst_16 : f32 to vector<128x32xf32>
      %24 = arith.addf %23, %22 : vector<128x32xf32>
      %25 = arith.mulf %19, %24 : vector<128x32xf32>
      %c0_17 = arith.constant 0 : index
      %c0_18 = arith.constant 0 : index
      %26 = vector.load %arg6[%c0_17, %c0_18] : memref<128x32xf32, #tpu.memory_space<vmem>>, vector<128x32xf32>
      tpu.vector_store %arg6[%c0_17, %c0_18], %25 {strides = array<i32>} : memref<128x32xf32, #tpu.memory_space<vmem>>, vector<128x32xf32>,
    } else {
    }
    return
  }
  func.func @transform_0(%arg0: i32, %arg1: i32, %arg2: i32) -> (i32, i32) {
    %c0_i32 = arith.constant 0 : i32
    return %arg0, %arg2 : i32, i32
  }
  func.func @transform_1(%arg0: i32, %arg1: i32, %arg2: i32) -> (i32, i32) {
    %c0_i32 = arith.constant 0 : i32
    return %arg2, %arg1 : i32, i32
  }
  func.func @transform_2(%arg0: i32, %arg1: i32, %arg2: i32) -> (i32, i32) {
    %c0_i32 = arith.constant 0 : i32
    %c0_i32_0 = arith.constant 0 : i32
    return %c0_i32, %arg1 : i32, i32
  }
  func.func @transform_3(%arg0: i32, %arg1: i32, %arg2: i32) -> (i32, i32) {
    %c0_i32 = arith.constant 0 : i32
    return %arg0, %arg1 : i32, i32
  }
}

module attributes {stable_mosaic.version = 11 : i64} {
  func.func @_matmul_bias_kernel(%arg0: i32, %arg1: i32, %arg2: i32, %arg3: memref<64x96xf32, #tpu.memory_space<vmem>>, %arg4: memref<96x32xf32, #tpu.memory_space<vmem>>, %arg5: memref<1x32xf32, #tpu.memory_space<vmem>>, %arg6: memref<64x32xf32, #tpu.memory_space<vmem>>, %arg7: memref<64x32xf32, #tpu.memory_space<vmem>>) attributes {dimension_semantics = [#tpu.dimension_semantics<parallel>, #tpu.dimension_semantics<parallel>, #tpu.dimension_semantics<arbitrary>], iteration_bounds = array<i64: 1, 1, 1>, scalar_prefetch = 0 : i64, scratch_operands = 1 : i64, tpu.core_type = #tpu.core_type<tc>, window_params = [{transform_indices = @transform_0, window_bounds = array<i64: 64, 96>}, {transform_indices = @transform_1, window_bounds = array<i64: 96, 32>}, {transform_indices = @transform_2, window_bounds = array<i64: 1, 32>}, {transform_indices = @transform_3, window_bounds = array<i64: 64, 32>}]} {
    %c0_i32 = arith.constant 0 : i32
    %0 = arith.cmpi eq, %arg2, %c0_i32 : i32
    %1 = arith.extui %0 : i1 to i32
    %c0_i32_0 = arith.constant 0 : i32
    %2 = arith.cmpi ne, %1, %c0_i32_0 : i32
    scf.if %2 {
      %cst_10 = arith.constant 0.000000e+00 : f32
      %14 = vector.broadcast %cst_10 : f32 to vector<64x32xf32>
      %c0_11 = arith.constant 0 : index
      %c0_12 = arith.constant 0 : index
      %15 = vector.load %arg7[%c0_11, %c0_12] : memref<64x32xf32, #tpu.memory_space<vmem>>, vector<64x32xf32>
      tpu.vector_store %arg7[%c0_11, %c0_12], %14 {strides = array<i32>} : memref<64x32xf32, #tpu.memory_space<vmem>>, vector<64x32xf32>,
    } else {
    }
    %c0 = arith.constant 0 : index
    %c0_1 = arith.constant 0 : index
    %3 = vector.load %arg7[%c0, %c0_1] : memref<64x32xf32, #tpu.memory_space<vmem>>, vector<64x32xf32>
    %c0_2 = arith.constant 0 : index
    %c0_3 = arith.constant 0 : index
    %4 = vector.load %arg3[%c0_2, %c0_3] : memref<64x96xf32, #tpu.memory_space<vmem>>, vector<64x96xf32>
    %5 = arith.truncf %4 : vector<64x96xf32> to vector<64x96xbf16>
    %c0_4 = arith.constant 0 : index
    %c0_5 = arith.constant 0 : index
    %6 = vector.load %arg4[%c0_4, %c0_5] : memref<96x32xf32, #tpu.memory_space<vmem>>, vector<96x32xf32>
    %7 = arith.truncf %6 : vector<96x32xf32> to vector<96x32xbf16>
    %cst = arith.constant dense<0.000000e+00> : vector<64x32xf32>
    %8 = tpu.matmul %5, %7, %cst {dimension_numbers = #tpu.dot_dimension_numbers<[1], [0], [0], [1], [0, 0, 1, 1], [], []>} : vector<64x96xbf16>, vector<96x32xbf16>, vector<64x32xf32> -> vector<64x32xf32>
    %9 = arith.addf %3, %8 : vector<64x32xf32>
    %c0_6 = arith.constant 0 : index
    %c0_7 = arith.constant 0 : index
    %10 = vector.load %arg7[%c0_6, %c0_7] : memref<64x32xf32, #tpu.memory_space<vmem>>, vector<64x32xf32>
    tpu.vector_store %arg7[%c0_6, %c0_7], %9 {strides = array<i32>} : memref<64x32xf32, #tpu.memory_space<vmem>>, vector<64x32xf32>,
    %c0_i32_8 = arith.constant 0 : i32
    %11 = arith.cmpi eq, %arg2, %c0_i32_8 : i32
    %12 = arith.extui %11 : i1 to i32
    %c0_i32_9 = arith.constant 0 : i32
    %13 = arith.cmpi ne, %12, %c0_i32_9 : i32
    scf.if %13 {
      %c0_10 = arith.constant 0 : index
      %c0_11 = arith.constant 0 : index
      %14 = vector.load %arg7[%c0_10, %c0_11] : memref<64x32xf32, #tpu.memory_space<vmem>>, vector<64x32xf32>
      %c0_12 = arith.constant 0 : index
      %c0_13 = arith.constant 0 : index
      %15 = vector.load %arg5[%c0_12, %c0_13] : memref<1x32xf32, #tpu.memory_space<vmem>>, vector<1x32xf32>
      %16 = vector.broadcast %15 : vector<1x32xf32> to vector<64x32xf32>
      %17 = arith.addf %14, %16 : vector<64x32xf32>
      %cst_14 = arith.constant 5.000000e-01 : f32
      %18 = vector.broadcast %cst_14 : f32 to vector<64x32xf32>
      %19 = arith.mulf %18, %17 : vector<64x32xf32>
      %cst_15 = arith.constant 0.707106769 : f32
      %20 = vector.broadcast %cst_15 : f32 to vector<64x32xf32>
      %21 = arith.mulf %17, %20 : vector<64x32xf32>
      %22 = math.erf %21 : vector<64x32xf32>
      %cst_16 = arith.constant 1.000000e+00 : f32
      %23 = vector.broadcast %cst_16 : f32 to vector<64x32xf32>
      %24 = arith.addf %23, %22 : vector<64x32xf32>
      %25 = arith.mulf %19, %24 : vector<64x32xf32>
      %c0_17 = arith.constant 0 : index
      %c0_18 = arith.constant 0 : index
      %26 = vector.load %arg6[%c0_17, %c0_18] : memref<64x32xf32, #tpu.memory_space<vmem>>, vector<64x32xf32>
      tpu.vector_store %arg6[%c0_17, %c0_18], %25 {strides = array<i32>} : memref<64x32xf32, #tpu.memory_space<vmem>>, vector<64x32xf32>,
    } else {
    }
    return
  }
  func.func @transform_0(%arg0: i32, %arg1: i32, %arg2: i32) -> (i32, i32) {
    %c0_i32 = arith.constant 0 : i32
    return %arg0, %arg2 : i32, i32
  }
  func.func @transform_1(%arg0: i32, %arg1: i32, %arg2: i32) -> (i32, i32) {
    %c0_i32 = arith.constant 0 : i32
    return %arg2, %arg1 : i32, i32
  }
  func.func @transform_2(%arg0: i32, %arg1: i32, %arg2: i32) -> (i32, i32) {
    %c0_i32 = arith.constant 0 : i32
    %c0_i32_0 = arith.constant 0 : i32
    return %c0_i32, %arg1 : i32, i32
  }
  func.func @transform_3(%arg0: i32, %arg1: i32, %arg2: i32) -> (i32, i32) {
    %c0_i32 = arith.constant 0 : i32
    return %arg0, %arg1 : i32, i32
  }
}

module attributes {stable_mosaic.version = 11 : i64} {
  func.func @_layernorm_kernel(%arg0: i32, %arg1: memref<64x32xf32, #tpu.memory_space<vmem>>, %arg2: memref<1x32xf32, #tpu.memory_space<vmem>>, %arg3: memref<1x32xf32, #tpu.memory_space<vmem>>, %arg4: memref<64x32xf32, #tpu.memory_space<vmem>>) attributes {dimension_semantics = [#tpu.dimension_semantics<parallel>], iteration_bounds = array<i64: 1>, scalar_prefetch = 0 : i64, scratch_operands = 0 : i64, tpu.core_type = #tpu.core_type<tc>, window_params = [{transform_indices = @transform_0, window_bounds = array<i64: 64, 32>}, {pipeline_mode = #tpu.pipeline_mode<synchronous>, transform_indices = @transform_1, window_bounds = array<i64: 1, 32>}, {pipeline_mode = #tpu.pipeline_mode<synchronous>, transform_indices = @transform_2, window_bounds = array<i64: 1, 32>}, {transform_indices = @transform_3, window_bounds = array<i64: 64, 32>}]} {
    %c0 = arith.constant 0 : index
    %c0_0 = arith.constant 0 : index
    %0 = vector.load %arg1[%c0, %c0_0] : memref<64x32xf32, #tpu.memory_space<vmem>>, vector<64x32xf32>
    %cst = arith.constant dense<0.000000e+00> : vector<64xf32>
    %1 = vector.multi_reduction <add>, %0, %cst [1] : vector<64x32xf32> to vector<64xf32>
    %2 = vector.shape_cast %1 : vector<64xf32> to vector<64x1xf32>
    %cst_1 = arith.constant 3.200000e+01 : f32
    %3 = vector.broadcast %cst_1 : f32 to vector<64x1xf32>
    %4 = arith.divf %2, %3 : vector<64x1xf32>
    %5 = vector.broadcast %4 : vector<64x1xf32> to vector<64x32xf32>
    %6 = arith.subf %0, %5 : vector<64x32xf32>
    %7 = arith.mulf %6, %6 : vector<64x32xf32>
    %cst_2 = arith.constant dense<0.000000e+00> : vector<64xf32>
    %8 = vector.multi_reduction <add>, %7, %cst_2 [1] : vector<64x32xf32> to vector<64xf32>
    %9 = vector.shape_cast %8 : vector<64xf32> to vector<64x1xf32>
    %cst_3 = arith.constant 3.200000e+01 : f32
    %10 = vector.broadcast %cst_3 : f32 to vector<64x1xf32>
    %11 = arith.divf %9, %10 : vector<64x1xf32>
    %cst_4 = arith.constant 9.99999974E-6 : f32
    %12 = vector.broadcast %cst_4 : f32 to vector<64x1xf32>
    %13 = arith.addf %11, %12 : vector<64x1xf32>
    %14 = math.rsqrt %13 : vector<64x1xf32>
    %15 = vector.broadcast %14 : vector<64x1xf32> to vector<64x32xf32>
    %16 = arith.mulf %6, %15 : vector<64x32xf32>
    %c0_5 = arith.constant 0 : index
    %c0_6 = arith.constant 0 : index
    %17 = vector.load %arg2[%c0_5, %c0_6] : memref<1x32xf32, #tpu.memory_space<vmem>>, vector<1x32xf32>
    %18 = vector.broadcast %17 : vector<1x32xf32> to vector<64x32xf32>
    %19 = arith.mulf %16, %18 : vector<64x32xf32>
    %c0_7 = arith.constant 0 : index
    %c0_8 = arith.constant 0 : index
    %20 = vector.load %arg3[%c0_7, %c0_8] : memref<1x32xf32, #tpu.memory_space<vmem>>, vector<1x32xf32>
    %21 = vector.broadcast %20 : vector<1x32xf32> to vector<64x32xf32>
    %22 = arith.addf %19, %21 : vector<64x32xf32>
    %c0_9 = arith.constant 0 : index
    %c0_10 = arith.constant 0 : index
    %23 = vector.load %arg4[%c0_9, %c0_10] : memref<64x32xf32, #tpu.memory_space<vmem>>, vector<64x32xf32>
    tpu.vector_store %arg4[%c0_9, %c0_10], %22 {strides = array<i32>} : memref<64x32xf32, #tpu.memory_space<vmem>>, vector<64x32xf32>,
    return
  }
  func.func @transform_0(%arg0: i32) -> (i32, i32) {
    %c0_i32 = arith.constant 0 : i32
    %c0_i32_0 = arith.constant 0 : i32
    return %arg0, %c0_i32 : i32, i32
  }
  func.func @transform_1(%arg0: i32) -> (i32, i32) {
    %c0_i32 = arith.constant 0 : i32
    %c0_i32_0 = arith.constant 0 : i32
    %c0_i32_1 = arith.constant 0 : i32
    return %c0_i32, %c0_i32_0 : i32, i32
  }
  func.func @transform_2(%arg0: i32) -> (i32, i32) {
    %c0_i32 = arith.constant 0 : i32
    %c0_i32_0 = arith.constant 0 : i32
    %c0_i32_1 = arith.constant 0 : i32
    return %c0_i32, %c0_i32_0 : i32, i32
  }
  func.func @transform_3(%arg0: i32) -> (i32, i32) {
    %c0_i32 = arith.constant 0 : i32
    %c0_i32_0 = arith.constant 0 : i32
    return %arg0, %c0_i32 : i32, i32
  }
}

module attributes {stable_mosaic.version = 11 : i64} {
  func.func @_matmul_bias_kernel(%arg0: i32, %arg1: i32, %arg2: i32, %arg3: memref<64x32xf32, #tpu.memory_space<vmem>>, %arg4: memref<32x96xf32, #tpu.memory_space<vmem>>, %arg5: memref<1x96xf32, #tpu.memory_space<vmem>>, %arg6: memref<64x96xf32, #tpu.memory_space<vmem>>, %arg7: memref<64x96xf32, #tpu.memory_space<vmem>>) attributes {dimension_semantics = [#tpu.dimension_semantics<parallel>, #tpu.dimension_semantics<parallel>, #tpu.dimension_semantics<arbitrary>], iteration_bounds = array<i64: 1, 1, 1>, scalar_prefetch = 0 : i64, scratch_operands = 1 : i64, tpu.core_type = #tpu.core_type<tc>, window_params = [{transform_indices = @transform_0, window_bounds = array<i64: 64, 32>}, {transform_indices = @transform_1, window_bounds = array<i64: 32, 96>}, {transform_indices = @transform_2, window_bounds = array<i64: 1, 96>}, {transform_indices = @transform_3, window_bounds = array<i64: 64, 96>}]} {
    %c0_i32 = arith.constant 0 : i32
    %0 = arith.cmpi eq, %arg2, %c0_i32 : i32
    %1 = arith.extui %0 : i1 to i32
    %c0_i32_0 = arith.constant 0 : i32
    %2 = arith.cmpi ne, %1, %c0_i32_0 : i32
    scf.if %2 {
      %cst_10 = arith.constant 0.000000e+00 : f32
      %14 = vector.broadcast %cst_10 : f32 to vector<64x96xf32>
      %c0_11 = arith.constant 0 : index
      %c0_12 = arith.constant 0 : index
      %15 = vector.load %arg7[%c0_11, %c0_12] : memref<64x96xf32, #tpu.memory_space<vmem>>, vector<64x96xf32>
      tpu.vector_store %arg7[%c0_11, %c0_12], %14 {strides = array<i32>} : memref<64x96xf32, #tpu.memory_space<vmem>>, vector<64x96xf32>,
    } else {
    }
    %c0 = arith.constant 0 : index
    %c0_1 = arith.constant 0 : index
    %3 = vector.load %arg7[%c0, %c0_1] : memref<64x96xf32, #tpu.memory_space<vmem>>, vector<64x96xf32>
    %c0_2 = arith.constant 0 : index
    %c0_3 = arith.constant 0 : index
    %4 = vector.load %arg3[%c0_2, %c0_3] : memref<64x32xf32, #tpu.memory_space<vmem>>, vector<64x32xf32>
    %5 = arith.truncf %4 : vector<64x32xf32> to vector<64x32xbf16>
    %c0_4 = arith.constant 0 : index
    %c0_5 = arith.constant 0 : index
    %6 = vector.load %arg4[%c0_4, %c0_5] : memref<32x96xf32, #tpu.memory_space<vmem>>, vector<32x96xf32>
    %7 = arith.truncf %6 : vector<32x96xf32> to vector<32x96xbf16>
    %cst = arith.constant dense<0.000000e+00> : vector<64x96xf32>
    %8 = tpu.matmul %5, %7, %cst {dimension_numbers = #tpu.dot_dimension_numbers<[1], [0], [0], [1], [0, 0, 1, 1], [], []>} : vector<64x32xbf16>, vector<32x96xbf16>, vector<64x96xf32> -> vector<64x96xf32>
    %9 = arith.addf %3, %8 : vector<64x96xf32>
    %c0_6 = arith.constant 0 : index
    %c0_7 = arith.constant 0 : index
    %10 = vector.load %arg7[%c0_6, %c0_7] : memref<64x96xf32, #tpu.memory_space<vmem>>, vector<64x96xf32>
    tpu.vector_store %arg7[%c0_6, %c0_7], %9 {strides = array<i32>} : memref<64x96xf32, #tpu.memory_space<vmem>>, vector<64x96xf32>,
    %c0_i32_8 = arith.constant 0 : i32
    %11 = arith.cmpi eq, %arg2, %c0_i32_8 : i32
    %12 = arith.extui %11 : i1 to i32
    %c0_i32_9 = arith.constant 0 : i32
    %13 = arith.cmpi ne, %12, %c0_i32_9 : i32
    scf.if %13 {
      %c0_10 = arith.constant 0 : index
      %c0_11 = arith.constant 0 : index
      %14 = vector.load %arg7[%c0_10, %c0_11] : memref<64x96xf32, #tpu.memory_space<vmem>>, vector<64x96xf32>
      %c0_12 = arith.constant 0 : index
      %c0_13 = arith.constant 0 : index
      %15 = vector.load %arg5[%c0_12, %c0_13] : memref<1x96xf32, #tpu.memory_space<vmem>>, vector<1x96xf32>
      %16 = vector.broadcast %15 : vector<1x96xf32> to vector<64x96xf32>
      %17 = arith.addf %14, %16 : vector<64x96xf32>
      %c0_14 = arith.constant 0 : index
      %c0_15 = arith.constant 0 : index
      %18 = vector.load %arg6[%c0_14, %c0_15] : memref<64x96xf32, #tpu.memory_space<vmem>>, vector<64x96xf32>
      tpu.vector_store %arg6[%c0_14, %c0_15], %17 {strides = array<i32>} : memref<64x96xf32, #tpu.memory_space<vmem>>, vector<64x96xf32>,
    } else {
    }
    return
  }
  func.func @transform_0(%arg0: i32, %arg1: i32, %arg2: i32) -> (i32, i32) {
    %c0_i32 = arith.constant 0 : i32
    return %arg0, %arg2 : i32, i32
  }
  func.func @transform_1(%arg0: i32, %arg1: i32, %arg2: i32) -> (i32, i32) {
    %c0_i32 = arith.constant 0 : i32
    return %arg2, %arg1 : i32, i32
  }
  func.func @transform_2(%arg0: i32, %arg1: i32, %arg2: i32) -> (i32, i32) {
    %c0_i32 = arith.constant 0 : i32
    %c0_i32_0 = arith.constant 0 : i32
    return %c0_i32, %arg1 : i32, i32
  }
  func.func @transform_3(%arg0: i32, %arg1: i32, %arg2: i32) -> (i32, i32) {
    %c0_i32 = arith.constant 0 : i32
    return %arg0, %arg1 : i32, i32
  }
}

module attributes {stable_mosaic.version = 11 : i64} {
  func.func @_flash_attn_kernel(%arg0: i32, %arg1: i32, %arg2: i32, %arg3: memref<1x32x8xf32, #tpu.memory_space<vmem>>, %arg4: memref<1x32x8xf32, #tpu.memory_space<vmem>>, %arg5: memref<1x32x8xf32, #tpu.memory_space<vmem>>, %arg6: memref<1x32x8xf32, #tpu.memory_space<vmem>>, %arg7: memref<32x1xf32, #tpu.memory_space<vmem>>, %arg8: memref<32x1xf32, #tpu.memory_space<vmem>>, %arg9: memref<32x8xf32, #tpu.memory_space<vmem>>) attributes {dimension_semantics = [#tpu.dimension_semantics<parallel>, #tpu.dimension_semantics<parallel>, #tpu.dimension_semantics<arbitrary>], iteration_bounds = array<i64: 8, 1, 1>, scalar_prefetch = 0 : i64, scratch_operands = 3 : i64, tpu.core_type = #tpu.core_type<tc>, window_params = [{transform_indices = @transform_0, window_bounds = array<i64: 1, 32, 8>}, {transform_indices = @transform_1, window_bounds = array<i64: 1, 32, 8>}, {transform_indices = @transform_2, window_bounds = array<i64: 1, 32, 8>}, {transform_indices = @transform_3, window_bounds = array<i64: 1, 32, 8>}]} {
    %c0_i32 = arith.constant 0 : i32
    %0 = arith.cmpi eq, %arg2, %c0_i32 : i32
    %1 = arith.extui %0 : i1 to i32
    %c0_i32_0 = arith.constant 0 : i32
    %2 = arith.cmpi ne, %1, %c0_i32_0 : i32
    scf.if %2 {
      %cst_27 = arith.constant 0xFF800000 : f32
      %42 = vector.broadcast %cst_27 : f32 to vector<32x1xf32>
      %c0_28 = arith.constant 0 : index
      %c0_29 = arith.constant 0 : index
      %43 = vector.load %arg7[%c0_28, %c0_29] : memref<32x1xf32, #tpu.memory_space<vmem>>, vector<32x1xf32>
      tpu.vector_store %arg7[%c0_28, %c0_29], %42 {strides = array<i32>} : memref<32x1xf32, #tpu.memory_space<vmem>>, vector<32x1xf32>,
      %cst_30 = arith.constant 0.000000e+00 : f32
      %44 = vector.broadcast %cst_30 : f32 to vector<32x1xf32>
      %c0_31 = arith.constant 0 : index
      %c0_32 = arith.constant 0 : index
      %45 = vector.load %arg8[%c0_31, %c0_32] : memref<32x1xf32, #tpu.memory_space<vmem>>, vector<32x1xf32>
      tpu.vector_store %arg8[%c0_31, %c0_32], %44 {strides = array<i32>} : memref<32x1xf32, #tpu.memory_space<vmem>>, vector<32x1xf32>,
      %cst_33 = arith.constant 0.000000e+00 : f32
      %46 = vector.broadcast %cst_33 : f32 to vector<32x8xf32>
      %c0_34 = arith.constant 0 : index
      %c0_35 = arith.constant 0 : index
      %47 = vector.load %arg9[%c0_34, %c0_35] : memref<32x8xf32, #tpu.memory_space<vmem>>, vector<32x8xf32>
      tpu.vector_store %arg9[%c0_34, %c0_35], %46 {strides = array<i32>} : memref<32x8xf32, #tpu.memory_space<vmem>>, vector<32x8xf32>,
    } else {
    }
    %c0 = arith.constant 0 : index
    %c0_1 = arith.constant 0 : index
    %c0_2 = arith.constant 0 : index
    %3 = vector.load %arg3[%c0, %c0_1, %c0_2] : memref<1x32x8xf32, #tpu.memory_space<vmem>>, vector<1x32x8xf32>
    %4 = vector.shape_cast %3 : vector<1x32x8xf32> to vector<32x8xf32>
    %cst = arith.constant 0.353553385 : f32
    %5 = vector.broadcast %cst : f32 to vector<32x8xf32>
    %6 = arith.mulf %4, %5 : vector<32x8xf32>
    %7 = arith.truncf %6 : vector<32x8xf32> to vector<32x8xbf16>
    %c0_3 = arith.constant 0 : index
    %c0_4 = arith.constant 0 : index
    %c0_5 = arith.constant 0 : index
    %8 = vector.load %arg4[%c0_3, %c0_4, %c0_5] : memref<1x32x8xf32, #tpu.memory_space<vmem>>, vector<1x32x8xf32>
    %9 = vector.shape_cast %8 : vector<1x32x8xf32> to vector<32x8xf32>
    %10 = arith.truncf %9 : vector<32x8xf32> to vector<32x8xbf16>
    %11 = tpu.transpose %10, [1, 0] : vector<32x8xbf16> -> vector<8x32xbf16>
    %cst_6 = arith.constant dense<0.000000e+00> : vector<32x32xf32>
    %12 = tpu.matmul %7, %11, %cst_6 {dimension_numbers = #tpu.dot_dimension_numbers<[1], [0], [0], [1], [0, 0, 1, 1], [], []>} : vector<32x8xbf16>, vector<8x32xbf16>, vector<32x32xf32> -> vector<32x32xf32>
    %c0_7 = arith.constant 0 : index
    %c0_8 = arith.constant 0 : index
    %13 = vector.load %arg7[%c0_7, %c0_8] : memref<32x1xf32, #tpu.memory_space<vmem>>, vector<32x1xf32>
    %cst_9 = arith.constant dense<0xFF800000> : vector<32xf32>
    %14 = vector.multi_reduction <maximumf>, %12, %cst_9 [1] : vector<32x32xf32> to vector<32xf32>
    %15 = vector.shape_cast %14 : vector<32xf32> to vector<32x1xf32>
    %16 = arith.maximumf %13, %15 : vector<32x1xf32>
    %17 = arith.subf %13, %16 : vector<32x1xf32>
    %18 = math.exp %17 : vector<32x1xf32>
    %19 = vector.broadcast %16 : vector<32x1xf32> to vector<32x32xf32>
    %20 = arith.subf %12, %19 : vector<32x32xf32>
    %21 = math.exp %20 : vector<32x32xf32>
    %c0_10 = arith.constant 0 : index
    %c0_11 = arith.constant 0 : index
    %22 = vector.load %arg8[%c0_10, %c0_11] : memref<32x1xf32, #tpu.memory_space<vmem>>, vector<32x1xf32>
    %23 = arith.mulf %18, %22 : vector<32x1xf32>
    %cst_12 = arith.constant dense<0.000000e+00> : vector<32xf32>
    %24 = vector.multi_reduction <add>, %21, %cst_12 [1] : vector<32x32xf32> to vector<32xf32>
    %25 = vector.shape_cast %24 : vector<32xf32> to vector<32x1xf32>
    %26 = arith.addf %23, %25 : vector<32x1xf32>
    %c0_13 = arith.constant 0 : index
    %c0_14 = arith.constant 0 : index
    %27 = vector.load %arg8[%c0_13, %c0_14] : memref<32x1xf32, #tpu.memory_space<vmem>>, vector<32x1xf32>
    tpu.vector_store %arg8[%c0_13, %c0_14], %26 {strides = array<i32>} : memref<32x1xf32, #tpu.memory_space<vmem>>, vector<32x1xf32>,
    %c0_15 = arith.constant 0 : index
    %c0_16 = arith.constant 0 : index
    %28 = vector.load %arg9[%c0_15, %c0_16] : memref<32x8xf32, #tpu.memory_space<vmem>>, vector<32x8xf32>
    %29 = vector.broadcast %18 : vector<32x1xf32> to vector<32x8xf32>
    %30 = arith.mulf %29, %28 : vector<32x8xf32>
    %31 = arith.truncf %21 : vector<32x32xf32> to vector<32x32xbf16>
    %c0_17 = arith.constant 0 : index
    %c0_18 = arith.constant 0 : index
    %c0_19 = arith.constant 0 : index
    %32 = vector.load %arg5[%c0_17, %c0_18, %c0_19] : memref<1x32x8xf32, #tpu.memory_space<vmem>>, vector<1x32x8xf32>
    %33 = vector.shape_cast %32 : vector<1x32x8xf32> to vector<32x8xf32>
    %34 = arith.truncf %33 : vector<32x8xf32> to vector<32x8xbf16>
    %cst_20 = arith.constant dense<0.000000e+00> : vector<32x8xf32>
    %35 = tpu.matmul %31, %34, %cst_20 {dimension_numbers = #tpu.dot_dimension_numbers<[1], [0], [0], [1], [0, 0, 1, 1], [], []>} : vector<32x32xbf16>, vector<32x8xbf16>, vector<32x8xf32> -> vector<32x8xf32>
    %36 = arith.addf %30, %35 : vector<32x8xf32>
    %c0_21 = arith.constant 0 : index
    %c0_22 = arith.constant 0 : index
    %37 = vector.load %arg9[%c0_21, %c0_22] : memref<32x8xf32, #tpu.memory_space<vmem>>, vector<32x8xf32>
    tpu.vector_store %arg9[%c0_21, %c0_22], %36 {strides = array<i32>} : memref<32x8xf32, #tpu.memory_space<vmem>>, vector<32x8xf32>,
    %c0_23 = arith.constant 0 : index
    %c0_24 = arith.constant 0 : index
    %38 = vector.load %arg7[%c0_23, %c0_24] : memref<32x1xf32, #tpu.memory_space<vmem>>, vector<32x1xf32>
    tpu.vector_store %arg7[%c0_23, %c0_24], %16 {strides = array<i32>} : memref<32x1xf32, #tpu.memory_space<vmem>>, vector<32x1xf32>,
    %c0_i32_25 = arith.constant 0 : i32
    %39 = arith.cmpi eq, %arg2, %c0_i32_25 : i32
    %40 = arith.extui %39 : i1 to i32
    %c0_i32_26 = arith.constant 0 : i32
    %41 = arith.cmpi ne, %40, %c0_i32_26 : i32
    scf.if %41 {
      %c0_27 = arith.constant 0 : index
      %c0_28 = arith.constant 0 : index
      %42 = vector.load %arg9[%c0_27, %c0_28] : memref<32x8xf32, #tpu.memory_space<vmem>>, vector<32x8xf32>
      %c0_29 = arith.constant 0 : index
      %c0_30 = arith.constant 0 : index
      %43 = vector.load %arg8[%c0_29, %c0_30] : memref<32x1xf32, #tpu.memory_space<vmem>>, vector<32x1xf32>
      %44 = tpu.reciprocal %43 {approx = true} : vector<32x1xf32> -> vector<32x1xf32>
      %45 = vector.broadcast %44 : vector<32x1xf32> to vector<32x8xf32>
      %46 = arith.mulf %42, %45 : vector<32x8xf32>
      %c0_31 = arith.constant 0 : index
      %c0_32 = arith.constant 0 : index
      %c0_33 = arith.constant 0 : index
      %47 = vector.load %arg6[%c0_31, %c0_32, %c0_33] : memref<1x32x8xf32, #tpu.memory_space<vmem>>, vector<1x32x8xf32>
      %48 = vector.shape_cast %47 : vector<1x32x8xf32> to vector<32x8xf32>
      %49 = vector.shape_cast %46 : vector<32x8xf32> to vector<1x32x8xf32>
      tpu.vector_store %arg6[%c0_31, %c0_32, %c0_33], %49 {strides = array<i32>} : memref<1x32x8xf32, #tpu.memory_space<vmem>>, vector<1x32x8xf32>,
    } else {
    }
    return
  }
  func.func @transform_0(%arg0: i32, %arg1: i32, %arg2: i32) -> (i32, i32, i32) {
    %c0_i32 = arith.constant 0 : i32
    %c0_i32_0 = arith.constant 0 : i32
    return %arg0, %arg1, %c0_i32 : i32, i32, i32
  }
  func.func @transform_1(%arg0: i32, %arg1: i32, %arg2: i32) -> (i32, i32, i32) {
    %c0_i32 = arith.constant 0 : i32
    %c0_i32_0 = arith.constant 0 : i32
    return %arg0, %arg2, %c0_i32 : i32, i32, i32
  }
  func.func @transform_2(%arg0: i32, %arg1: i32, %arg2: i32) -> (i32, i32, i32) {
    %c0_i32 = arith.constant 0 : i32
    %c0_i32_0 = arith.constant 0 : i32
    return %arg0, %arg2, %c0_i32 : i32, i32, i32
  }
  func.func @transform_3(%arg0: i32, %arg1: i32, %arg2: i32) -> (i32, i32, i32) {
    %c0_i32 = arith.constant 0 : i32
    %c0_i32_0 = arith.constant 0 : i32
    return %arg0, %arg1, %c0_i32 : i32, i32, i32
  }
}

module attributes {stable_mosaic.version = 11 : i64} {
  func.func @_matmul_bias_kernel(%arg0: i32, %arg1: i32, %arg2: i32, %arg3: memref<64x32xf32, #tpu.memory_space<vmem>>, %arg4: memref<32x64xf32, #tpu.memory_space<vmem>>, %arg5: memref<1x64xf32, #tpu.memory_space<vmem>>, %arg6: memref<64x64xf32, #tpu.memory_space<vmem>>, %arg7: memref<64x64xf32, #tpu.memory_space<vmem>>) attributes {dimension_semantics = [#tpu.dimension_semantics<parallel>, #tpu.dimension_semantics<parallel>, #tpu.dimension_semantics<arbitrary>], iteration_bounds = array<i64: 1, 1, 1>, scalar_prefetch = 0 : i64, scratch_operands = 1 : i64, tpu.core_type = #tpu.core_type<tc>, window_params = [{transform_indices = @transform_0, window_bounds = array<i64: 64, 32>}, {transform_indices = @transform_1, window_bounds = array<i64: 32, 64>}, {transform_indices = @transform_2, window_bounds = array<i64: 1, 64>}, {transform_indices = @transform_3, window_bounds = array<i64: 64, 64>}]} {
    %c0_i32 = arith.constant 0 : i32
    %0 = arith.cmpi eq, %arg2, %c0_i32 : i32
    %1 = arith.extui %0 : i1 to i32
    %c0_i32_0 = arith.constant 0 : i32
    %2 = arith.cmpi ne, %1, %c0_i32_0 : i32
    scf.if %2 {
      %cst_10 = arith.constant 0.000000e+00 : f32
      %14 = vector.broadcast %cst_10 : f32 to vector<64x64xf32>
      %c0_11 = arith.constant 0 : index
      %c0_12 = arith.constant 0 : index
      %15 = vector.load %arg7[%c0_11, %c0_12] : memref<64x64xf32, #tpu.memory_space<vmem>>, vector<64x64xf32>
      tpu.vector_store %arg7[%c0_11, %c0_12], %14 {strides = array<i32>} : memref<64x64xf32, #tpu.memory_space<vmem>>, vector<64x64xf32>,
    } else {
    }
    %c0 = arith.constant 0 : index
    %c0_1 = arith.constant 0 : index
    %3 = vector.load %arg7[%c0, %c0_1] : memref<64x64xf32, #tpu.memory_space<vmem>>, vector<64x64xf32>
    %c0_2 = arith.constant 0 : index
    %c0_3 = arith.constant 0 : index
    %4 = vector.load %arg3[%c0_2, %c0_3] : memref<64x32xf32, #tpu.memory_space<vmem>>, vector<64x32xf32>
    %5 = arith.truncf %4 : vector<64x32xf32> to vector<64x32xbf16>
    %c0_4 = arith.constant 0 : index
    %c0_5 = arith.constant 0 : index
    %6 = vector.load %arg4[%c0_4, %c0_5] : memref<32x64xf32, #tpu.memory_space<vmem>>, vector<32x64xf32>
    %7 = arith.truncf %6 : vector<32x64xf32> to vector<32x64xbf16>
    %cst = arith.constant dense<0.000000e+00> : vector<64x64xf32>
    %8 = tpu.matmul %5, %7, %cst {dimension_numbers = #tpu.dot_dimension_numbers<[1], [0], [0], [1], [0, 0, 1, 1], [], []>} : vector<64x32xbf16>, vector<32x64xbf16>, vector<64x64xf32> -> vector<64x64xf32>
    %9 = arith.addf %3, %8 : vector<64x64xf32>
    %c0_6 = arith.constant 0 : index
    %c0_7 = arith.constant 0 : index
    %10 = vector.load %arg7[%c0_6, %c0_7] : memref<64x64xf32, #tpu.memory_space<vmem>>, vector<64x64xf32>
    tpu.vector_store %arg7[%c0_6, %c0_7], %9 {strides = array<i32>} : memref<64x64xf32, #tpu.memory_space<vmem>>, vector<64x64xf32>,
    %c0_i32_8 = arith.constant 0 : i32
    %11 = arith.cmpi eq, %arg2, %c0_i32_8 : i32
    %12 = arith.extui %11 : i1 to i32
    %c0_i32_9 = arith.constant 0 : i32
    %13 = arith.cmpi ne, %12, %c0_i32_9 : i32
    scf.if %13 {
      %c0_10 = arith.constant 0 : index
      %c0_11 = arith.constant 0 : index
      %14 = vector.load %arg7[%c0_10, %c0_11] : memref<64x64xf32, #tpu.memory_space<vmem>>, vector<64x64xf32>
      %c0_12 = arith.constant 0 : index
      %c0_13 = arith.constant 0 : index
      %15 = vector.load %arg5[%c0_12, %c0_13] : memref<1x64xf32, #tpu.memory_space<vmem>>, vector<1x64xf32>
      %16 = vector.broadcast %15 : vector<1x64xf32> to vector<64x64xf32>
      %17 = arith.addf %14, %16 : vector<64x64xf32>
      %cst_14 = arith.constant 5.000000e-01 : f32
      %18 = vector.broadcast %cst_14 : f32 to vector<64x64xf32>
      %19 = arith.mulf %18, %17 : vector<64x64xf32>
      %cst_15 = arith.constant 0.707106769 : f32
      %20 = vector.broadcast %cst_15 : f32 to vector<64x64xf32>
      %21 = arith.mulf %17, %20 : vector<64x64xf32>
      %22 = math.erf %21 : vector<64x64xf32>
      %cst_16 = arith.constant 1.000000e+00 : f32
      %23 = vector.broadcast %cst_16 : f32 to vector<64x64xf32>
      %24 = arith.addf %23, %22 : vector<64x64xf32>
      %25 = arith.mulf %19, %24 : vector<64x64xf32>
      %c0_17 = arith.constant 0 : index
      %c0_18 = arith.constant 0 : index
      %26 = vector.load %arg6[%c0_17, %c0_18] : memref<64x64xf32, #tpu.memory_space<vmem>>, vector<64x64xf32>
      tpu.vector_store %arg6[%c0_17, %c0_18], %25 {strides = array<i32>} : memref<64x64xf32, #tpu.memory_space<vmem>>, vector<64x64xf32>,
    } else {
    }
    return
  }
  func.func @transform_0(%arg0: i32, %arg1: i32, %arg2: i32) -> (i32, i32) {
    %c0_i32 = arith.constant 0 : i32
    return %arg0, %arg2 : i32, i32
  }
  func.func @transform_1(%arg0: i32, %arg1: i32, %arg2: i32) -> (i32, i32) {
    %c0_i32 = arith.constant 0 : i32
    return %arg2, %arg1 : i32, i32
  }
  func.func @transform_2(%arg0: i32, %arg1: i32, %arg2: i32) -> (i32, i32) {
    %c0_i32 = arith.constant 0 : i32
    %c0_i32_0 = arith.constant 0 : i32
    return %c0_i32, %arg1 : i32, i32
  }
  func.func @transform_3(%arg0: i32, %arg1: i32, %arg2: i32) -> (i32, i32) {
    %c0_i32 = arith.constant 0 : i32
    return %arg0, %arg1 : i32, i32
  }
}

module attributes {stable_mosaic.version = 11 : i64} {
  func.func @_matmul_bias_kernel(%arg0: i32, %arg1: i32, %arg2: i32, %arg3: memref<64x32xf32, #tpu.memory_space<vmem>>, %arg4: memref<32x32xf32, #tpu.memory_space<vmem>>, %arg5: memref<1x32xf32, #tpu.memory_space<vmem>>, %arg6: memref<64x32xf32, #tpu.memory_space<vmem>>, %arg7: memref<64x32xf32, #tpu.memory_space<vmem>>, %arg8: memref<64x32xf32, #tpu.memory_space<vmem>>) attributes {dimension_semantics = [#tpu.dimension_semantics<parallel>, #tpu.dimension_semantics<parallel>, #tpu.dimension_semantics<arbitrary>], iteration_bounds = array<i64: 1, 1, 1>, scalar_prefetch = 0 : i64, scratch_operands = 1 : i64, tpu.core_type = #tpu.core_type<tc>, window_params = [{transform_indices = @transform_0, window_bounds = array<i64: 64, 32>}, {transform_indices = @transform_1, window_bounds = array<i64: 32, 32>}, {transform_indices = @transform_2, window_bounds = array<i64: 1, 32>}, {transform_indices = @transform_3, window_bounds = array<i64: 64, 32>}, {transform_indices = @transform_4, window_bounds = array<i64: 64, 32>}]} {
    %c0_i32 = arith.constant 0 : i32
    %0 = arith.cmpi eq, %arg2, %c0_i32 : i32
    %1 = arith.extui %0 : i1 to i32
    %c0_i32_0 = arith.constant 0 : i32
    %2 = arith.cmpi ne, %1, %c0_i32_0 : i32
    scf.if %2 {
      %cst_10 = arith.constant 0.000000e+00 : f32
      %14 = vector.broadcast %cst_10 : f32 to vector<64x32xf32>
      %c0_11 = arith.constant 0 : index
      %c0_12 = arith.constant 0 : index
      %15 = vector.load %arg8[%c0_11, %c0_12] : memref<64x32xf32, #tpu.memory_space<vmem>>, vector<64x32xf32>
      tpu.vector_store %arg8[%c0_11, %c0_12], %14 {strides = array<i32>} : memref<64x32xf32, #tpu.memory_space<vmem>>, vector<64x32xf32>,
    } else {
    }
    %c0 = arith.constant 0 : index
    %c0_1 = arith.constant 0 : index
    %3 = vector.load %arg8[%c0, %c0_1] : memref<64x32xf32, #tpu.memory_space<vmem>>, vector<64x32xf32>
    %c0_2 = arith.constant 0 : index
    %c0_3 = arith.constant 0 : index
    %4 = vector.load %arg3[%c0_2, %c0_3] : memref<64x32xf32, #tpu.memory_space<vmem>>, vector<64x32xf32>
    %5 = arith.truncf %4 : vector<64x32xf32> to vector<64x32xbf16>
    %c0_4 = arith.constant 0 : index
    %c0_5 = arith.constant 0 : index
    %6 = vector.load %arg4[%c0_4, %c0_5] : memref<32x32xf32, #tpu.memory_space<vmem>>, vector<32x32xf32>
    %7 = arith.truncf %6 : vector<32x32xf32> to vector<32x32xbf16>
    %cst = arith.constant dense<0.000000e+00> : vector<64x32xf32>
    %8 = tpu.matmul %5, %7, %cst {dimension_numbers = #tpu.dot_dimension_numbers<[1], [0], [0], [1], [0, 0, 1, 1], [], []>} : vector<64x32xbf16>, vector<32x32xbf16>, vector<64x32xf32> -> vector<64x32xf32>
    %9 = arith.addf %3, %8 : vector<64x32xf32>
    %c0_6 = arith.constant 0 : index
    %c0_7 = arith.constant 0 : index
    %10 = vector.load %arg8[%c0_6, %c0_7] : memref<64x32xf32, #tpu.memory_space<vmem>>, vector<64x32xf32>
    tpu.vector_store %arg8[%c0_6, %c0_7], %9 {strides = array<i32>} : memref<64x32xf32, #tpu.memory_space<vmem>>, vector<64x32xf32>,
    %c0_i32_8 = arith.constant 0 : i32
    %11 = arith.cmpi eq, %arg2, %c0_i32_8 : i32
    %12 = arith.extui %11 : i1 to i32
    %c0_i32_9 = arith.constant 0 : i32
    %13 = arith.cmpi ne, %12, %c0_i32_9 : i32
    scf.if %13 {
      %c0_10 = arith.constant 0 : index
      %c0_11 = arith.constant 0 : index
      %14 = vector.load %arg8[%c0_10, %c0_11] : memref<64x32xf32, #tpu.memory_space<vmem>>, vector<64x32xf32>
      %c0_12 = arith.constant 0 : index
      %c0_13 = arith.constant 0 : index
      %15 = vector.load %arg5[%c0_12, %c0_13] : memref<1x32xf32, #tpu.memory_space<vmem>>, vector<1x32xf32>
      %16 = vector.broadcast %15 : vector<1x32xf32> to vector<64x32xf32>
      %17 = arith.addf %14, %16 : vector<64x32xf32>
      %c0_14 = arith.constant 0 : index
      %c0_15 = arith.constant 0 : index
      %18 = vector.load %arg6[%c0_14, %c0_15] : memref<64x32xf32, #tpu.memory_space<vmem>>, vector<64x32xf32>
      %19 = arith.addf %17, %18 : vector<64x32xf32>
      %c0_16 = arith.constant 0 : index
      %c0_17 = arith.constant 0 : index
      %20 = vector.load %arg7[%c0_16, %c0_17] : memref<64x32xf32, #tpu.memory_space<vmem>>, vector<64x32xf32>
      tpu.vector_store %arg7[%c0_16, %c0_17], %19 {strides = array<i32>} : memref<64x32xf32, #tpu.memory_space<vmem>>, vector<64x32xf32>,
    } else {
    }
    return
  }
  func.func @transform_0(%arg0: i32, %arg1: i32, %arg2: i32) -> (i32, i32) {
    %c0_i32 = arith.constant 0 : i32
    return %arg0, %arg2 : i32, i32
  }
  func.func @transform_1(%arg0: i32, %arg1: i32, %arg2: i32) -> (i32, i32) {
    %c0_i32 = arith.constant 0 : i32
    return %arg2, %arg1 : i32, i32
  }
  func.func @transform_2(%arg0: i32, %arg1: i32, %arg2: i32) -> (i32, i32) {
    %c0_i32 = arith.constant 0 : i32
    %c0_i32_0 = arith.constant 0 : i32
    return %c0_i32, %arg1 : i32, i32
  }
  func.func @transform_3(%arg0: i32, %arg1: i32, %arg2: i32) -> (i32, i32) {
    %c0_i32 = arith.constant 0 : i32
    return %arg0, %arg1 : i32, i32
  }
  func.func @transform_4(%arg0: i32, %arg1: i32, %arg2: i32) -> (i32, i32) {
    %c0_i32 = arith.constant 0 : i32
    return %arg0, %arg1 : i32, i32
  }
}

module attributes {stable_mosaic.version = 11 : i64} {
  func.func @_matmul_bias_kernel(%arg0: i32, %arg1: i32, %arg2: i32, %arg3: memref<64x64xf32, #tpu.memory_space<vmem>>, %arg4: memref<64x32xf32, #tpu.memory_space<vmem>>, %arg5: memref<1x32xf32, #tpu.memory_space<vmem>>, %arg6: memref<64x32xf32, #tpu.memory_space<vmem>>, %arg7: memref<64x32xf32, #tpu.memory_space<vmem>>, %arg8: memref<64x32xf32, #tpu.memory_space<vmem>>) attributes {dimension_semantics = [#tpu.dimension_semantics<parallel>, #tpu.dimension_semantics<parallel>, #tpu.dimension_semantics<arbitrary>], iteration_bounds = array<i64: 1, 1, 1>, scalar_prefetch = 0 : i64, scratch_operands = 1 : i64, tpu.core_type = #tpu.core_type<tc>, window_params = [{transform_indices = @transform_0, window_bounds = array<i64: 64, 64>}, {transform_indices = @transform_1, window_bounds = array<i64: 64, 32>}, {transform_indices = @transform_2, window_bounds = array<i64: 1, 32>}, {transform_indices = @transform_3, window_bounds = array<i64: 64, 32>}, {transform_indices = @transform_4, window_bounds = array<i64: 64, 32>}]} {
    %c0_i32 = arith.constant 0 : i32
    %0 = arith.cmpi eq, %arg2, %c0_i32 : i32
    %1 = arith.extui %0 : i1 to i32
    %c0_i32_0 = arith.constant 0 : i32
    %2 = arith.cmpi ne, %1, %c0_i32_0 : i32
    scf.if %2 {
      %cst_10 = arith.constant 0.000000e+00 : f32
      %14 = vector.broadcast %cst_10 : f32 to vector<64x32xf32>
      %c0_11 = arith.constant 0 : index
      %c0_12 = arith.constant 0 : index
      %15 = vector.load %arg8[%c0_11, %c0_12] : memref<64x32xf32, #tpu.memory_space<vmem>>, vector<64x32xf32>
      tpu.vector_store %arg8[%c0_11, %c0_12], %14 {strides = array<i32>} : memref<64x32xf32, #tpu.memory_space<vmem>>, vector<64x32xf32>,
    } else {
    }
    %c0 = arith.constant 0 : index
    %c0_1 = arith.constant 0 : index
    %3 = vector.load %arg8[%c0, %c0_1] : memref<64x32xf32, #tpu.memory_space<vmem>>, vector<64x32xf32>
    %c0_2 = arith.constant 0 : index
    %c0_3 = arith.constant 0 : index
    %4 = vector.load %arg3[%c0_2, %c0_3] : memref<64x64xf32, #tpu.memory_space<vmem>>, vector<64x64xf32>
    %5 = arith.truncf %4 : vector<64x64xf32> to vector<64x64xbf16>
    %c0_4 = arith.constant 0 : index
    %c0_5 = arith.constant 0 : index
    %6 = vector.load %arg4[%c0_4, %c0_5] : memref<64x32xf32, #tpu.memory_space<vmem>>, vector<64x32xf32>
    %7 = arith.truncf %6 : vector<64x32xf32> to vector<64x32xbf16>
    %cst = arith.constant dense<0.000000e+00> : vector<64x32xf32>
    %8 = tpu.matmul %5, %7, %cst {dimension_numbers = #tpu.dot_dimension_numbers<[1], [0], [0], [1], [0, 0, 1, 1], [], []>} : vector<64x64xbf16>, vector<64x32xbf16>, vector<64x32xf32> -> vector<64x32xf32>
    %9 = arith.addf %3, %8 : vector<64x32xf32>
    %c0_6 = arith.constant 0 : index
    %c0_7 = arith.constant 0 : index
    %10 = vector.load %arg8[%c0_6, %c0_7] : memref<64x32xf32, #tpu.memory_space<vmem>>, vector<64x32xf32>
    tpu.vector_store %arg8[%c0_6, %c0_7], %9 {strides = array<i32>} : memref<64x32xf32, #tpu.memory_space<vmem>>, vector<64x32xf32>,
    %c0_i32_8 = arith.constant 0 : i32
    %11 = arith.cmpi eq, %arg2, %c0_i32_8 : i32
    %12 = arith.extui %11 : i1 to i32
    %c0_i32_9 = arith.constant 0 : i32
    %13 = arith.cmpi ne, %12, %c0_i32_9 : i32
    scf.if %13 {
      %c0_10 = arith.constant 0 : index
      %c0_11 = arith.constant 0 : index
      %14 = vector.load %arg8[%c0_10, %c0_11] : memref<64x32xf32, #tpu.memory_space<vmem>>, vector<64x32xf32>
      %c0_12 = arith.constant 0 : index
      %c0_13 = arith.constant 0 : index
      %15 = vector.load %arg5[%c0_12, %c0_13] : memref<1x32xf32, #tpu.memory_space<vmem>>, vector<1x32xf32>
      %16 = vector.broadcast %15 : vector<1x32xf32> to vector<64x32xf32>
      %17 = arith.addf %14, %16 : vector<64x32xf32>
      %c0_14 = arith.constant 0 : index
      %c0_15 = arith.constant 0 : index
      %18 = vector.load %arg6[%c0_14, %c0_15] : memref<64x32xf32, #tpu.memory_space<vmem>>, vector<64x32xf32>
      %19 = arith.addf %17, %18 : vector<64x32xf32>
      %c0_16 = arith.constant 0 : index
      %c0_17 = arith.constant 0 : index
      %20 = vector.load %arg7[%c0_16, %c0_17] : memref<64x32xf32, #tpu.memory_space<vmem>>, vector<64x32xf32>
      tpu.vector_store %arg7[%c0_16, %c0_17], %19 {strides = array<i32>} : memref<64x32xf32, #tpu.memory_space<vmem>>, vector<64x32xf32>,
    } else {
    }
    return
  }
  func.func @transform_0(%arg0: i32, %arg1: i32, %arg2: i32) -> (i32, i32) {
    %c0_i32 = arith.constant 0 : i32
    return %arg0, %arg2 : i32, i32
  }
  func.func @transform_1(%arg0: i32, %arg1: i32, %arg2: i32) -> (i32, i32) {
    %c0_i32 = arith.constant 0 : i32
    return %arg2, %arg1 : i32, i32
  }
  func.func @transform_2(%arg0: i32, %arg1: i32, %arg2: i32) -> (i32, i32) {
    %c0_i32 = arith.constant 0 : i32
    %c0_i32_0 = arith.constant 0 : i32
    return %c0_i32, %arg1 : i32, i32
  }
  func.func @transform_3(%arg0: i32, %arg1: i32, %arg2: i32) -> (i32, i32) {
    %c0_i32 = arith.constant 0 : i32
    return %arg0, %arg1 : i32, i32
  }
  func.func @transform_4(%arg0: i32, %arg1: i32, %arg2: i32) -> (i32, i32) {
    %c0_i32 = arith.constant 0 : i32
    return %arg0, %arg1 : i32, i32
  }
}

module attributes {stable_mosaic.version = 11 : i64} {
  func.func @_layernorm_kernel(%arg0: i32, %arg1: memref<64x32xf32, #tpu.memory_space<vmem>>, %arg2: memref<1x32xf32, #tpu.memory_space<vmem>>, %arg3: memref<1x32xf32, #tpu.memory_space<vmem>>, %arg4: memref<64x32xf32, #tpu.memory_space<vmem>>) attributes {dimension_semantics = [#tpu.dimension_semantics<parallel>], iteration_bounds = array<i64: 1>, scalar_prefetch = 0 : i64, scratch_operands = 0 : i64, tpu.core_type = #tpu.core_type<tc>, window_params = [{transform_indices = @transform_0, window_bounds = array<i64: 64, 32>}, {pipeline_mode = #tpu.pipeline_mode<synchronous>, transform_indices = @transform_1, window_bounds = array<i64: 1, 32>}, {pipeline_mode = #tpu.pipeline_mode<synchronous>, transform_indices = @transform_2, window_bounds = array<i64: 1, 32>}, {transform_indices = @transform_3, window_bounds = array<i64: 64, 32>}]} {
    %c0 = arith.constant 0 : index
    %c0_0 = arith.constant 0 : index
    %0 = vector.load %arg1[%c0, %c0_0] : memref<64x32xf32, #tpu.memory_space<vmem>>, vector<64x32xf32>
    %cst = arith.constant dense<0.000000e+00> : vector<64xf32>
    %1 = vector.multi_reduction <add>, %0, %cst [1] : vector<64x32xf32> to vector<64xf32>
    %2 = vector.shape_cast %1 : vector<64xf32> to vector<64x1xf32>
    %cst_1 = arith.constant 3.200000e+01 : f32
    %3 = vector.broadcast %cst_1 : f32 to vector<64x1xf32>
    %4 = arith.divf %2, %3 : vector<64x1xf32>
    %5 = vector.broadcast %4 : vector<64x1xf32> to vector<64x32xf32>
    %6 = arith.subf %0, %5 : vector<64x32xf32>
    %7 = arith.mulf %6, %6 : vector<64x32xf32>
    %cst_2 = arith.constant dense<0.000000e+00> : vector<64xf32>
    %8 = vector.multi_reduction <add>, %7, %cst_2 [1] : vector<64x32xf32> to vector<64xf32>
    %9 = vector.shape_cast %8 : vector<64xf32> to vector<64x1xf32>
    %cst_3 = arith.constant 3.200000e+01 : f32
    %10 = vector.broadcast %cst_3 : f32 to vector<64x1xf32>
    %11 = arith.divf %9, %10 : vector<64x1xf32>
    %cst_4 = arith.constant 9.99999974E-6 : f32
    %12 = vector.broadcast %cst_4 : f32 to vector<64x1xf32>
    %13 = arith.addf %11, %12 : vector<64x1xf32>
    %14 = math.rsqrt %13 : vector<64x1xf32>
    %15 = vector.broadcast %14 : vector<64x1xf32> to vector<64x32xf32>
    %16 = arith.mulf %6, %15 : vector<64x32xf32>
    %c0_5 = arith.constant 0 : index
    %c0_6 = arith.constant 0 : index
    %17 = vector.load %arg2[%c0_5, %c0_6] : memref<1x32xf32, #tpu.memory_space<vmem>>, vector<1x32xf32>
    %18 = vector.broadcast %17 : vector<1x32xf32> to vector<64x32xf32>
    %19 = arith.mulf %16, %18 : vector<64x32xf32>
    %c0_7 = arith.constant 0 : index
    %c0_8 = arith.constant 0 : index
    %20 = vector.load %arg3[%c0_7, %c0_8] : memref<1x32xf32, #tpu.memory_space<vmem>>, vector<1x32xf32>
    %21 = vector.broadcast %20 : vector<1x32xf32> to vector<64x32xf32>
    %22 = arith.addf %19, %21 : vector<64x32xf32>
    %c0_9 = arith.constant 0 : index
    %c0_10 = arith.constant 0 : index
    %23 = vector.load %arg4[%c0_9, %c0_10] : memref<64x32xf32, #tpu.memory_space<vmem>>, vector<64x32xf32>
    tpu.vector_store %arg4[%c0_9, %c0_10], %22 {strides = array<i32>} : memref<64x32xf32, #tpu.memory_space<vmem>>, vector<64x32xf32>,
    return
  }
  func.func @transform_0(%arg0: i32) -> (i32, i32) {
    %c0_i32 = arith.constant 0 : i32
    %c0_i32_0 = arith.constant 0 : i32
    return %arg0, %c0_i32 : i32, i32
  }
  func.func @transform_1(%arg0: i32) -> (i32, i32) {
    %c0_i32 = arith.constant 0 : i32
    %c0_i32_0 = arith.constant 0 : i32
    %c0_i32_1 = arith.constant 0 : i32
    return %c0_i32, %c0_i32_0 : i32, i32
  }
  func.func @transform_2(%arg0: i32) -> (i32, i32) {
    %c0_i32 = arith.constant 0 : i32
    %c0_i32_0 = arith.constant 0 : i32
    %c0_i32_1 = arith.constant 0 : i32
    return %c0_i32, %c0_i32_0 : i32, i32
  }
  func.func @transform_3(%arg0: i32) -> (i32, i32) {
    %c0_i32 = arith.constant 0 : i32
    %c0_i32_0 = arith.constant 0 : i32
    return %arg0, %c0_i32 : i32, i32
  }
}

</mosaic_0001>

<llo_original>
// kernel: whisper_encoder_feats.17
$region0: #{whisper_encoder_feats.17}
  #allocation0 [shape = 'u32[]', space=smem, size = 0x4, offset = 0x4, fixed_abs, tag = 'smem constant byte address 0x4 - core index']
  #allocation1 [shape = 'u32[72,128]{1,0:T(1,128)}', space=vmem, size = 0x9000, scoped, tag = 'internal scratch']
  #allocation2 [shape = 'f32[128,32]{1,0:T(8,128)}', space=vmem, size = 0x10000, scoped, tag = 'scratch operand']
  %s0 = inlined_call_operand.vmem [shape: f32[128,48], index: 0, kind: input, shape index: {}]
  %s1 = inlined_call_operand.vmem [shape: f32[48,32], index: 1, kind: input, shape index: {}]
  %s2 = inlined_call_operand.vmem [shape: f32[1,32], index: 2, kind: input, shape index: {}]
  %s3 = inlined_call_operand.vmem [shape: f32[128,32], index: 3, kind: output, shape index: {}]
  %s4 = sld [smem:[#allocation0]]
  $region30: #{whisper_encoder_feats.17} parent=0
    _
  %s6 = ssub.s32 1, %s4
  %s7 = scalar_select 0, %s6, %s4
  // Predicated region
  $region2: #{whisper_encoder_feats.17} parent=0 // pred_check
    _
  $region3: #{whisper_encoder_feats.17} parent=0 // pred_check_branch
    %9 = sbr.rel (0) target = $region5
  $region4: #{whisper_encoder_feats.17} parent=0 // pred_region
    _
  $region5: #{whisper_encoder_feats.17} parent=0 // pred_fallthru
    _
  // Predicated region
  $region6: #{whisper_encoder_feats.17} parent=0 // pred_check
    _
  $region7: #{whisper_encoder_feats.17} parent=0 // pred_check_branch
    %11 = sbr.rel (0) target = $region9
  $region8: #{whisper_encoder_feats.17} parent=0 // pred_region
    _
  $region9: #{whisper_encoder_feats.17} parent=0 // pred_fallthru
    _
  // Predicated region
  $region10: #{whisper_encoder_feats.17} parent=0 // pred_check
    _
  $region11: #{whisper_encoder_feats.17} parent=0 // pred_check_branch
    %13 = sbr.rel (0) target = $region13
  $region12: #{whisper_encoder_feats.17} parent=0 // pred_region
    _
  $region13: #{whisper_encoder_feats.17} parent=0 // pred_fallthru
    _
  %p15 = scmp.eq.s32.totalorder 0, 0
  // Predicated region
  $region14: #{whisper_encoder_feats.17} parent=0 // pred_check
    %p16 = pneg %p15
  $region15: #{whisper_encoder_feats.17} parent=0 // pred_check_branch
    %18 = sbr.rel (%p16) target = $region17
  $region16: #{whisper_encoder_feats.17} parent=0 // pred_region
    %vm19 = vcmask 261120
    %20 = vst.msk [vmem:[#allocation2] sm:$0xff] %vm19, 0.0
    %21 = vst.msk [vmem:[#allocation2 + $0x8] sm:$0xff] %vm19, 0.0
    %22 = vst.msk [vmem:[#allocation2 + $0x10] sm:$0xff] %vm19, 0.0
    %23 = vst.msk [vmem:[#allocation2 + $0x18] sm:$0xff] %vm19, 0.0
    %24 = vst.msk [vmem:[#allocation2 + $0x20] sm:$0xff] %vm19, 0.0
    %25 = vst.msk [vmem:[#allocation2 + $0x28] sm:$0xff] %vm19, 0.0
    %26 = vst.msk [vmem:[#allocation2 + $0x30] sm:$0xff] %vm19, 0.0
    %27 = vst.msk [vmem:[#allocation2 + $0x38] sm:$0xff] %vm19, 0.0
    %28 = vst.msk [vmem:[#allocation2 + $0x40] sm:$0xff] %vm19, 0.0
    %29 = vst.msk [vmem:[#allocation2 + $0x48] sm:$0xff] %vm19, 0.0
    %30 = vst.msk [vmem:[#allocation2 + $0x50] sm:$0xff] %vm19, 0.0
    %31 = vst.msk [vmem:[#allocation2 + $0x58] sm:$0xff] %vm19, 0.0
    %32 = vst.msk [vmem:[#allocation2 + $0x60] sm:$0xff] %vm19, 0.0
    %33 = vst.msk [vmem:[#allocation2 + $0x68] sm:$0xff] %vm19, 0.0
    %34 = vst.msk [vmem:[#allocation2 + $0x70] sm:$0xff] %vm19, 0.0
    %35 = vst.msk [vmem:[#allocation2 + $0x78] sm:$0xff] %vm19, 0.0
  $region17: #{whisper_encoder_feats.17} parent=0 // pred_fallthru
    _
  %v36 = vld [vmem:[#allocation2] sm:$0xff]
  %v37 = vld [vmem:[#allocation2 + $0x8] sm:$0xff]
  %v38 = vld [vmem:[#allocation2 + $0x10] sm:$0xff]
  %v39 = vld [vmem:[#allocation2 + $0x18] sm:$0xff]
  %v40 = vld [vmem:[#allocation2 + $0x20] sm:$0xff]
  %v41 = vld [vmem:[#allocation2 + $0x28] sm:$0xff]
  %v42 = vld [vmem:[#allocation2 + $0x30] sm:$0xff]
  %v43 = vld [vmem:[#allocation2 + $0x38] sm:$0xff]
  %v44 = vld [vmem:[#allocation2 + $0x40] sm:$0xff]
  %v45 = vld [vmem:[#allocation2 + $0x48] sm:$0xff]
  %v46 = vld [vmem:[#allocation2 + $0x50] sm:$0xff]
  %v47 = vld [vmem:[#allocation2 + $0x58] sm:$0xff]
  %v48 = vld [vmem:[#allocation2 + $0x60] sm:$0xff]
  %v49 = vld [vmem:[#allocation2 + $0x68] sm:$0xff]
  %v50 = vld [vmem:[#allocation2 + $0x70] sm:$0xff]
  %v51 = vld [vmem:[#allocation2 + $0x78] sm:$0xff]
  %v52 = vld [vmem:[%s0] sm:$0xff]
  %v53 = vld [vmem:[%s0 + $0x8] sm:$0xff]
  %v54 = vld [vmem:[%s0 + $0x10] sm:$0xff]
  %v55 = vld [vmem:[%s0 + $0x18] sm:$0xff]
  %v56 = vld [vmem:[%s0 + $0x20] sm:$0xff]
  %v57 = vld [vmem:[%s0 + $0x28] sm:$0xff]
  %v58 = vld [vmem:[%s0 + $0x30] sm:$0xff]
  %v59 = vld [vmem:[%s0 + $0x38] sm:$0xff]
  %v60 = vld [vmem:[%s0 + $0x40] sm:$0xff]
  %v61 = vld [vmem:[%s0 + $0x48] sm:$0xff]
  %v62 = vld [vmem:[%s0 + $0x50] sm:$0xff]
  %v63 = vld [vmem:[%s0 + $0x58] sm:$0xff]
  %v64 = vld [vmem:[%s0 + $0x60] sm:$0xff]
  %v65 = vld [vmem:[%s0 + $0x68] sm:$0xff]
  %v66 = vld [vmem:[%s0 + $0x70] sm:$0xff]
  %v67 = vld [vmem:[%s0 + $0x78] sm:$0xff]
  %v68 = vpack.c.bf16 %v53, %v52
  %v69 = vpack.c.bf16 %v55, %v54
  %v70 = vpack.c.bf16 %v57, %v56
  %v71 = vpack.c.bf16 %v59, %v58
  %v72 = vpack.c.bf16 %v61, %v60
  %v73 = vpack.c.bf16 %v63, %v62
  %v74 = vpack.c.bf16 %v65, %v64
  %v75 = vpack.c.bf16 %v67, %v66
  %v76 = vld [vmem:[%s1] sm:$0xff]
  %v77 = vld [vmem:[%s1 + $0x8] sm:$0xff]
  %v78 = vld [vmem:[%s1 + $0x10] sm:$0xff]
  %v79 = vld [vmem:[%s1 + $0x18] sm:$0xff]
  %v80 = vld [vmem:[%s1 + $0x20] sm:$0xff]
  %v81 = vld [vmem:[%s1 + $0x28] sm:$0xff]
  %v82 = vpack.c.bf16 %v77, %v76
  %v83 = vpack.c.bf16 %v79, %v78
  %v84 = vpack.c.bf16 %v81, %v80
  %vm85 = vcmask 392192
  %v87 = vsel %vm85, %v68, 0
  %v90 = vsel %vm85, %v69, 0
  %v93 = vsel %vm85, %v70, 0
  %v96 = vsel %vm85, %v71, 0
  %v99 = vsel %vm85, %v72, 0
  %v102 = vsel %vm85, %v73, 0
  %v105 = vsel %vm85, %v74, 0
  %v108 = vsel %vm85, %v75, 0
  %110 = vmatpush.bf16.msra.mxu0 0
  %111 = vmatpush.bf16.msra.mxu0 0
  %112 = vmatpush.bf16.msra.mxu0 0
  %113 = vmatpush.bf16.msra.mxu0 0
  %114 = vmatpush.bf16.msra.mxu0 0
  %115 = vmatpush.bf16.msra.mxu0 %v84
  %116 = vmatpush.bf16.msra.mxu0 %v83
  %117 = vmatpush.bf16.msra.mxu0 %v82
  %118 = vmatmul.bf16.gmra.mxu0 %v87
  %v119 = vpop.f32.mrf.mxu0
  %v120 = vadd.f32 0.0, %v119
  %v121 = vpop.f32.mrf.mxu0
  %v122 = vadd.f32 0.0, %v121
  %123 = vmatmul.bf16.gmra.mxu0 %v90
  %v124 = vpop.f32.mrf.mxu0
  %v125 = vadd.f32 0.0, %v124
  %v126 = vpop.f32.mrf.mxu0
  %v127 = vadd.f32 0.0, %v126
  %128 = vmatmul.bf16.gmra.mxu0 %v93
  %v129 = vpop.f32.mrf.mxu0
  %v130 = vadd.f32 0.0, %v129
  %v131 = vpop.f32.mrf.mxu0
  %v132 = vadd.f32 0.0, %v131
  %133 = vmatmul.bf16.gmra.mxu0 %v96
  %v134 = vpop.f32.mrf.mxu0
  %v135 = vadd.f32 0.0, %v134
  %v136 = vpop.f32.mrf.mxu0
  %v137 = vadd.f32 0.0, %v136
  %138 = vmatmul.bf16.gmra.mxu0 %v99
  %v139 = vpop.f32.mrf.mxu0
  %v140 = vadd.f32 0.0, %v139
  %v141 = vpop.f32.mrf.mxu0
  %v142 = vadd.f32 0.0, %v141
  %143 = vmatmul.bf16.gmra.mxu0 %v102
  %v144 = vpop.f32.mrf.mxu0
  %v145 = vadd.f32 0.0, %v144
  %v146 = vpop.f32.mrf.mxu0
  %v147 = vadd.f32 0.0, %v146
  %148 = vmatmul.bf16.gmra.mxu0 %v105
  %v149 = vpop.f32.mrf.mxu0
  %v150 = vadd.f32 0.0, %v149
  %v151 = vpop.f32.mrf.mxu0
  %v152 = vadd.f32 0.0, %v151
  %153 = vmatmul.bf16.gmra.mxu0 %v108
  %v154 = vpop.f32.mrf.mxu0
  %v155 = vadd.f32 0.0, %v154
  %v156 = vpop.f32.mrf.mxu0
  %v157 = vadd.f32 0.0, %v156
  %158 = vdwg.mxu0
  %v159 = vadd.f32 %v36, %v120
  %v160 = vadd.f32 %v37, %v122
  %v161 = vadd.f32 %v38, %v125
  %v162 = vadd.f32 %v39, %v127
  %v163 = vadd.f32 %v40, %v130
  %v164 = vadd.f32 %v41, %v132
  %v165 = vadd.f32 %v42, %v135
  %v166 = vadd.f32 %v43, %v137
  %v167 = vadd.f32 %v44, %v140
  %v168 = vadd.f32 %v45, %v142
  %v169 = vadd.f32 %v46, %v145
  %v170 = vadd.f32 %v47, %v147
  %v171 = vadd.f32 %v48, %v150
  %v172 = vadd.f32 %v49, %v152
  %v173 = vadd.f32 %v50, %v155
  %v174 = vadd.f32 %v51, %v157
  %vm175 = vcmask 261120
  %176 = vst.msk [vmem:[#allocation2] sm:$0xff] %vm175, %v159
  %177 = vst.msk [vmem:[#allocation2 + $0x8] sm:$0xff] %vm175, %v160
  %178 = vst.msk [vmem:[#allocation2 + $0x10] sm:$0xff] %vm175, %v161
  %179 = vst.msk [vmem:[#allocation2 + $0x18] sm:$0xff] %vm175, %v162
  %180 = vst.msk [vmem:[#allocation2 + $0x20] sm:$0xff] %vm175, %v163
  %181 = vst.msk [vmem:[#allocation2 + $0x28] sm:$0xff] %vm175, %v164
  %182 = vst.msk [vmem:[#allocation2 + $0x30] sm:$0xff] %vm175, %v165
  %183 = vst.msk [vmem:[#allocation2 + $0x38] sm:$0xff] %vm175, %v166
  %184 = vst.msk [vmem:[#allocation2 + $0x40] sm:$0xff] %vm175, %v167
  %185 = vst.msk [vmem:[#allocation2 + $0x48] sm:$0xff] %vm175, %v168
  %186 = vst.msk [vmem:[#allocation2 + $0x50] sm:$0xff] %vm175, %v169
  %187 = vst.msk [vmem:[#allocation2 + $0x58] sm:$0xff] %vm175, %v170
  %188 = vst.msk [vmem:[#allocation2 + $0x60] sm:$0xff] %vm175, %v171
  %189 = vst.msk [vmem:[#allocation2 + $0x68] sm:$0xff] %vm175, %v172
  %190 = vst.msk [vmem:[#allocation2 + $0x70] sm:$0xff] %vm175, %v173
  %191 = vst.msk [vmem:[#allocation2 + $0x78] sm:$0xff] %vm175, %v174
  // Predicated region
  $region18: #{whisper_encoder_feats.17} parent=0 // pred_check
    %p192 = pneg %p15
  $region19: #{whisper_encoder_feats.17} parent=0 // pred_check_branch
    %194 = sbr.rel (%p192) target = $region21
  $region20: #{whisper_encoder_feats.17} parent=0 // pred_region
    %v195 = vld [vmem:[#allocation2] sm:$0xff]
    %v196 = vld [vmem:[#allocation2 + $0x8] sm:$0xff]
    %v197 = vld [vmem:[#allocation2 + $0x10] sm:$0xff]
    %v198 = vld [vmem:[#allocation2 + $0x18] sm:$0xff]
    %v199 = vld [vmem:[#allocation2 + $0x20] sm:$0xff]
    %v200 = vld [vmem:[#allocation2 + $0x28] sm:$0xff]
    %v201 = vld [vmem:[#allocation2 + $0x30] sm:$0xff]
    %v202 = vld [vmem:[#allocation2 + $0x38] sm:$0xff]
    %v203 = vld [vmem:[#allocation2 + $0x40] sm:$0xff]
    %v204 = vld [vmem:[#allocation2 + $0x48] sm:$0xff]
    %v205 = vld [vmem:[#allocation2 + $0x50] sm:$0xff]
    %v206 = vld [vmem:[#allocation2 + $0x58] sm:$0xff]
    %v207 = vld [vmem:[#allocation2 + $0x60] sm:$0xff]
    %v208 = vld [vmem:[#allocation2 + $0x68] sm:$0xff]
    %v209 = vld [vmem:[#allocation2 + $0x70] sm:$0xff]
    %v210 = vld [vmem:[#allocation2 + $0x78] sm:$0xff]
    %v211 = vld [vmem:[%s2] sm:$0x1]
    %v213 = vperm.slane %v211, 0
    %v215 = vadd.f32 %v195, %v213
    %v216 = vadd.f32 %v196, %v213
    %v217 = vadd.f32 %v197, %v213
    %v218 = vadd.f32 %v198, %v213
    %v219 = vadd.f32 %v199, %v213
    %v220 = vadd.f32 %v200, %v213
    %v221 = vadd.f32 %v201, %v213
    %v222 = vadd.f32 %v202, %v213
    %v223 = vadd.f32 %v203, %v213
    %v224 = vadd.f32 %v204, %v213
    %v225 = vadd.f32 %v205, %v213
    %v226 = vadd.f32 %v206, %v213
    %v227 = vadd.f32 %v207, %v213
    %v228 = vadd.f32 %v208, %v213
    %v229 = vadd.f32 %v209, %v213
    %v230 = vadd.f32 %v210, %v213
    %v231 = vmul.f32 %v215, 0.5
    %v232 = vmul.f32 %v216, 0.5
    %v233 = vmul.f32 %v217, 0.5
    %v234 = vmul.f32 %v218, 0.5
    %v235 = vmul.f32 %v219, 0.5
    %v236 = vmul.f32 %v220, 0.5
    %v237 = vmul.f32 %v221, 0.5
    %v238 = vmul.f32 %v222, 0.5
    %v239 = vmul.f32 %v223, 0.5
    %v240 = vmul.f32 %v224, 0.5
    %v241 = vmul.f32 %v225, 0.5
    %v242 = vmul.f32 %v226, 0.5
    %v243 = vmul.f32 %v227, 0.5
    %v244 = vmul.f32 %v228, 0.5
    %v245 = vmul.f32 %v229, 0.5
    %v246 = vmul.f32 %v230, 0.5
    %v247 = vmul.f32 %v215, 0.70710677
    %v248 = vmul.f32 %v216, 0.70710677
    %v249 = vmul.f32 %v217, 0.70710677
    %v250 = vmul.f32 %v218, 0.70710677
    %v251 = vmul.f32 %v219, 0.70710677
    %v252 = vmul.f32 %v220, 0.70710677
    %v253 = vmul.f32 %v221, 0.70710677
    %v254 = vmul.f32 %v222, 0.70710677
    %v255 = vmul.f32 %v223, 0.70710677
    %v256 = vmul.f32 %v224, 0.70710677
    %v257 = vmul.f32 %v225, 0.70710677
    %v258 = vmul.f32 %v226, 0.70710677
    %v259 = vmul.f32 %v227, 0.70710677
    %v260 = vmul.f32 %v228, 0.70710677
    %v261 = vmul.f32 %v229, 0.70710677
    %v262 = vmul.f32 %v230, 0.70710677
    %v263 = vmul.f32 %v247, %v247
    %v264 = vmin.f32 16.0, %v263
    %v265 = vmul.f32 %v264, 2.1237322e-06
    %v266 = vadd.f32 %v265, 0.00028619796
    %v267 = vmul.f32 %v264, %v266
    %v268 = vadd.f32 %v267, 0.0036580483
    %v269 = vmul.f32 %v264, %v268
    %v270 = vadd.f32 %v269, 0.05243302
    %v271 = vmul.f32 %v264, %v270
    %v272 = vadd.f32 %v271, 0.18741608
    %v273 = vmul.f32 %v264, %v272
    %v274 = vadd.f32 %v273, 1.1283791
    %v275 = vmul.f32 %v247, %v274
    %v276 = vmul.f32 %v264, 3.8918573e-05
    %v277 = vadd.f32 %v276, 0.001143296
    %v278 = vmul.f32 %v264, %v277
    %v279 = vadd.f32 %v278, 0.014752088
    %v280 = vmul.f32 %v264, %v279
    %v281 = vadd.f32 %v280, 0.112945676
    %v282 = vmul.f32 %v264, %v281
    %v283 = vadd.f32 %v282, 0.4994258
    %v284 = vmul.f32 %v264, %v283
    %v285 = vadd.f32 %v284, 1.0
    %v286 = vrcp.pop %v285
    %v287 = vmul.f32 %v285, %v286
    %v288 = vsub.f32 1.0, %v287
    %v289 = vmul.f32 %v286, %v288
    %v290 = vadd.f32 %v286, %v289
    %vm291 = vweird.f32 %v285
    %vm292 = vweird.f32 %v286
    %vm293 = vmor %vm291, %vm292
    %v294 = vsel %vm293, %v286, %v290
    %v295 = vand.u32 2147483647, %v285
    %vm296 = vcmp.eq.f32.partialorder %v295, 8.507059e+37
    %v297 = vand.u32 %v285, 2147483648
    %v298 = vor.u32 1.1754944e-38, %v297
    %v299 = vsel %vm296, %v298, %v294
    %v300 = vmul.f32 %v275, %v299
    %v301 = vmin.f32 %v300, 1.0
    %v302 = vmax.f32 %v301, -1.0
    %v303 = vmul.f32 %v248, %v248
    %v304 = vmin.f32 16.0, %v303
    %v305 = vmul.f32 %v304, 2.1237322e-06
    %v306 = vadd.f32 %v305, 0.00028619796
    %v307 = vmul.f32 %v304, %v306
    %v308 = vadd.f32 %v307, 0.0036580483
    %v309 = vmul.f32 %v304, %v308
    %v310 = vadd.f32 %v309, 0.05243302
    %v311 = vmul.f32 %v304, %v310
    %v312 = vadd.f32 %v311, 0.18741608
    %v313 = vmul.f32 %v304, %v312
    %v314 = vadd.f32 %v313, 1.1283791
    %v315 = vmul.f32 %v248, %v314
    %v316 = vmul.f32 %v304, 3.8918573e-05
    %v317 = vadd.f32 %v316, 0.001143296
    %v318 = vmul.f32 %v304, %v317
    %v319 = vadd.f32 %v318, 0.014752088
    %v320 = vmul.f32 %v304, %v319
    %v321 = vadd.f32 %v320, 0.112945676
    %v322 = vmul.f32 %v304, %v321
    %v323 = vadd.f32 %v322, 0.4994258
    %v324 = vmul.f32 %v304, %v323
    %v325 = vadd.f32 %v324, 1.0
    %v326 = vrcp.pop %v325
    %v327 = vmul.f32 %v325, %v326
    %v328 = vsub.f32 1.0, %v327
    %v329 = vmul.f32 %v326, %v328
    %v330 = vadd.f32 %v326, %v329
    %vm331 = vweird.f32 %v325
    %vm332 = vweird.f32 %v326
    %vm333 = vmor %vm331, %vm332
    %v334 = vsel %vm333, %v326, %v330
    %v335 = vand.u32 2147483647, %v325
    %vm336 = vcmp.eq.f32.partialorder %v335, 8.507059e+37
    %v337 = vand.u32 %v325, 2147483648
    %v338 = vor.u32 1.1754944e-38, %v337
    %v339 = vsel %vm336, %v338, %v334
    %v340 = vmul.f32 %v315, %v339
    %v341 = vmin.f32 %v340, 1.0
    %v342 = vmax.f32 %v341, -1.0
    %v343 = vmul.f32 %v249, %v249
    %v344 = vmin.f32 16.0, %v343
    %v345 = vmul.f32 %v344, 2.1237322e-06
    %v346 = vadd.f32 %v345, 0.00028619796
    %v347 = vmul.f32 %v344, %v346
    %v348 = vadd.f32 %v347, 0.0036580483
    %v349 = vmul.f32 %v344, %v348
    %v350 = vadd.f32 %v349, 0.05243302
    %v351 = vmul.f32 %v344, %v350
    %v352 = vadd.f32 %v351, 0.18741608
    %v353 = vmul.f32 %v344, %v352
    %v354 = vadd.f32 %v353, 1.1283791
    %v355 = vmul.f32 %v249, %v354
    %v356 = vmul.f32 %v344, 3.8918573e-05
    %v357 = vadd.f32 %v356, 0.001143296
    %v358 = vmul.f32 %v344, %v357
    %v359 = vadd.f32 %v358, 0.014752088
    %v360 = vmul.f32 %v344, %v359
    %v361 = vadd.f32 %v360, 0.112945676
    %v362 = vmul.f32 %v344, %v361
    %v363 = vadd.f32 %v362, 0.4994258
    %v364 = vmul.f32 %v344, %v363
    %v365 = vadd.f32 %v364, 1.0
    %v366 = vrcp.pop %v365
    %v367 = vmul.f32 %v365, %v366
    %v368 = vsub.f32 1.0, %v367
    %v369 = vmul.f32 %v366, %v368
    %v370 = vadd.f32 %v366, %v369
    %vm371 = vweird.f32 %v365
    %vm372 = vweird.f32 %v366
    %vm373 = vmor %vm371, %vm372
    %v374 = vsel %vm373, %v366, %v370
    %v375 = vand.u32 2147483647, %v365
    %vm376 = vcmp.eq.f32.partialorder %v375, 8.507059e+37
    %v377 = vand.u32 %v365, 2147483648
    %v378 = vor.u32 1.1754944e-38, %v377
    %v379 = vsel %vm376, %v378, %v374
    %v380 = vmul.f32 %v355, %v379
    %v381 = vmin.f32 %v380, 1.0
    %v382 = vmax.f32 %v381, -1.0
    %v383 = vmul.f32 %v250, %v250
    %v384 = vmin.f32 16.0, %v383
    %v385 = vmul.f32 %v384, 2.1237322e-06
    %v386 = vadd.f32 %v385, 0.00028619796
    %v387 = vmul.f32 %v384, %v386
    %v388 = vadd.f32 %v387, 0.0036580483
    %v389 = vmul.f32 %v384, %v388
    %v390 = vadd.f32 %v389, 0.05243302
    %v391 = vmul.f32 %v384, %v390
    %v392 = vadd.f32 %v391, 0.18741608
    %v393 = vmul.f32 %v384, %v392
    %v394 = vadd.f32 %v393, 1.1283791
    %v395 = vmul.f32 %v250, %v394
    %v396 = vmul.f32 %v384, 3.8918573e-05
    %v397 = vadd.f32 %v396, 0.001143296
    %v398 = vmul.f32 %v384, %v397
    %v399 = vadd.f32 %v398, 0.014752088
    %v400 = vmul.f32 %v384, %v399
    %v401 = vadd.f32 %v400, 0.112945676
    %v402 = vmul.f32 %v384, %v401
    %v403 = vadd.f32 %v402, 0.4994258
    %v404 = vmul.f32 %v384, %v403
    %v405 = vadd.f32 %v404, 1.0
    %v406 = vrcp.pop %v405
    %v407 = vmul.f32 %v405, %v406
    %v408 = vsub.f32 1.0, %v407
    %v409 = vmul.f32 %v406, %v408
    %v410 = vadd.f32 %v406, %v409
    %vm411 = vweird.f32 %v405
    %vm412 = vweird.f32 %v406
    %vm413 = vmor %vm411, %vm412
    %v414 = vsel %vm413, %v406, %v410
    %v415 = vand.u32 2147483647, %v405
    %vm416 = vcmp.eq.f32.partialorder %v415, 8.507059e+37
    %v417 = vand.u32 %v405, 2147483648
    %v418 = vor.u32 1.1754944e-38, %v417
    %v419 = vsel %vm416, %v418, %v414
    %v420 = vmul.f32 %v395, %v419
    %v421 = vmin.f32 %v420, 1.0
    %v422 = vmax.f32 %v421, -1.0
    %v423 = vmul.f32 %v251, %v251
    %v424 = vmin.f32 16.0, %v423
    %v425 = vmul.f32 %v424, 2.1237322e-06
    %v426 = vadd.f32 %v425, 0.00028619796
    %v427 = vmul.f32 %v424, %v426
    %v428 = vadd.f32 %v427, 0.0036580483
    %v429 = vmul.f32 %v424, %v428
    %v430 = vadd.f32 %v429, 0.05243302
    %v431 = vmul.f32 %v424, %v430
    %v432 = vadd.f32 %v431, 0.18741608
    %v433 = vmul.f32 %v424, %v432
    %v434 = vadd.f32 %v433, 1.1283791
    %v435 = vmul.f32 %v251, %v434
    %v436 = vmul.f32 %v424, 3.8918573e-05
    %v437 = vadd.f32 %v436, 0.001143296
    %v438 = vmul.f32 %v424, %v437
    %v439 = vadd.f32 %v438, 0.014752088
    %v440 = vmul.f32 %v424, %v439
    %v441 = vadd.f32 %v440, 0.112945676
    %v442 = vmul.f32 %v424, %v441
    %v443 = vadd.f32 %v442, 0.4994258
    %v444 = vmul.f32 %v424, %v443
    %v445 = vadd.f32 %v444, 1.0
    %v446 = vrcp.pop %v445
    %v447 = vmul.f32 %v445, %v446
    %v448 = vsub.f32 1.0, %v447
    %v449 = vmul.f32 %v446, %v448
    %v450 = vadd.f32 %v446, %v449
    %vm451 = vweird.f32 %v445
    %vm452 = vweird.f32 %v446
    %vm453 = vmor %vm451, %vm452
    %v454 = vsel %vm453, %v446, %v450
    %v455 = vand.u32 2147483647, %v445
    %vm456 = vcmp.eq.f32.partialorder %v455, 8.507059e+37
    %v457 = vand.u32 %v445, 2147483648
    %v458 = vor.u32 1.1754944e-38, %v457
    %v459 = vsel %vm456, %v458, %v454
    %v460 = vmul.f32 %v435, %v459
    %v461 = vmin.f32 %v460, 1.0
    %v462 = vmax.f32 %v461, -1.0
    %v463 = vmul.f32 %v252, %v252
    %v464 = vmin.f32 16.0, %v463
    %v465 = vmul.f32 %v464, 2.1237322e-06
    %v466 = vadd.f32 %v465, 0.00028619796
    %v467 = vmul.f32 %v464, %v466
    %v468 = vadd.f32 %v467, 0.0036580483
    %v469 = vmul.f32 %v464, %v468
    %v470 = vadd.f32 %v469, 0.05243302
    %v471 = vmul.f32 %v464, %v470
    %v472 = vadd.f32 %v471, 0.18741608
    %v473 = vmul.f32 %v464, %v472
    %v474 = vadd.f32 %v473, 1.1283791
    %v475 = vmul.f32 %v252, %v474
    %v476 = vmul.f32 %v464, 3.8918573e-05
    %v477 = vadd.f32 %v476, 0.001143296
    %v478 = vmul.f32 %v464, %v477
    %v479 = vadd.f32 %v478, 0.014752088
    %v480 = vmul.f32 %v464, %v479
    %v481 = vadd.f32 %v480, 0.112945676
    %v482 = vmul.f32 %v464, %v481
    %v483 = vadd.f32 %v482, 0.4994258
    %v484 = vmul.f32 %v464, %v483
    %v485 = vadd.f32 %v484, 1.0
    %v486 = vrcp.pop %v485
    %v487 = vmul.f32 %v485, %v486
    %v488 = vsub.f32 1.0, %v487
    %v489 = vmul.f32 %v486, %v488
    %v490 = vadd.f32 %v486, %v489
    %vm491 = vweird.f32 %v485
    %vm492 = vweird.f32 %v486
    %vm493 = vmor %vm491, %vm492
    %v494 = vsel %vm493, %v486, %v490
    %v495 = vand.u32 2147483647, %v485
    %vm496 = vcmp.eq.f32.partialorder %v495, 8.507059e+37
    %v497 = vand.u32 %v485, 2147483648
    %v498 = vor.u32 1.1754944e-38, %v497
    %v499 = vsel %vm496, %v498, %v494
    %v500 = vmul.f32 %v475, %v499
    %v501 = vmin.f32 %v500, 1.0
    %v502 = vmax.f32 %v501, -1.0
    %v503 = vmul.f32 %v253, %v253
    %v504 = vmin.f32 16.0, %v503
    %v505 = vmul.f32 %v504, 2.1237322e-06
    %v506 = vadd.f32 %v505, 0.00028619796
    %v507 = vmul.f32 %v504, %v506
    %v508 = vadd.f32 %v507, 0.0036580483
    %v509 = vmul.f32 %v504, %v508
    %v510 = vadd.f32 %v509, 0.05243302
    %v511 = vmul.f32 %v504, %v510
    %v512 = vadd.f32 %v511, 0.18741608
    %v513 = vmul.f32 %v504, %v512
    %v514 = vadd.f32 %v513, 1.1283791
    %v515 = vmul.f32 %v253, %v514
    %v516 = vmul.f32 %v504, 3.8918573e-05
    %v517 = vadd.f32 %v516, 0.001143296
    %v518 = vmul.f32 %v504, %v517
    %v519 = vadd.f32 %v518, 0.014752088
    %v520 = vmul.f32 %v504, %v519
    %v521 = vadd.f32 %v520, 0.112945676
    %v522 = vmul.f32 %v504, %v521
    %v523 = vadd.f32 %v522, 0.4994258
    %v524 = vmul.f32 %v504, %v523
    %v525 = vadd.f32 %v524, 1.0
    %v526 = vrcp.pop %v525
    %v527 = vmul.f32 %v525, %v526
    %v528 = vsub.f32 1.0, %v527
    %v529 = vmul.f32 %v526, %v528
    %v530 = vadd.f32 %v526, %v529
    %vm531 = vweird.f32 %v525
    %vm532 = vweird.f32 %v526
    %vm533 = vmor %vm531, %vm532
    %v534 = vsel %vm533, %v526, %v530
    %v535 = vand.u32 2147483647, %v525
    %vm536 = vcmp.eq.f32.partialorder %v535, 8.507059e+37
    %v537 = vand.u32 %v525, 2147483648
    %v538 = vor.u32 1.1754944e-38, %v537
    %v539 = vsel %vm536, %v538, %v534
    %v540 = vmul.f32 %v515, %v539
    %v541 = vmin.f32 %v540, 1.0
    %v542 = vmax.f32 %v541, -1.0
    %v543 = vmul.f32 %v254, %v254
    %v544 = vmin.f32 16.0, %v543
    %v545 = vmul.f32 %v544, 2.1237322e-06
    %v546 = vadd.f32 %v545, 0.00028619796
    %v547 = vmul.f32 %v544, %v546
    %v548 = vadd.f32 %v547, 0.0036580483
    %v549 = vmul.f32 %v544, %v548
    %v550 = vadd.f32 %v549, 0.05243302
    %v551 = vmul.f32 %v544, %v550
    %v552 = vadd.f32 %v551, 0.18741608
    %v553 = vmul.f32 %v544, %v552
    %v554 = vadd.f32 %v553, 1.1283791
    %v555 = vmul.f32 %v254, %v554
    %v556 = vmul.f32 %v544, 3.8918573e-05
    %v557 = vadd.f32 %v556, 0.001143296
    %v558 = vmul.f32 %v544, %v557
    %v559 = vadd.f32 %v558, 0.014752088
    %v560 = vmul.f32 %v544, %v559
    %v561 = vadd.f32 %v560, 0.112945676
    %v562 = vmul.f32 %v544, %v561
    %v563 = vadd.f32 %v562, 0.4994258
    %v564 = vmul.f32 %v544, %v563
    %v565 = vadd.f32 %v564, 1.0
    %v566 = vrcp.pop %v565
    %v567 = vmul.f32 %v565, %v566
    %v568 = vsub.f32 1.0, %v567
    %v569 = vmul.f32 %v566, %v568
    %v570 = vadd.f32 %v566, %v569
    %vm571 = vweird.f32 %v565
    %vm572 = vweird.f32 %v566
    %vm573 = vmor %vm571, %vm572
    %v574 = vsel %vm573, %v566, %v570
    %v575 = vand.u32 2147483647, %v565
    %vm576 = vcmp.eq.f32.partialorder %v575, 8.507059e+37
    %v577 = vand.u32 %v565, 2147483648
    %v578 = vor.u32 1.1754944e-38, %v577
    %v579 = vsel %vm576, %v578, %v574
    %v580 = vmul.f32 %v555, %v579
    %v581 = vmin.f32 %v580, 1.0
    %v582 = vmax.f32 %v581, -1.0
    %v583 = vmul.f32 %v255, %v255
    %v584 = vmin.f32 16.0, %v583
    %v585 = vmul.f32 %v584, 2.1237322e-06
    %v586 = vadd.f32 %v585, 0.00028619796
    %v587 = vmul.f32 %v584, %v586
    %v588 = vadd.f32 %v587, 0.0036580483
    %v589 = vmul.f32 %v584, %v588
    %v590 = vadd.f32 %v589, 0.05243302
    %v591 = vmul.f32 %v584, %v590
    %v592 = vadd.f32 %v591, 0.18741608
    %v593 = vmul.f32 %v584, %v592
    %v594 = vadd.f32 %v593, 1.1283791
    %v595 = vmul.f32 %v255, %v594
    %v596 = vmul.f32 %v584, 3.8918573e-05
    %v597 = vadd.f32 %v596, 0.001143296
    %v598 = vmul.f32 %v584, %v597
    %v599 = vadd.f32 %v598, 0.014752088
    %v600 = vmul.f32 %v584, %v599
    %v601 = vadd.f32 %v600, 0.112945676
    %v602 = vmul.f32 %v584, %v601
    %v603 = vadd.f32 %v602, 0.4994258
    %v604 = vmul.f32 %v584, %v603
    %v605 = vadd.f32 %v604, 1.0
    %v606 = vrcp.pop %v605
    %v607 = vmul.f32 %v605, %v606
    %v608 = vsub.f32 1.0, %v607
    %v609 = vmul.f32 %v606, %v608
    %v610 = vadd.f32 %v606, %v609
    %vm611 = vweird.f32 %v605
    %vm612 = vweird.f32 %v606
    %vm613 = vmor %vm611, %vm612
    %v614 = vsel %vm613, %v606, %v610
    %v615 = vand.u32 2147483647, %v605
    %vm616 = vcmp.eq.f32.partialorder %v615, 8.507059e+37
    %v617 = vand.u32 %v605, 2147483648
    %v618 = vor.u32 1.1754944e-38, %v617
    %v619 = vsel %vm616, %v618, %v614
    %v620 = vmul.f32 %v595, %v619
    %v621 = vmin.f32 %v620, 1.0
    %v622 = vmax.f32 %v621, -1.0
    %v623 = vmul.f32 %v256, %v256
    %v624 = vmin.f32 16.0, %v623
    %v625 = vmul.f32 %v624, 2.1237322e-06
    %v626 = vadd.f32 %v625, 0.00028619796
    %v627 = vmul.f32 %v624, %v626
    %v628 = vadd.f32 %v627, 0.0036580483
    %v629 = vmul.f32 %v624, %v628
    %v630 = vadd.f32 %v629, 0.05243302
    %v631 = vmul.f32 %v624, %v630
    %v632 = vadd.f32 %v631, 0.18741608
    %v633 = vmul.f32 %v624, %v632
    %v634 = vadd.f32 %v633, 1.1283791
    %v635 = vmul.f32 %v256, %v634
    %v636 = vmul.f32 %v624, 3.8918573e-05
    %v637 = vadd.f32 %v636, 0.001143296
    %v638 = vmul.f32 %v624, %v637
    %v639 = vadd.f32 %v638, 0.014752088
    %v640 = vmul.f32 %v624, %v639
    %v641 = vadd.f32 %v640, 0.112945676
    %v642 = vmul.f32 %v624, %v641
    %v643 = vadd.f32 %v642, 0.4994258
    %v644 = vmul.f32 %v624, %v643
    %v645 = vadd.f32 %v644, 1.0
    %v646 = vrcp.pop %v645
    %v647 = vmul.f32 %v645, %v646
    %v648 = vsub.f32 1.0, %v647
    %v649 = vmul.f32 %v646, %v648
    %v650 = vadd.f32 %v646, %v649
    %vm651 = vweird.f32 %v645
    %vm652 = vweird.f32 %v646
    %vm653 = vmor %vm651, %vm652
    %v654 = vsel %vm653, %v646, %v650
    %v655 = vand.u32 2147483647, %v645
    %vm656 = vcmp.eq.f32.partialorder %v655, 8.507059e+37
    %v657 = vand.u32 %v645, 2147483648
    %v658 = vor.u32 1.1754944e-38, %v657
    %v659 = vsel %vm656, %v658, %v654
    %v660 = vmul.f32 %v635, %v659
    %v661 = vmin.f32 %v660, 1.0
    %v662 = vmax.f32 %v661, -1.0
    %v663 = vmul.f32 %v257, %v257
    %v664 = vmin.f32 16.0, %v663
    %v665 = vmul.f32 %v664, 2.1237322e-06
    %v666 = vadd.f32 %v665, 0.00028619796
    %v667 = vmul.f32 %v664, %v666
    %v668 = vadd.f32 %v667, 0.0036580483
    %v669 = vmul.f32 %v664, %v668
    %v670 = vadd.f32 %v669, 0.05243302
    %v671 = vmul.f32 %v664, %v670
    %v672 = vadd.f32 %v671, 0.18741608
    %v673 = vmul.f32 %v664, %v672
    %v674 = vadd.f32 %v673, 1.1283791
    %v675 = vmul.f32 %v257, %v674
    %v676 = vmul.f32 %v664, 3.8918573e-05
    %v677 = vadd.f32 %v676, 0.001143296
    %v678 = vmul.f32 %v664, %v677
    %v679 = vadd.f32 %v678, 0.014752088
    %v680 = vmul.f32 %v664, %v679
    %v681 = vadd.f32 %v680, 0.112945676
    %v682 = vmul.f32 %v664, %v681
    %v683 = vadd.f32 %v682, 0.4994258
    %v684 = vmul.f32 %v664, %v683
    %v685 = vadd.f32 %v684, 1.0
    %v686 = vrcp.pop %v685
    %v687 = vmul.f32 %v685, %v686
    %v688 = vsub.f32 1.0, %v687
    %v689 = vmul.f32 %v686, %v688
    %v690 = vadd.f32 %v686, %v689
    %vm691 = vweird.f32 %v685
    %vm692 = vweird.f32 %v686
    %vm693 = vmor %vm691, %vm692
    %v694 = vsel %vm693, %v686, %v690
    %v695 = vand.u32 2147483647, %v685
    %vm696 = vcmp.eq.f32.partialorder %v695, 8.507059e+37
    %v697 = vand.u32 %v685, 2147483648
    %v698 = vor.u32 1.1754944e-38, %v697
    %v699 = vsel %vm696, %v698, %v694
    %v700 = vmul.f32 %v675, %v699
    %v701 = vmin.f32 %v700, 1.0
    %v702 = vmax.f32 %v701, -1.0
    %v703 = vmul.f32 %v258, %v258
    %v704 = vmin.f32 16.0, %v703
    %v705 = vmul.f32 %v704, 2.1237322e-06
    %v706 = vadd.f32 %v705, 0.00028619796
    %v707 = vmul.f32 %v704, %v706
    %v708 = vadd.f32 %v707, 0.0036580483
    %v709 = vmul.f32 %v704, %v708
    %v710 = vadd.f32 %v709, 0.05243302
    %v711 = vmul.f32 %v704, %v710
    %v712 = vadd.f32 %v711, 0.18741608
    %v713 = vmul.f32 %v704, %v712
    %v714 = vadd.f32 %v713, 1.1283791
    %v715 = vmul.f32 %v258, %v714
    %v716 = vmul.f32 %v704, 3.8918573e-05
    %v717 = vadd.f32 %v716, 0.001143296
    %v718 = vmul.f32 %v704, %v717
    %v719 = vadd.f32 %v718, 0.014752088
    %v720 = vmul.f32 %v704, %v719
    %v721 = vadd.f32 %v720, 0.112945676
    %v722 = vmul.f32 %v704, %v721
    %v723 = vadd.f32 %v722, 0.4994258
    %v724 = vmul.f32 %v704, %v723
    %v725 = vadd.f32 %v724, 1.0
    %v726 = vrcp.pop %v725
    %v727 = vmul.f32 %v725, %v726
    %v728 = vsub.f32 1.0, %v727
    %v729 = vmul.f32 %v726, %v728
    %v730 = vadd.f32 %v726, %v729
    %vm731 = vweird.f32 %v725
    %vm732 = vweird.f32 %v726
    %vm733 = vmor %vm731, %vm732
    %v734 = vsel %vm733, %v726, %v730
    %v735 = vand.u32 2147483647, %v725
    %vm736 = vcmp.eq.f32.partialorder %v735, 8.507059e+37
    %v737 = vand.u32 %v725, 2147483648
    %v738 = vor.u32 1.1754944e-38, %v737
    %v739 = vsel %vm736, %v738, %v734
    %v740 = vmul.f32 %v715, %v739
    %v741 = vmin.f32 %v740, 1.0
    %v742 = vmax.f32 %v741, -1.0
    %v743 = vmul.f32 %v259, %v259
    %v744 = vmin.f32 16.0, %v743
    %v745 = vmul.f32 %v744, 2.1237322e-06
    %v746 = vadd.f32 %v745, 0.00028619796
    %v747 = vmul.f32 %v744, %v746
    %v748 = vadd.f32 %v747, 0.0036580483
    %v749 = vmul.f32 %v744, %v748
    %v750 = vadd.f32 %v749, 0.05243302
    %v751 = vmul.f32 %v744, %v750
    %v752 = vadd.f32 %v751, 0.18741608
    %v753 = vmul.f32 %v744, %v752
    %v754 = vadd.f32 %v753, 1.1283791
    %v755 = vmul.f32 %v259, %v754
    %v756 = vmul.f32 %v744, 3.8918573e-05
    %v757 = vadd.f32 %v756, 0.001143296
    %v758 = vmul.f32 %v744, %v757
    %v759 = vadd.f32 %v758, 0.014752088
    %v760 = vmul.f32 %v744, %v759
    %v761 = vadd.f32 %v760, 0.112945676
    %v762 = vmul.f32 %v744, %v761
    %v763 = vadd.f32 %v762, 0.4994258
    %v764 = vmul.f32 %v744, %v763
    %v765 = vadd.f32 %v764, 1.0
    %v766 = vrcp.pop %v765
    %v767 = vmul.f32 %v765, %v766
    %v768 = vsub.f32 1.0, %v767
    %v769 = vmul.f32 %v766, %v768
    %v770 = vadd.f32 %v766, %v769
    %vm771 = vweird.f32 %v765
    %vm772 = vweird.f32 %v766
    %vm773 = vmor %vm771, %vm772
    %v774 = vsel %vm773, %v766, %v770
    %v775 = vand.u32 2147483647, %v765
    %vm776 = vcmp.eq.f32.partialorder %v775, 8.507059e+37
    %v777 = vand.u32 %v765, 2147483648
    %v778 = vor.u32 1.1754944e-38, %v777
    %v779 = vsel %vm776, %v778, %v774
    %v780 = vmul.f32 %v755, %v779
    %v781 = vmin.f32 %v780, 1.0
    %v782 = vmax.f32 %v781, -1.0
    %v783 = vmul.f32 %v260, %v260
    %v784 = vmin.f32 16.0, %v783
    %v785 = vmul.f32 %v784, 2.1237322e-06
    %v786 = vadd.f32 %v785, 0.00028619796
    %v787 = vmul.f32 %v784, %v786
    %v788 = vadd.f32 %v787, 0.0036580483
    %v789 = vmul.f32 %v784, %v788
    %v790 = vadd.f32 %v789, 0.05243302
    %v791 = vmul.f32 %v784, %v790
    %v792 = vadd.f32 %v791, 0.18741608
    %v793 = vmul.f32 %v784, %v792
    %v794 = vadd.f32 %v793, 1.1283791
    %v795 = vmul.f32 %v260, %v794
    %v796 = vmul.f32 %v784, 3.8918573e-05
    %v797 = vadd.f32 %v796, 0.001143296
    %v798 = vmul.f32 %v784, %v797
    %v799 = vadd.f32 %v798, 0.014752088
    %v800 = vmul.f32 %v784, %v799
    %v801 = vadd.f32 %v800, 0.112945676
    %v802 = vmul.f32 %v784, %v801
    %v803 = vadd.f32 %v802, 0.4994258
    %v804 = vmul.f32 %v784, %v803
    %v805 = vadd.f32 %v804, 1.0
    %v806 = vrcp.pop %v805
    %v807 = vmul.f32 %v805, %v806
    %v808 = vsub.f32 1.0, %v807
    %v809 = vmul.f32 %v806, %v808
    %v810 = vadd.f32 %v806, %v809
    %vm811 = vweird.f32 %v805
    %vm812 = vweird.f32 %v806
    %vm813 = vmor %vm811, %vm812
    %v814 = vsel %vm813, %v806, %v810
    %v815 = vand.u32 2147483647, %v805
    %vm816 = vcmp.eq.f32.partialorder %v815, 8.507059e+37
    %v817 = vand.u32 %v805, 2147483648
    %v818 = vor.u32 1.1754944e-38, %v817
    %v819 = vsel %vm816, %v818, %v814
    %v820 = vmul.f32 %v795, %v819
    %v821 = vmin.f32 %v820, 1.0
    %v822 = vmax.f32 %v821, -1.0
    %v823 = vmul.f32 %v261, %v261
    %v824 = vmin.f32 16.0, %v823
    %v825 = vmul.f32 %v824, 2.1237322e-06
    %v826 = vadd.f32 %v825, 0.00028619796
    %v827 = vmul.f32 %v824, %v826
    %v828 = vadd.f32 %v827, 0.0036580483
    %v829 = vmul.f32 %v824, %v828
    %v830 = vadd.f32 %v829, 0.05243302
    %v831 = vmul.f32 %v824, %v830
    %v832 = vadd.f32 %v831, 0.18741608
    %v833 = vmul.f32 %v824, %v832
    %v834 = vadd.f32 %v833, 1.1283791
    %v835 = vmul.f32 %v261, %v834
    %v836 = vmul.f32 %v824, 3.8918573e-05
    %v837 = vadd.f32 %v836, 0.001143296
    %v838 = vmul.f32 %v824, %v837
    %v839 = vadd.f32 %v838, 0.014752088
    %v840 = vmul.f32 %v824, %v839
    %v841 = vadd.f32 %v840, 0.112945676
    %v842 = vmul.f32 %v824, %v841
    %v843 = vadd.f32 %v842, 0.4994258
    %v844 = vmul.f32 %v824, %v843
    %v845 = vadd.f32 %v844, 1.0
    %v846 = vrcp.pop %v845
    %v847 = vmul.f32 %v845, %v846
    %v848 = vsub.f32 1.0, %v847
    %v849 = vmul.f32 %v846, %v848
    %v850 = vadd.f32 %v846, %v849
    %vm851 = vweird.f32 %v845
    %vm852 = vweird.f32 %v846
    %vm853 = vmor %vm851, %vm852
    %v854 = vsel %vm853, %v846, %v850
    %v855 = vand.u32 2147483647, %v845
    %vm856 = vcmp.eq.f32.partialorder %v855, 8.507059e+37
    %v857 = vand.u32 %v845, 2147483648
    %v858 = vor.u32 1.1754944e-38, %v857
    %v859 = vsel %vm856, %v858, %v854
    %v860 = vmul.f32 %v835, %v859
    %v861 = vmin.f32 %v860, 1.0
    %v862 = vmax.f32 %v861, -1.0
    %v863 = vmul.f32 %v262, %v262
    %v864 = vmin.f32 16.0, %v863
    %v865 = vmul.f32 %v864, 2.1237322e-06
    %v866 = vadd.f32 %v865, 0.00028619796
    %v867 = vmul.f32 %v864, %v866
    %v868 = vadd.f32 %v867, 0.0036580483
    %v869 = vmul.f32 %v864, %v868
    %v870 = vadd.f32 %v869, 0.05243302
    %v871 = vmul.f32 %v864, %v870
    %v872 = vadd.f32 %v871, 0.18741608
    %v873 = vmul.f32 %v864, %v872
    %v874 = vadd.f32 %v873, 1.1283791
    %v875 = vmul.f32 %v262, %v874
    %v876 = vmul.f32 %v864, 3.8918573e-05
    %v877 = vadd.f32 %v876, 0.001143296
    %v878 = vmul.f32 %v864, %v877
    %v879 = vadd.f32 %v878, 0.014752088
    %v880 = vmul.f32 %v864, %v879
    %v881 = vadd.f32 %v880, 0.112945676
    %v882 = vmul.f32 %v864, %v881
    %v883 = vadd.f32 %v882, 0.4994258
    %v884 = vmul.f32 %v864, %v883
    %v885 = vadd.f32 %v884, 1.0
    %v886 = vrcp.pop %v885
    %v887 = vmul.f32 %v885, %v886
    %v888 = vsub.f32 1.0, %v887
    %v889 = vmul.f32 %v886, %v888
    %v890 = vadd.f32 %v886, %v889
    %vm891 = vweird.f32 %v885
    %vm892 = vweird.f32 %v886
    %vm893 = vmor %vm891, %vm892
    %v894 = vsel %vm893, %v886, %v890
    %v895 = vand.u32 2147483647, %v885
    %vm896 = vcmp.eq.f32.partialorder %v895, 8.507059e+37
    %v897 = vand.u32 %v885, 2147483648
    %v898 = vor.u32 1.1754944e-38, %v897
    %v899 = vsel %vm896, %v898, %v894
    %v900 = vmul.f32 %v875, %v899
    %v901 = vmin.f32 %v900, 1.0
    %v902 = vmax.f32 %v901, -1.0
    %v903 = vadd.f32 %v302, 1.0
    %v904 = vadd.f32 %v342, 1.0
    %v905 = vadd.f32 %v382, 1.0
    %v906 = vadd.f32 %v422, 1.0
    %v907 = vadd.f32 %v462, 1.0
    %v908 = vadd.f32 %v502, 1.0
    %v909 = vadd.f32 %v542, 1.0
    %v910 = vadd.f32 %v582, 1.0
    %v911 = vadd.f32 %v622, 1.0
    %v912 = vadd.f32 %v662, 1.0
    %v913 = vadd.f32 %v702, 1.0
    %v914 = vadd.f32 %v742, 1.0
    %v915 = vadd.f32 %v782, 1.0
    %v916 = vadd.f32 %v822, 1.0
    %v917 = vadd.f32 %v862, 1.0
    %v918 = vadd.f32 %v902, 1.0
    %v919 = vmul.f32 %v231, %v903
    %v920 = vmul.f32 %v232, %v904
    %v921 = vmul.f32 %v233, %v905
    %v922 = vmul.f32 %v234, %v906
    %v923 = vmul.f32 %v235, %v907
    %v924 = vmul.f32 %v236, %v908
    %v925 = vmul.f32 %v237, %v909
    %v926 = vmul.f32 %v238, %v910
    %v927 = vmul.f32 %v239, %v911
    %v928 = vmul.f32 %v240, %v912
    %v929 = vmul.f32 %v241, %v913
    %v930 = vmul.f32 %v242, %v914
    %v931 = vmul.f32 %v243, %v915
    %v932 = vmul.f32 %v244, %v916
    %v933 = vmul.f32 %v245, %v917
    %v934 = vmul.f32 %v246, %v918
    %935 = vst.msk [vmem:[%s3] sm:$0xff] %vm175, %v919
    %936 = vst.msk [vmem:[%s3 + $0x8] sm:$0xff] %vm175, %v920
    %937 = vst.msk [vmem:[%s3 + $0x10] sm:$0xff] %vm175, %v921
    %938 = vst.msk [vmem:[%s3 + $0x18] sm:$0xff] %vm175, %v922
    %939 = vst.msk [vmem:[%s3 + $0x20] sm:$0xff] %vm175, %v923
    %940 = vst.msk [vmem:[%s3 + $0x28] sm:$0xff] %vm175, %v924
    %941 = vst.msk [vmem:[%s3 + $0x30] sm:$0xff] %vm175, %v925
    %942 = vst.msk [vmem:[%s3 + $0x38] sm:$0xff] %vm175, %v926
    %943 = vst.msk [vmem:[%s3 + $0x40] sm:$0xff] %vm175, %v927
    %944 = vst.msk [vmem:[%s3 + $0x48] sm:$0xff] %vm175, %v928
    %945 = vst.msk [vmem:[%s3 + $0x50] sm:$0xff] %vm175, %v929
    %946 = vst.msk [vmem:[%s3 + $0x58] sm:$0xff] %vm175, %v930
    %947 = vst.msk [vmem:[%s3 + $0x60] sm:$0xff] %vm175, %v931
    %948 = vst.msk [vmem:[%s3 + $0x68] sm:$0xff] %vm175, %v932
    %949 = vst.msk [vmem:[%s3 + $0x70] sm:$0xff] %vm175, %v933
    %950 = vst.msk [vmem:[%s3 + $0x78] sm:$0xff] %vm175, %v934
  $region21: #{whisper_encoder_feats.17} parent=0 // pred_fallthru
    _
  // Predicated region
  $region22: #{whisper_encoder_feats.17} parent=0 // pred_check
    _
  $region23: #{whisper_encoder_feats.17} parent=0 // pred_check_branch
    %952 = sbr.rel (0) target = $region25
  $region24: #{whisper_encoder_feats.17} parent=0 // pred_region
    _
  $region25: #{whisper_encoder_feats.17} parent=0 // pred_fallthru
    _
  // Predicated region
  $region26: #{whisper_encoder_feats.17} parent=0 // pred_check
    _
  $region27: #{whisper_encoder_feats.17} parent=0 // pred_check_branch
    %954 = sbr.rel (0) target = $region29
  $region28: #{whisper_encoder_feats.17} parent=0 // pred_region
    _
  $region29: #{whisper_encoder_feats.17} parent=0 // pred_fallthru
    _

// kernel: whisper_encoder_feats.18
$region0: #{whisper_encoder_feats.18}
  #allocation0 [shape = 'u32[]', space=smem, size = 0x4, offset = 0x4, fixed_abs, tag = 'smem constant byte address 0x4 - core index']
  #allocation1 [shape = 'u32[72,128]{1,0:T(1,128)}', space=vmem, size = 0x9000, scoped, tag = 'internal scratch']
  #allocation2 [shape = 'f32[64,32]{1,0:T(8,128)}', space=vmem, size = 0x8000, scoped, tag = 'scratch operand']
  %s0 = inlined_call_operand.vmem [shape: f32[64,96], index: 0, kind: input, shape index: {}]
  %s1 = inlined_call_operand.vmem [shape: f32[96,32], index: 1, kind: input, shape index: {}]
  %s2 = inlined_call_operand.vmem [shape: f32[1,32], index: 2, kind: input, shape index: {}]
  %s3 = inlined_call_operand.vmem [shape: f32[64,32], index: 3, kind: output, shape index: {}]
  %s4 = sld [smem:[#allocation0]]
  $region30: #{whisper_encoder_feats.18} parent=0
    _
  %s6 = ssub.s32 1, %s4
  %s7 = scalar_select 0, %s6, %s4
  // Predicated region
  $region2: #{whisper_encoder_feats.18} parent=0 // pred_check
    _
  $region3: #{whisper_encoder_feats.18} parent=0 // pred_check_branch
    %9 = sbr.rel (0) target = $region5
  $region4: #{whisper_encoder_feats.18} parent=0 // pred_region
    _
  $region5: #{whisper_encoder_feats.18} parent=0 // pred_fallthru
    _
  // Predicated region
  $region6: #{whisper_encoder_feats.18} parent=0 // pred_check
    _
  $region7: #{whisper_encoder_feats.18} parent=0 // pred_check_branch
    %11 = sbr.rel (0) target = $region9
  $region8: #{whisper_encoder_feats.18} parent=0 // pred_region
    _
  $region9: #{whisper_encoder_feats.18} parent=0 // pred_fallthru
    _
  // Predicated region
  $region10: #{whisper_encoder_feats.18} parent=0 // pred_check
    _
  $region11: #{whisper_encoder_feats.18} parent=0 // pred_check_branch
    %13 = sbr.rel (0) target = $region13
  $region12: #{whisper_encoder_feats.18} parent=0 // pred_region
    _
  $region13: #{whisper_encoder_feats.18} parent=0 // pred_fallthru
    _
  %p15 = scmp.eq.s32.totalorder 0, 0
  // Predicated region
  $region14: #{whisper_encoder_feats.18} parent=0 // pred_check
    %p16 = pneg %p15
  $region15: #{whisper_encoder_feats.18} parent=0 // pred_check_branch
    %18 = sbr.rel (%p16) target = $region17
  $region16: #{whisper_encoder_feats.18} parent=0 // pred_region
    %vm19 = vcmask 261120
    %20 = vst.msk [vmem:[#allocation2] sm:$0xff] %vm19, 0.0
    %21 = vst.msk [vmem:[#allocation2 + $0x8] sm:$0xff] %vm19, 0.0
    %22 = vst.msk [vmem:[#allocation2 + $0x10] sm:$0xff] %vm19, 0.0
    %23 = vst.msk [vmem:[#allocation2 + $0x18] sm:$0xff] %vm19, 0.0
    %24 = vst.msk [vmem:[#allocation2 + $0x20] sm:$0xff] %vm19, 0.0
    %25 = vst.msk [vmem:[#allocation2 + $0x28] sm:$0xff] %vm19, 0.0
    %26 = vst.msk [vmem:[#allocation2 + $0x30] sm:$0xff] %vm19, 0.0
    %27 = vst.msk [vmem:[#allocation2 + $0x38] sm:$0xff] %vm19, 0.0
  $region17: #{whisper_encoder_feats.18} parent=0 // pred_fallthru
    _
  %v28 = vld [vmem:[#allocation2] sm:$0xff]
  %v29 = vld [vmem:[#allocation2 + $0x8] sm:$0xff]
  %v30 = vld [vmem:[#allocation2 + $0x10] sm:$0xff]
  %v31 = vld [vmem:[#allocation2 + $0x18] sm:$0xff]
  %v32 = vld [vmem:[#allocation2 + $0x20] sm:$0xff]
  %v33 = vld [vmem:[#allocation2 + $0x28] sm:$0xff]
  %v34 = vld [vmem:[#allocation2 + $0x30] sm:$0xff]
  %v35 = vld [vmem:[#allocation2 + $0x38] sm:$0xff]
  %v36 = vld [vmem:[%s0] sm:$0xff]
  %v37 = vld [vmem:[%s0 + $0x8] sm:$0xff]
  %v38 = vld [vmem:[%s0 + $0x10] sm:$0xff]
  %v39 = vld [vmem:[%s0 + $0x18] sm:$0xff]
  %v40 = vld [vmem:[%s0 + $0x20] sm:$0xff]
  %v41 = vld [vmem:[%s0 + $0x28] sm:$0xff]
  %v42 = vld [vmem:[%s0 + $0x30] sm:$0xff]
  %v43 = vld [vmem:[%s0 + $0x38] sm:$0xff]
  %v44 = vpack.c.bf16 %v37, %v36
  %v45 = vpack.c.bf16 %v39, %v38
  %v46 = vpack.c.bf16 %v41, %v40
  %v47 = vpack.c.bf16 %v43, %v42
  %v48 = vld [vmem:[%s1] sm:$0xff]
  %v49 = vld [vmem:[%s1 + $0x8] sm:$0xff]
  %v50 = vld [vmem:[%s1 + $0x10] sm:$0xff]
  %v51 = vld [vmem:[%s1 + $0x18] sm:$0xff]
  %v52 = vld [vmem:[%s1 + $0x20] sm:$0xff]
  %v53 = vld [vmem:[%s1 + $0x28] sm:$0xff]
  %v54 = vld [vmem:[%s1 + $0x30] sm:$0xff]
  %v55 = vld [vmem:[%s1 + $0x38] sm:$0xff]
  %v56 = vld [vmem:[%s1 + $0x40] sm:$0xff]
  %v57 = vld [vmem:[%s1 + $0x48] sm:$0xff]
  %v58 = vld [vmem:[%s1 + $0x50] sm:$0xff]
  %v59 = vld [vmem:[%s1 + $0x58] sm:$0xff]
  %v60 = vpack.c.bf16 %v49, %v48
  %v61 = vpack.c.bf16 %v51, %v50
  %v62 = vpack.c.bf16 %v53, %v52
  %v63 = vpack.c.bf16 %v55, %v54
  %v64 = vpack.c.bf16 %v57, %v56
  %v65 = vpack.c.bf16 %v59, %v58
  %vm66 = vcmask 785408
  %v68 = vsel %vm66, %v44, 0
  %v71 = vsel %vm66, %v45, 0
  %v74 = vsel %vm66, %v46, 0
  %v77 = vsel %vm66, %v47, 0
  %79 = vmatpush.bf16.msra.mxu0 0
  %80 = vmatpush.bf16.msra.mxu0 0
  %81 = vmatpush.bf16.msra.mxu0 %v65
  %82 = vmatpush.bf16.msra.mxu0 %v64
  %83 = vmatpush.bf16.msra.mxu0 %v63
  %84 = vmatpush.bf16.msra.mxu0 %v62
  %85 = vmatpush.bf16.msra.mxu0 %v61
  %86 = vmatpush.bf16.msra.mxu0 %v60
  %87 = vmatmul.bf16.gmra.mxu0 %v68
  %v88 = vpop.f32.mrf.mxu0
  %v89 = vadd.f32 0.0, %v88
  %v90 = vpop.f32.mrf.mxu0
  %v91 = vadd.f32 0.0, %v90
  %92 = vmatmul.bf16.gmra.mxu0 %v71
  %v93 = vpop.f32.mrf.mxu0
  %v94 = vadd.f32 0.0, %v93
  %v95 = vpop.f32.mrf.mxu0
  %v96 = vadd.f32 0.0, %v95
  %97 = vmatmul.bf16.gmra.mxu0 %v74
  %v98 = vpop.f32.mrf.mxu0
  %v99 = vadd.f32 0.0, %v98
  %v100 = vpop.f32.mrf.mxu0
  %v101 = vadd.f32 0.0, %v100
  %102 = vmatmul.bf16.gmra.mxu0 %v77
  %v103 = vpop.f32.mrf.mxu0
  %v104 = vadd.f32 0.0, %v103
  %v105 = vpop.f32.mrf.mxu0
  %v106 = vadd.f32 0.0, %v105
  %107 = vdwg.mxu0
  %v108 = vadd.f32 %v28, %v89
  %v109 = vadd.f32 %v29, %v91
  %v110 = vadd.f32 %v30, %v94
  %v111 = vadd.f32 %v31, %v96
  %v112 = vadd.f32 %v32, %v99
  %v113 = vadd.f32 %v33, %v101
  %v114 = vadd.f32 %v34, %v104
  %v115 = vadd.f32 %v35, %v106
  %vm116 = vcmask 261120
  %117 = vst.msk [vmem:[#allocation2] sm:$0xff] %vm116, %v108
  %118 = vst.msk [vmem:[#allocation2 + $0x8] sm:$0xff] %vm116, %v109
  %119 = vst.msk [vmem:[#allocation2 + $0x10] sm:$0xff] %vm116, %v110
  %120 = vst.msk [vmem:[#allocation2 + $0x18] sm:$0xff] %vm116, %v111
  %121 = vst.msk [vmem:[#allocation2 + $0x20] sm:$0xff] %vm116, %v112
  %122 = vst.msk [vmem:[#allocation2 + $0x28] sm:$0xff] %vm116, %v113
  %123 = vst.msk [vmem:[#allocation2 + $0x30] sm:$0xff] %vm116, %v114
  %124 = vst.msk [vmem:[#allocation2 + $0x38] sm:$0xff] %vm116, %v115
  // Predicated region
  $region18: #{whisper_encoder_feats.18} parent=0 // pred_check
    %p125 = pneg %p15
  $region19: #{whisper_encoder_feats.18} parent=0 // pred_check_branch
    %127 = sbr.rel (%p125) target = $region21
  $region20: #{whisper_encoder_feats.18} parent=0 // pred_region
    %v128 = vld [vmem:[#allocation2] sm:$0xff]
    %v129 = vld [vmem:[#allocation2 + $0x8] sm:$0xff]
    %v130 = vld [vmem:[#allocation2 + $0x10] sm:$0xff]
    %v131 = vld [vmem:[#allocation2 + $0x18] sm:$0xff]
    %v132 = vld [vmem:[#allocation2 + $0x20] sm:$0xff]
    %v133 = vld [vmem:[#allocation2 + $0x28] sm:$0xff]
    %v134 = vld [vmem:[#allocation2 + $0x30] sm:$0xff]
    %v135 = vld [vmem:[#allocation2 + $0x38] sm:$0xff]
    %v136 = vld [vmem:[%s2] sm:$0x1]
    %v138 = vperm.slane %v136, 0
    %v140 = vadd.f32 %v128, %v138
    %v141 = vadd.f32 %v129, %v138
    %v142 = vadd.f32 %v130, %v138
    %v143 = vadd.f32 %v131, %v138
    %v144 = vadd.f32 %v132, %v138
    %v145 = vadd.f32 %v133, %v138
    %v146 = vadd.f32 %v134, %v138
    %v147 = vadd.f32 %v135, %v138
    %v148 = vmul.f32 %v140, 0.5
    %v149 = vmul.f32 %v141, 0.5
    %v150 = vmul.f32 %v142, 0.5
    %v151 = vmul.f32 %v143, 0.5
    %v152 = vmul.f32 %v144, 0.5
    %v153 = vmul.f32 %v145, 0.5
    %v154 = vmul.f32 %v146, 0.5
    %v155 = vmul.f32 %v147, 0.5
    %v156 = vmul.f32 %v140, 0.70710677
    %v157 = vmul.f32 %v141, 0.70710677
    %v158 = vmul.f32 %v142, 0.70710677
    %v159 = vmul.f32 %v143, 0.70710677
    %v160 = vmul.f32 %v144, 0.70710677
    %v161 = vmul.f32 %v145, 0.70710677
    %v162 = vmul.f32 %v146, 0.70710677
    %v163 = vmul.f32 %v147, 0.70710677
    %v164 = vmul.f32 %v156, %v156
    %v165 = vmin.f32 16.0, %v164
    %v166 = vmul.f32 %v165, 2.1237322e-06
    %v167 = vadd.f32 %v166, 0.00028619796
    %v168 = vmul.f32 %v165, %v167
    %v169 = vadd.f32 %v168, 0.0036580483
    %v170 = vmul.f32 %v165, %v169
    %v171 = vadd.f32 %v170, 0.05243302
    %v172 = vmul.f32 %v165, %v171
    %v173 = vadd.f32 %v172, 0.18741608
    %v174 = vmul.f32 %v165, %v173
    %v175 = vadd.f32 %v174, 1.1283791
    %v176 = vmul.f32 %v156, %v175
    %v177 = vmul.f32 %v165, 3.8918573e-05
    %v178 = vadd.f32 %v177, 0.001143296
    %v179 = vmul.f32 %v165, %v178
    %v180 = vadd.f32 %v179, 0.014752088
    %v181 = vmul.f32 %v165, %v180
    %v182 = vadd.f32 %v181, 0.112945676
    %v183 = vmul.f32 %v165, %v182
    %v184 = vadd.f32 %v183, 0.4994258
    %v185 = vmul.f32 %v165, %v184
    %v186 = vadd.f32 %v185, 1.0
    %v187 = vrcp.pop %v186
    %v188 = vmul.f32 %v186, %v187
    %v189 = vsub.f32 1.0, %v188
    %v190 = vmul.f32 %v187, %v189
    %v191 = vadd.f32 %v187, %v190
    %vm192 = vweird.f32 %v186
    %vm193 = vweird.f32 %v187
    %vm194 = vmor %vm192, %vm193
    %v195 = vsel %vm194, %v187, %v191
    %v196 = vand.u32 2147483647, %v186
    %vm197 = vcmp.eq.f32.partialorder %v196, 8.507059e+37
    %v198 = vand.u32 %v186, 2147483648
    %v199 = vor.u32 1.1754944e-38, %v198
    %v200 = vsel %vm197, %v199, %v195
    %v201 = vmul.f32 %v176, %v200
    %v202 = vmin.f32 %v201, 1.0
    %v203 = vmax.f32 %v202, -1.0
    %v204 = vmul.f32 %v157, %v157
    %v205 = vmin.f32 16.0, %v204
    %v206 = vmul.f32 %v205, 2.1237322e-06
    %v207 = vadd.f32 %v206, 0.00028619796
    %v208 = vmul.f32 %v205, %v207
    %v209 = vadd.f32 %v208, 0.0036580483
    %v210 = vmul.f32 %v205, %v209
    %v211 = vadd.f32 %v210, 0.05243302
    %v212 = vmul.f32 %v205, %v211
    %v213 = vadd.f32 %v212, 0.18741608
    %v214 = vmul.f32 %v205, %v213
    %v215 = vadd.f32 %v214, 1.1283791
    %v216 = vmul.f32 %v157, %v215
    %v217 = vmul.f32 %v205, 3.8918573e-05
    %v218 = vadd.f32 %v217, 0.001143296
    %v219 = vmul.f32 %v205, %v218
    %v220 = vadd.f32 %v219, 0.014752088
    %v221 = vmul.f32 %v205, %v220
    %v222 = vadd.f32 %v221, 0.112945676
    %v223 = vmul.f32 %v205, %v222
    %v224 = vadd.f32 %v223, 0.4994258
    %v225 = vmul.f32 %v205, %v224
    %v226 = vadd.f32 %v225, 1.0
    %v227 = vrcp.pop %v226
    %v228 = vmul.f32 %v226, %v227
    %v229 = vsub.f32 1.0, %v228
    %v230 = vmul.f32 %v227, %v229
    %v231 = vadd.f32 %v227, %v230
    %vm232 = vweird.f32 %v226
    %vm233 = vweird.f32 %v227
    %vm234 = vmor %vm232, %vm233
    %v235 = vsel %vm234, %v227, %v231
    %v236 = vand.u32 2147483647, %v226
    %vm237 = vcmp.eq.f32.partialorder %v236, 8.507059e+37
    %v238 = vand.u32 %v226, 2147483648
    %v239 = vor.u32 1.1754944e-38, %v238
    %v240 = vsel %vm237, %v239, %v235
    %v241 = vmul.f32 %v216, %v240
    %v242 = vmin.f32 %v241, 1.0
    %v243 = vmax.f32 %v242, -1.0
    %v244 = vmul.f32 %v158, %v158
    %v245 = vmin.f32 16.0, %v244
    %v246 = vmul.f32 %v245, 2.1237322e-06
    %v247 = vadd.f32 %v246, 0.00028619796
    %v248 = vmul.f32 %v245, %v247
    %v249 = vadd.f32 %v248, 0.0036580483
    %v250 = vmul.f32 %v245, %v249
    %v251 = vadd.f32 %v250, 0.05243302
    %v252 = vmul.f32 %v245, %v251
    %v253 = vadd.f32 %v252, 0.18741608
    %v254 = vmul.f32 %v245, %v253
    %v255 = vadd.f32 %v254, 1.1283791
    %v256 = vmul.f32 %v158, %v255
    %v257 = vmul.f32 %v245, 3.8918573e-05
    %v258 = vadd.f32 %v257, 0.001143296
    %v259 = vmul.f32 %v245, %v258
    %v260 = vadd.f32 %v259, 0.014752088
    %v261 = vmul.f32 %v245, %v260
    %v262 = vadd.f32 %v261, 0.112945676
    %v263 = vmul.f32 %v245, %v262
    %v264 = vadd.f32 %v263, 0.4994258
    %v265 = vmul.f32 %v245, %v264
    %v266 = vadd.f32 %v265, 1.0
    %v267 = vrcp.pop %v266
    %v268 = vmul.f32 %v266, %v267
    %v269 = vsub.f32 1.0, %v268
    %v270 = vmul.f32 %v267, %v269
    %v271 = vadd.f32 %v267, %v270
    %vm272 = vweird.f32 %v266
    %vm273 = vweird.f32 %v267
    %vm274 = vmor %vm272, %vm273
    %v275 = vsel %vm274, %v267, %v271
    %v276 = vand.u32 2147483647, %v266
    %vm277 = vcmp.eq.f32.partialorder %v276, 8.507059e+37
    %v278 = vand.u32 %v266, 2147483648
    %v279 = vor.u32 1.1754944e-38, %v278
    %v280 = vsel %vm277, %v279, %v275
    %v281 = vmul.f32 %v256, %v280
    %v282 = vmin.f32 %v281, 1.0
    %v283 = vmax.f32 %v282, -1.0
    %v284 = vmul.f32 %v159, %v159
    %v285 = vmin.f32 16.0, %v284
    %v286 = vmul.f32 %v285, 2.1237322e-06
    %v287 = vadd.f32 %v286, 0.00028619796
    %v288 = vmul.f32 %v285, %v287
    %v289 = vadd.f32 %v288, 0.0036580483
    %v290 = vmul.f32 %v285, %v289
    %v291 = vadd.f32 %v290, 0.05243302
    %v292 = vmul.f32 %v285, %v291
    %v293 = vadd.f32 %v292, 0.18741608
    %v294 = vmul.f32 %v285, %v293
    %v295 = vadd.f32 %v294, 1.1283791
    %v296 = vmul.f32 %v159, %v295
    %v297 = vmul.f32 %v285, 3.8918573e-05
    %v298 = vadd.f32 %v297, 0.001143296
    %v299 = vmul.f32 %v285, %v298
    %v300 = vadd.f32 %v299, 0.014752088
    %v301 = vmul.f32 %v285, %v300
    %v302 = vadd.f32 %v301, 0.112945676
    %v303 = vmul.f32 %v285, %v302
    %v304 = vadd.f32 %v303, 0.4994258
    %v305 = vmul.f32 %v285, %v304
    %v306 = vadd.f32 %v305, 1.0
    %v307 = vrcp.pop %v306
    %v308 = vmul.f32 %v306, %v307
    %v309 = vsub.f32 1.0, %v308
    %v310 = vmul.f32 %v307, %v309
    %v311 = vadd.f32 %v307, %v310
    %vm312 = vweird.f32 %v306
    %vm313 = vweird.f32 %v307
    %vm314 = vmor %vm312, %vm313
    %v315 = vsel %vm314, %v307, %v311
    %v316 = vand.u32 2147483647, %v306
    %vm317 = vcmp.eq.f32.partialorder %v316, 8.507059e+37
    %v318 = vand.u32 %v306, 2147483648
    %v319 = vor.u32 1.1754944e-38, %v318
    %v320 = vsel %vm317, %v319, %v315
    %v321 = vmul.f32 %v296, %v320
    %v322 = vmin.f32 %v321, 1.0
    %v323 = vmax.f32 %v322, -1.0
    %v324 = vmul.f32 %v160, %v160
    %v325 = vmin.f32 16.0, %v324
    %v326 = vmul.f32 %v325, 2.1237322e-06
    %v327 = vadd.f32 %v326, 0.00028619796
    %v328 = vmul.f32 %v325, %v327
    %v329 = vadd.f32 %v328, 0.0036580483
    %v330 = vmul.f32 %v325, %v329
    %v331 = vadd.f32 %v330, 0.05243302
    %v332 = vmul.f32 %v325, %v331
    %v333 = vadd.f32 %v332, 0.18741608
    %v334 = vmul.f32 %v325, %v333
    %v335 = vadd.f32 %v334, 1.1283791
    %v336 = vmul.f32 %v160, %v335
    %v337 = vmul.f32 %v325, 3.8918573e-05
    %v338 = vadd.f32 %v337, 0.001143296
    %v339 = vmul.f32 %v325, %v338
    %v340 = vadd.f32 %v339, 0.014752088
    %v341 = vmul.f32 %v325, %v340
    %v342 = vadd.f32 %v341, 0.112945676
    %v343 = vmul.f32 %v325, %v342
    %v344 = vadd.f32 %v343, 0.4994258
    %v345 = vmul.f32 %v325, %v344
    %v346 = vadd.f32 %v345, 1.0
    %v347 = vrcp.pop %v346
    %v348 = vmul.f32 %v346, %v347
    %v349 = vsub.f32 1.0, %v348
    %v350 = vmul.f32 %v347, %v349
    %v351 = vadd.f32 %v347, %v350
    %vm352 = vweird.f32 %v346
    %vm353 = vweird.f32 %v347
    %vm354 = vmor %vm352, %vm353
    %v355 = vsel %vm354, %v347, %v351
    %v356 = vand.u32 2147483647, %v346
    %vm357 = vcmp.eq.f32.partialorder %v356, 8.507059e+37
    %v358 = vand.u32 %v346, 2147483648
    %v359 = vor.u32 1.1754944e-38, %v358
    %v360 = vsel %vm357, %v359, %v355
    %v361 = vmul.f32 %v336, %v360
    %v362 = vmin.f32 %v361, 1.0
    %v363 = vmax.f32 %v362, -1.0
    %v364 = vmul.f32 %v161, %v161
    %v365 = vmin.f32 16.0, %v364
    %v366 = vmul.f32 %v365, 2.1237322e-06
    %v367 = vadd.f32 %v366, 0.00028619796
    %v368 = vmul.f32 %v365, %v367
    %v369 = vadd.f32 %v368, 0.0036580483
    %v370 = vmul.f32 %v365, %v369
    %v371 = vadd.f32 %v370, 0.05243302
    %v372 = vmul.f32 %v365, %v371
    %v373 = vadd.f32 %v372, 0.18741608
    %v374 = vmul.f32 %v365, %v373
    %v375 = vadd.f32 %v374, 1.1283791
    %v376 = vmul.f32 %v161, %v375
    %v377 = vmul.f32 %v365, 3.8918573e-05
    %v378 = vadd.f32 %v377, 0.001143296
    %v379 = vmul.f32 %v365, %v378
    %v380 = vadd.f32 %v379, 0.014752088
    %v381 = vmul.f32 %v365, %v380
    %v382 = vadd.f32 %v381, 0.112945676
    %v383 = vmul.f32 %v365, %v382
    %v384 = vadd.f32 %v383, 0.4994258
    %v385 = vmul.f32 %v365, %v384
    %v386 = vadd.f32 %v385, 1.0
    %v387 = vrcp.pop %v386
    %v388 = vmul.f32 %v386, %v387
    %v389 = vsub.f32 1.0, %v388
    %v390 = vmul.f32 %v387, %v389
    %v391 = vadd.f32 %v387, %v390
    %vm392 = vweird.f32 %v386
    %vm393 = vweird.f32 %v387
    %vm394 = vmor %vm392, %vm393
    %v395 = vsel %vm394, %v387, %v391
    %v396 = vand.u32 2147483647, %v386
    %vm397 = vcmp.eq.f32.partialorder %v396, 8.507059e+37
    %v398 = vand.u32 %v386, 2147483648
    %v399 = vor.u32 1.1754944e-38, %v398
    %v400 = vsel %vm397, %v399, %v395
    %v401 = vmul.f32 %v376, %v400
    %v402 = vmin.f32 %v401, 1.0
    %v403 = vmax.f32 %v402, -1.0
    %v404 = vmul.f32 %v162, %v162
    %v405 = vmin.f32 16.0, %v404
    %v406 = vmul.f32 %v405, 2.1237322e-06
    %v407 = vadd.f32 %v406, 0.00028619796
    %v408 = vmul.f32 %v405, %v407
    %v409 = vadd.f32 %v408, 0.0036580483
    %v410 = vmul.f32 %v405, %v409
    %v411 = vadd.f32 %v410, 0.05243302
    %v412 = vmul.f32 %v405, %v411
    %v413 = vadd.f32 %v412, 0.18741608
    %v414 = vmul.f32 %v405, %v413
    %v415 = vadd.f32 %v414, 1.1283791
    %v416 = vmul.f32 %v162, %v415
    %v417 = vmul.f32 %v405, 3.8918573e-05
    %v418 = vadd.f32 %v417, 0.001143296
    %v419 = vmul.f32 %v405, %v418
    %v420 = vadd.f32 %v419, 0.014752088
    %v421 = vmul.f32 %v405, %v420
    %v422 = vadd.f32 %v421, 0.112945676
    %v423 = vmul.f32 %v405, %v422
    %v424 = vadd.f32 %v423, 0.4994258
    %v425 = vmul.f32 %v405, %v424
    %v426 = vadd.f32 %v425, 1.0
    %v427 = vrcp.pop %v426
    %v428 = vmul.f32 %v426, %v427
    %v429 = vsub.f32 1.0, %v428
    %v430 = vmul.f32 %v427, %v429
    %v431 = vadd.f32 %v427, %v430
    %vm432 = vweird.f32 %v426
    %vm433 = vweird.f32 %v427
    %vm434 = vmor %vm432, %vm433
    %v435 = vsel %vm434, %v427, %v431
    %v436 = vand.u32 2147483647, %v426
    %vm437 = vcmp.eq.f32.partialorder %v436, 8.507059e+37
    %v438 = vand.u32 %v426, 2147483648
    %v439 = vor.u32 1.1754944e-38, %v438
    %v440 = vsel %vm437, %v439, %v435
    %v441 = vmul.f32 %v416, %v440
    %v442 = vmin.f32 %v441, 1.0
    %v443 = vmax.f32 %v442, -1.0
    %v444 = vmul.f32 %v163, %v163
    %v445 = vmin.f32 16.0, %v444
    %v446 = vmul.f32 %v445, 2.1237322e-06
    %v447 = vadd.f32 %v446, 0.00028619796
    %v448 = vmul.f32 %v445, %v447
    %v449 = vadd.f32 %v448, 0.0036580483
    %v450 = vmul.f32 %v445, %v449
    %v451 = vadd.f32 %v450, 0.05243302
    %v452 = vmul.f32 %v445, %v451
    %v453 = vadd.f32 %v452, 0.18741608
    %v454 = vmul.f32 %v445, %v453
    %v455 = vadd.f32 %v454, 1.1283791
    %v456 = vmul.f32 %v163, %v455
    %v457 = vmul.f32 %v445, 3.8918573e-05
    %v458 = vadd.f32 %v457, 0.001143296
    %v459 = vmul.f32 %v445, %v458
    %v460 = vadd.f32 %v459, 0.014752088
    %v461 = vmul.f32 %v445, %v460
    %v462 = vadd.f32 %v461, 0.112945676
    %v463 = vmul.f32 %v445, %v462
    %v464 = vadd.f32 %v463, 0.4994258
    %v465 = vmul.f32 %v445, %v464
    %v466 = vadd.f32 %v465, 1.0
    %v467 = vrcp.pop %v466
    %v468 = vmul.f32 %v466, %v467
    %v469 = vsub.f32 1.0, %v468
    %v470 = vmul.f32 %v467, %v469
    %v471 = vadd.f32 %v467, %v470
    %vm472 = vweird.f32 %v466
    %vm473 = vweird.f32 %v467
    %vm474 = vmor %vm472, %vm473
    %v475 = vsel %vm474, %v467, %v471
    %v476 = vand.u32 2147483647, %v466
    %vm477 = vcmp.eq.f32.partialorder %v476, 8.507059e+37
    %v478 = vand.u32 %v466, 2147483648
    %v479 = vor.u32 1.1754944e-38, %v478
    %v480 = vsel %vm477, %v479, %v475
    %v481 = vmul.f32 %v456, %v480
    %v482 = vmin.f32 %v481, 1.0
    %v483 = vmax.f32 %v482, -1.0
    %v484 = vadd.f32 %v203, 1.0
    %v485 = vadd.f32 %v243, 1.0
    %v486 = vadd.f32 %v283, 1.0
    %v487 = vadd.f32 %v323, 1.0
    %v488 = vadd.f32 %v363, 1.0
    %v489 = vadd.f32 %v403, 1.0
    %v490 = vadd.f32 %v443, 1.0
    %v491 = vadd.f32 %v483, 1.0
    %v492 = vmul.f32 %v148, %v484
    %v493 = vmul.f32 %v149, %v485
    %v494 = vmul.f32 %v150, %v486
    %v495 = vmul.f32 %v151, %v487
    %v496 = vmul.f32 %v152, %v488
    %v497 = vmul.f32 %v153, %v489
    %v498 = vmul.f32 %v154, %v490
    %v499 = vmul.f32 %v155, %v491
    %500 = vst.msk [vmem:[%s3] sm:$0xff] %vm116, %v492
    %501 = vst.msk [vmem:[%s3 + $0x8] sm:$0xff] %vm116, %v493
    %502 = vst.msk [vmem:[%s3 + $0x10] sm:$0xff] %vm116, %v494
    %503 = vst.msk [vmem:[%s3 + $0x18] sm:$0xff] %vm116, %v495
    %504 = vst.msk [vmem:[%s3 + $0x20] sm:$0xff] %vm116, %v496
    %505 = vst.msk [vmem:[%s3 + $0x28] sm:$0xff] %vm116, %v497
    %506 = vst.msk [vmem:[%s3 + $0x30] sm:$0xff] %vm116, %v498
    %507 = vst.msk [vmem:[%s3 + $0x38] sm:$0xff] %vm116, %v499
  $region21: #{whisper_encoder_feats.18} parent=0 // pred_fallthru
    _
  // Predicated region
  $region22: #{whisper_encoder_feats.18} parent=0 // pred_check
    _
  $region23: #{whisper_encoder_feats.18} parent=0 // pred_check_branch
    %509 = sbr.rel (0) target = $region25
  $region24: #{whisper_encoder_feats.18} parent=0 // pred_region
    _
  $region25: #{whisper_encoder_feats.18} parent=0 // pred_fallthru
    _
  // Predicated region
  $region26: #{whisper_encoder_feats.18} parent=0 // pred_check
    _
  $region27: #{whisper_encoder_feats.18} parent=0 // pred_check_branch
    %511 = sbr.rel (0) target = $region29
  $region28: #{whisper_encoder_feats.18} parent=0 // pred_region
    _
  $region29: #{whisper_encoder_feats.18} parent=0 // pred_fallthru
    _

// kernel: whisper_encoder_feats.19
$region0: #{whisper_encoder_feats.19}
  #allocation0 [shape = 'u32[]', space=smem, size = 0x4, offset = 0x4, fixed_abs, tag = 'smem constant byte address 0x4 - core index']
  #allocation1 [shape = 'u32[72,128]{1,0:T(1,128)}', space=vmem, size = 0x9000, scoped, tag = 'internal scratch']
  %s0 = inlined_call_operand.vmem [shape: f32[64,32], index: 0, kind: input, shape index: {}]
  %s1 = inlined_call_operand.vmem [shape: f32[1,32], index: 1, kind: input, shape index: {}]
  %s2 = inlined_call_operand.vmem [shape: f32[1,32], index: 2, kind: input, shape index: {}]
  %s3 = inlined_call_operand.vmem [shape: f32[64,32], index: 3, kind: output, shape index: {}]
  %s4 = sld [smem:[#allocation0]]
  $region22: #{whisper_encoder_feats.19} parent=0
    _
  %s6 = ssub.s32 1, %s4
  %s7 = scalar_select 0, %s6, %s4
  // Predicated region
  $region2: #{whisper_encoder_feats.19} parent=0 // pred_check
    _
  $region3: #{whisper_encoder_feats.19} parent=0 // pred_check_branch
    %9 = sbr.rel (0) target = $region5
  $region4: #{whisper_encoder_feats.19} parent=0 // pred_region
    _
  $region5: #{whisper_encoder_feats.19} parent=0 // pred_fallthru
    _
  // Predicated region
  $region6: #{whisper_encoder_feats.19} parent=0 // pred_check
    _
  $region7: #{whisper_encoder_feats.19} parent=0 // pred_check_branch
    %11 = sbr.rel (0) target = $region9
  $region8: #{whisper_encoder_feats.19} parent=0 // pred_region
    _
  $region9: #{whisper_encoder_feats.19} parent=0 // pred_fallthru
    _
  // Predicated region
  $region10: #{whisper_encoder_feats.19} parent=0 // pred_check
    _
  $region11: #{whisper_encoder_feats.19} parent=0 // pred_check_branch
    %13 = sbr.rel (0) target = $region13
  $region12: #{whisper_encoder_feats.19} parent=0 // pred_region
    _
  $region13: #{whisper_encoder_feats.19} parent=0 // pred_fallthru
    _
  %v14 = vld [vmem:[%s0] sm:$0xff]
  %v15 = vld [vmem:[%s0 + $0x8] sm:$0xff]
  %v16 = vld [vmem:[%s0 + $0x10] sm:$0xff]
  %v17 = vld [vmem:[%s0 + $0x18] sm:$0xff]
  %v18 = vld [vmem:[%s0 + $0x20] sm:$0xff]
  %v19 = vld [vmem:[%s0 + $0x28] sm:$0xff]
  %v20 = vld [vmem:[%s0 + $0x30] sm:$0xff]
  %v21 = vld [vmem:[%s0 + $0x38] sm:$0xff]
  %vm22 = vcmask 261120
  %v23 = vsel %vm22, %v14, 0.0
  %24 = vadd.xlane.f32.xlu0 %v23
  %v25 = vpop.xlane.xlu0 %24
  %v26 = vsel %vm22, %v15, 0.0
  %27 = vadd.xlane.f32.xlu0 %v26
  %v28 = vpop.xlane.xlu0 %27
  %v29 = vsel %vm22, %v16, 0.0
  %30 = vadd.xlane.f32.xlu0 %v29
  %v31 = vpop.xlane.xlu0 %30
  %v32 = vsel %vm22, %v17, 0.0
  %33 = vadd.xlane.f32.xlu0 %v32
  %v34 = vpop.xlane.xlu0 %33
  %v35 = vsel %vm22, %v18, 0.0
  %36 = vadd.xlane.f32.xlu0 %v35
  %v37 = vpop.xlane.xlu0 %36
  %v38 = vsel %vm22, %v19, 0.0
  %39 = vadd.xlane.f32.xlu0 %v38
  %v40 = vpop.xlane.xlu0 %39
  %v41 = vsel %vm22, %v20, 0.0
  %42 = vadd.xlane.f32.xlu0 %v41
  %v43 = vpop.xlane.xlu0 %42
  %v44 = vsel %vm22, %v21, 0.0
  %45 = vadd.xlane.f32.xlu0 %v44
  %v46 = vpop.xlane.xlu0 %45
  %v47 = vrcp.pop 32.0
  %v48 = vmul.f32 32.0, %v47
  %v49 = vsub.f32 1.0, %v48
  %v50 = vmul.f32 %v47, %v49
  %v51 = vadd.f32 %v47, %v50
  %vm52 = vweird.f32 %v47
  %v53 = vsel %vm52, %v47, %v51
  %v54 = vmul.f32 %v25, %v53
  %v55 = vmul.f32 %v28, %v53
  %v56 = vmul.f32 %v31, %v53
  %v57 = vmul.f32 %v34, %v53
  %v58 = vmul.f32 %v37, %v53
  %v59 = vmul.f32 %v40, %v53
  %v60 = vmul.f32 %v43, %v53
  %v61 = vmul.f32 %v46, %v53
  %v62 = vsub.f32 %v14, %v54
  %v63 = vsub.f32 %v15, %v55
  %v64 = vsub.f32 %v16, %v56
  %v65 = vsub.f32 %v17, %v57
  %v66 = vsub.f32 %v18, %v58
  %v67 = vsub.f32 %v19, %v59
  %v68 = vsub.f32 %v20, %v60
  %v69 = vsub.f32 %v21, %v61
  %v70 = vmul.f32 %v62, %v62
  %v71 = vmul.f32 %v63, %v63
  %v72 = vmul.f32 %v64, %v64
  %v73 = vmul.f32 %v65, %v65
  %v74 = vmul.f32 %v66, %v66
  %v75 = vmul.f32 %v67, %v67
  %v76 = vmul.f32 %v68, %v68
  %v77 = vmul.f32 %v69, %v69
  %v78 = vsel %vm22, %v70, 0.0
  %79 = vadd.xlane.f32.xlu0 %v78
  %v80 = vpop.xlane.xlu0 %79
  %v81 = vsel %vm22, %v71, 0.0
  %82 = vadd.xlane.f32.xlu0 %v81
  %v83 = vpop.xlane.xlu0 %82
  %v84 = vsel %vm22, %v72, 0.0
  %85 = vadd.xlane.f32.xlu0 %v84
  %v86 = vpop.xlane.xlu0 %85
  %v87 = vsel %vm22, %v73, 0.0
  %88 = vadd.xlane.f32.xlu0 %v87
  %v89 = vpop.xlane.xlu0 %88
  %v90 = vsel %vm22, %v74, 0.0
  %91 = vadd.xlane.f32.xlu0 %v90
  %v92 = vpop.xlane.xlu0 %91
  %v93 = vsel %vm22, %v75, 0.0
  %94 = vadd.xlane.f32.xlu0 %v93
  %v95 = vpop.xlane.xlu0 %94
  %v96 = vsel %vm22, %v76, 0.0
  %97 = vadd.xlane.f32.xlu0 %v96
  %v98 = vpop.xlane.xlu0 %97
  %v99 = vsel %vm22, %v77, 0.0
  %100 = vadd.xlane.f32.xlu0 %v99
  %v101 = vpop.xlane.xlu0 %100
  %v102 = vmul.f32 %v80, %v53
  %v103 = vmul.f32 %v83, %v53
  %v104 = vmul.f32 %v86, %v53
  %v105 = vmul.f32 %v89, %v53
  %v106 = vmul.f32 %v92, %v53
  %v107 = vmul.f32 %v95, %v53
  %v108 = vmul.f32 %v98, %v53
  %v109 = vmul.f32 %v101, %v53
  %v110 = vadd.f32 %v102, 1e-05
  %v111 = vadd.f32 %v103, 1e-05
  %v112 = vadd.f32 %v104, 1e-05
  %v113 = vadd.f32 %v105, 1e-05
  %v114 = vadd.f32 %v106, 1e-05
  %v115 = vadd.f32 %v107, 1e-05
  %v116 = vadd.f32 %v108, 1e-05
  %v117 = vadd.f32 %v109, 1e-05
  %v118 = vrsqrt.pop %v110
  %v119 = vmul.f32 %v118, %v110
  %v120 = vmul.f32 %v119, %v118
  %v121 = vmul.f32 0.5, %v120
  %v122 = vsub.f32 1.5, %v121
  %v123 = vmul.f32 %v118, %v122
  %vm124 = vweird.f32 %v110
  %vm125 = vweird.f32 %v118
  %vm126 = vmor %vm124, %vm125
  %v127 = vsel %vm126, %v118, %v123
  %v128 = vrsqrt.pop %v111
  %v129 = vmul.f32 %v128, %v111
  %v130 = vmul.f32 %v129, %v128
  %v131 = vmul.f32 0.5, %v130
  %v132 = vsub.f32 1.5, %v131
  %v133 = vmul.f32 %v128, %v132
  %vm134 = vweird.f32 %v111
  %vm135 = vweird.f32 %v128
  %vm136 = vmor %vm134, %vm135
  %v137 = vsel %vm136, %v128, %v133
  %v138 = vrsqrt.pop %v112
  %v139 = vmul.f32 %v138, %v112
  %v140 = vmul.f32 %v139, %v138
  %v141 = vmul.f32 0.5, %v140
  %v142 = vsub.f32 1.5, %v141
  %v143 = vmul.f32 %v138, %v142
  %vm144 = vweird.f32 %v112
  %vm145 = vweird.f32 %v138
  %vm146 = vmor %vm144, %vm145
  %v147 = vsel %vm146, %v138, %v143
  %v148 = vrsqrt.pop %v113
  %v149 = vmul.f32 %v148, %v113
  %v150 = vmul.f32 %v149, %v148
  %v151 = vmul.f32 0.5, %v150
  %v152 = vsub.f32 1.5, %v151
  %v153 = vmul.f32 %v148, %v152
  %vm154 = vweird.f32 %v113
  %vm155 = vweird.f32 %v148
  %vm156 = vmor %vm154, %vm155
  %v157 = vsel %vm156, %v148, %v153
  %v158 = vrsqrt.pop %v114
  %v159 = vmul.f32 %v158, %v114
  %v160 = vmul.f32 %v159, %v158
  %v161 = vmul.f32 0.5, %v160
  %v162 = vsub.f32 1.5, %v161
  %v163 = vmul.f32 %v158, %v162
  %vm164 = vweird.f32 %v114
  %vm165 = vweird.f32 %v158
  %vm166 = vmor %vm164, %vm165
  %v167 = vsel %vm166, %v158, %v163
  %v168 = vrsqrt.pop %v115
  %v169 = vmul.f32 %v168, %v115
  %v170 = vmul.f32 %v169, %v168
  %v171 = vmul.f32 0.5, %v170
  %v172 = vsub.f32 1.5, %v171
  %v173 = vmul.f32 %v168, %v172
  %vm174 = vweird.f32 %v115
  %vm175 = vweird.f32 %v168
  %vm176 = vmor %vm174, %vm175
  %v177 = vsel %vm176, %v168, %v173
  %v178 = vrsqrt.pop %v116
  %v179 = vmul.f32 %v178, %v116
  %v180 = vmul.f32 %v179, %v178
  %v181 = vmul.f32 0.5, %v180
  %v182 = vsub.f32 1.5, %v181
  %v183 = vmul.f32 %v178, %v182
  %vm184 = vweird.f32 %v116
  %vm185 = vweird.f32 %v178
  %vm186 = vmor %vm184, %vm185
  %v187 = vsel %vm186, %v178, %v183
  %v188 = vrsqrt.pop %v117
  %v189 = vmul.f32 %v188, %v117
  %v190 = vmul.f32 %v189, %v188
  %v191 = vmul.f32 0.5, %v190
  %v192 = vsub.f32 1.5, %v191
  %v193 = vmul.f32 %v188, %v192
  %vm194 = vweird.f32 %v117
  %vm195 = vweird.f32 %v188
  %vm196 = vmor %vm194, %vm195
  %v197 = vsel %vm196, %v188, %v193
  %v198 = vmul.f32 %v62, %v127
  %v199 = vmul.f32 %v63, %v137
  %v200 = vmul.f32 %v64, %v147
  %v201 = vmul.f32 %v65, %v157
  %v202 = vmul.f32 %v66, %v167
  %v203 = vmul.f32 %v67, %v177
  %v204 = vmul.f32 %v68, %v187
  %v205 = vmul.f32 %v69, %v197
  %v206 = vld [vmem:[%s1] sm:$0x1]
  %v208 = vperm.slane %v206, 0
  %v210 = vmul.f32 %v198, %v208
  %v211 = vmul.f32 %v199, %v208
  %v212 = vmul.f32 %v200, %v208
  %v213 = vmul.f32 %v201, %v208
  %v214 = vmul.f32 %v202, %v208
  %v215 = vmul.f32 %v203, %v208
  %v216 = vmul.f32 %v204, %v208
  %v217 = vmul.f32 %v205, %v208
  %v218 = vld [vmem:[%s2] sm:$0x1]
  %v220 = vperm.slane %v218, 0
  %v222 = vadd.f32 %v210, %v220
  %v223 = vadd.f32 %v211, %v220
  %v224 = vadd.f32 %v212, %v220
  %v225 = vadd.f32 %v213, %v220
  %v226 = vadd.f32 %v214, %v220
  %v227 = vadd.f32 %v215, %v220
  %v228 = vadd.f32 %v216, %v220
  %v229 = vadd.f32 %v217, %v220
  %230 = vst.msk [vmem:[%s3] sm:$0xff] %vm22, %v222
  %231 = vst.msk [vmem:[%s3 + $0x8] sm:$0xff] %vm22, %v223
  %232 = vst.msk [vmem:[%s3 + $0x10] sm:$0xff] %vm22, %v224
  %233 = vst.msk [vmem:[%s3 + $0x18] sm:$0xff] %vm22, %v225
  %234 = vst.msk [vmem:[%s3 + $0x20] sm:$0xff] %vm22, %v226
  %235 = vst.msk [vmem:[%s3 + $0x28] sm:$0xff] %vm22, %v227
  %236 = vst.msk [vmem:[%s3 + $0x30] sm:$0xff] %vm22, %v228
  %237 = vst.msk [vmem:[%s3 + $0x38] sm:$0xff] %vm22, %v229
  // Predicated region
  $region14: #{whisper_encoder_feats.19} parent=0 // pred_check
    _
  $region15: #{whisper_encoder_feats.19} parent=0 // pred_check_branch
    %239 = sbr.rel (0) target = $region17
  $region16: #{whisper_encoder_feats.19} parent=0 // pred_region
    _
  $region17: #{whisper_encoder_feats.19} parent=0 // pred_fallthru
    _
  // Predicated region
  $region18: #{whisper_encoder_feats.19} parent=0 // pred_check
    _
  $region19: #{whisper_encoder_feats.19} parent=0 // pred_check_branch
    %241 = sbr.rel (0) target = $region21
  $region20: #{whisper_encoder_feats.19} parent=0 // pred_region
    _
  $region21: #{whisper_encoder_feats.19} parent=0 // pred_fallthru
    _

// kernel: whisper_encoder_feats.20
$region0: #{whisper_encoder_feats.20}
  #allocation0 [shape = 'u32[]', space=smem, size = 0x4, offset = 0x4, fixed_abs, tag = 'smem constant byte address 0x4 - core index']
  #allocation1 [shape = 'u32[72,128]{1,0:T(1,128)}', space=vmem, size = 0x9000, scoped, tag = 'internal scratch']
  #allocation2 [shape = 'f32[64,96]{1,0:T(8,128)}', space=vmem, size = 0x8000, scoped, tag = 'scratch operand']
  %s0 = inlined_call_operand.vmem [shape: f32[64,32], index: 0, kind: input, shape index: {}]
  %s1 = inlined_call_operand.vmem [shape: f32[32,96], index: 1, kind: input, shape index: {}]
  %s2 = inlined_call_operand.vmem [shape: f32[1,96], index: 2, kind: input, shape index: {}]
  %s3 = inlined_call_operand.vmem [shape: f32[64,96], index: 3, kind: output, shape index: {}]
  %s4 = sld [smem:[#allocation0]]
  $region30: #{whisper_encoder_feats.20} parent=0
    _
  %s6 = ssub.s32 1, %s4
  %s7 = scalar_select 0, %s6, %s4
  // Predicated region
  $region2: #{whisper_encoder_feats.20} parent=0 // pred_check
    _
  $region3: #{whisper_encoder_feats.20} parent=0 // pred_check_branch
    %9 = sbr.rel (0) target = $region5
  $region4: #{whisper_encoder_feats.20} parent=0 // pred_region
    _
  $region5: #{whisper_encoder_feats.20} parent=0 // pred_fallthru
    _
  // Predicated region
  $region6: #{whisper_encoder_feats.20} parent=0 // pred_check
    _
  $region7: #{whisper_encoder_feats.20} parent=0 // pred_check_branch
    %11 = sbr.rel (0) target = $region9
  $region8: #{whisper_encoder_feats.20} parent=0 // pred_region
    _
  $region9: #{whisper_encoder_feats.20} parent=0 // pred_fallthru
    _
  // Predicated region
  $region10: #{whisper_encoder_feats.20} parent=0 // pred_check
    _
  $region11: #{whisper_encoder_feats.20} parent=0 // pred_check_branch
    %13 = sbr.rel (0) target = $region13
  $region12: #{whisper_encoder_feats.20} parent=0 // pred_region
    _
  $region13: #{whisper_encoder_feats.20} parent=0 // pred_fallthru
    _
  %p15 = scmp.eq.s32.totalorder 0, 0
  // Predicated region
  $region14: #{whisper_encoder_feats.20} parent=0 // pred_check
    %p16 = pneg %p15
  $region15: #{whisper_encoder_feats.20} parent=0 // pred_check_branch
    %18 = sbr.rel (%p16) target = $region17
  $region16: #{whisper_encoder_feats.20} parent=0 // pred_region
    %vm19 = vcmask 785408
    %20 = vst.msk [vmem:[#allocation2] sm:$0xff] %vm19, 0.0
    %21 = vst.msk [vmem:[#allocation2 + $0x8] sm:$0xff] %vm19, 0.0
    %22 = vst.msk [vmem:[#allocation2 + $0x10] sm:$0xff] %vm19, 0.0
    %23 = vst.msk [vmem:[#allocation2 + $0x18] sm:$0xff] %vm19, 0.0
    %24 = vst.msk [vmem:[#allocation2 + $0x20] sm:$0xff] %vm19, 0.0
    %25 = vst.msk [vmem:[#allocation2 + $0x28] sm:$0xff] %vm19, 0.0
    %26 = vst.msk [vmem:[#allocation2 + $0x30] sm:$0xff] %vm19, 0.0
    %27 = vst.msk [vmem:[#allocation2 + $0x38] sm:$0xff] %vm19, 0.0
  $region17: #{whisper_encoder_feats.20} parent=0 // pred_fallthru
    _
  %v28 = vld [vmem:[#allocation2] sm:$0xff]
  %v29 = vld [vmem:[#allocation2 + $0x8] sm:$0xff]
  %v30 = vld [vmem:[#allocation2 + $0x10] sm:$0xff]
  %v31 = vld [vmem:[#allocation2 + $0x18] sm:$0xff]
  %v32 = vld [vmem:[#allocation2 + $0x20] sm:$0xff]
  %v33 = vld [vmem:[#allocation2 + $0x28] sm:$0xff]
  %v34 = vld [vmem:[#allocation2 + $0x30] sm:$0xff]
  %v35 = vld [vmem:[#allocation2 + $0x38] sm:$0xff]
  %v36 = vld [vmem:[%s0] sm:$0xff]
  %v37 = vld [vmem:[%s0 + $0x8] sm:$0xff]
  %v38 = vld [vmem:[%s0 + $0x10] sm:$0xff]
  %v39 = vld [vmem:[%s0 + $0x18] sm:$0xff]
  %v40 = vld [vmem:[%s0 + $0x20] sm:$0xff]
  %v41 = vld [vmem:[%s0 + $0x28] sm:$0xff]
  %v42 = vld [vmem:[%s0 + $0x30] sm:$0xff]
  %v43 = vld [vmem:[%s0 + $0x38] sm:$0xff]
  %v44 = vpack.c.bf16 %v37, %v36
  %v45 = vpack.c.bf16 %v39, %v38
  %v46 = vpack.c.bf16 %v41, %v40
  %v47 = vpack.c.bf16 %v43, %v42
  %v48 = vld [vmem:[%s1] sm:$0xff]
  %v49 = vld [vmem:[%s1 + $0x8] sm:$0xff]
  %v50 = vld [vmem:[%s1 + $0x10] sm:$0xff]
  %v51 = vld [vmem:[%s1 + $0x18] sm:$0xff]
  %v52 = vpack.c.bf16 %v49, %v48
  %v53 = vpack.c.bf16 %v51, %v50
  %vm54 = vcmask 261120
  %v56 = vsel %vm54, %v44, 0
  %v59 = vsel %vm54, %v45, 0
  %v62 = vsel %vm54, %v46, 0
  %v65 = vsel %vm54, %v47, 0
  %67 = vmatpush.bf16.msra.mxu0 0
  %68 = vmatpush.bf16.msra.mxu0 0
  %69 = vmatpush.bf16.msra.mxu0 0
  %70 = vmatpush.bf16.msra.mxu0 0
  %71 = vmatpush.bf16.msra.mxu0 0
  %72 = vmatpush.bf16.msra.mxu0 0
  %73 = vmatpush.bf16.msra.mxu0 %v53
  %74 = vmatpush.bf16.msra.mxu0 %v52
  %75 = vmatmul.bf16.gmra.mxu0 %v56
  %v76 = vpop.f32.mrf.mxu0
  %v77 = vadd.f32 0.0, %v76
  %v78 = vpop.f32.mrf.mxu0
  %v79 = vadd.f32 0.0, %v78
  %80 = vmatmul.bf16.gmra.mxu0 %v59
  %v81 = vpop.f32.mrf.mxu0
  %v82 = vadd.f32 0.0, %v81
  %v83 = vpop.f32.mrf.mxu0
  %v84 = vadd.f32 0.0, %v83
  %85 = vmatmul.bf16.gmra.mxu0 %v62
  %v86 = vpop.f32.mrf.mxu0
  %v87 = vadd.f32 0.0, %v86
  %v88 = vpop.f32.mrf.mxu0
  %v89 = vadd.f32 0.0, %v88
  %90 = vmatmul.bf16.gmra.mxu0 %v65
  %v91 = vpop.f32.mrf.mxu0
  %v92 = vadd.f32 0.0, %v91
  %v93 = vpop.f32.mrf.mxu0
  %v94 = vadd.f32 0.0, %v93
  %95 = vdwg.mxu0
  %v96 = vadd.f32 %v28, %v77
  %v97 = vadd.f32 %v29, %v79
  %v98 = vadd.f32 %v30, %v82
  %v99 = vadd.f32 %v31, %v84
  %v100 = vadd.f32 %v32, %v87
  %v101 = vadd.f32 %v33, %v89
  %v102 = vadd.f32 %v34, %v92
  %v103 = vadd.f32 %v35, %v94
  %vm104 = vcmask 785408
  %105 = vst.msk [vmem:[#allocation2] sm:$0xff] %vm104, %v96
  %106 = vst.msk [vmem:[#allocation2 + $0x8] sm:$0xff] %vm104, %v97
  %107 = vst.msk [vmem:[#allocation2 + $0x10] sm:$0xff] %vm104, %v98
  %108 = vst.msk [vmem:[#allocation2 + $0x18] sm:$0xff] %vm104, %v99
  %109 = vst.msk [vmem:[#allocation2 + $0x20] sm:$0xff] %vm104, %v100
  %110 = vst.msk [vmem:[#allocation2 + $0x28] sm:$0xff] %vm104, %v101
  %111 = vst.msk [vmem:[#allocation2 + $0x30] sm:$0xff] %vm104, %v102
  %112 = vst.msk [vmem:[#allocation2 + $0x38] sm:$0xff] %vm104, %v103
  // Predicated region
  $region18: #{whisper_encoder_feats.20} parent=0 // pred_check
    %p113 = pneg %p15
  $region19: #{whisper_encoder_feats.20} parent=0 // pred_check_branch
    %115 = sbr.rel (%p113) target = $region21
  $region20: #{whisper_encoder_feats.20} parent=0 // pred_region
    %v116 = vld [vmem:[#allocation2] sm:$0xff]
    %v117 = vld [vmem:[#allocation2 + $0x8] sm:$0xff]
    %v118 = vld [vmem:[#allocation2 + $0x10] sm:$0xff]
    %v119 = vld [vmem:[#allocation2 + $0x18] sm:$0xff]
    %v120 = vld [vmem:[#allocation2 + $0x20] sm:$0xff]
    %v121 = vld [vmem:[#allocation2 + $0x28] sm:$0xff]
    %v122 = vld [vmem:[#allocation2 + $0x30] sm:$0xff]
    %v123 = vld [vmem:[#allocation2 + $0x38] sm:$0xff]
    %v124 = vld [vmem:[%s2] sm:$0x1]
    %v126 = vperm.slane %v124, 0
    %v128 = vadd.f32 %v116, %v126
    %v129 = vadd.f32 %v117, %v126
    %v130 = vadd.f32 %v118, %v126
    %v131 = vadd.f32 %v119, %v126
    %v132 = vadd.f32 %v120, %v126
    %v133 = vadd.f32 %v121, %v126
    %v134 = vadd.f32 %v122, %v126
    %v135 = vadd.f32 %v123, %v126
    %136 = vst.msk [vmem:[%s3] sm:$0xff] %vm104, %v128
    %137 = vst.msk [vmem:[%s3 + $0x8] sm:$0xff] %vm104, %v129
    %138 = vst.msk [vmem:[%s3 + $0x10] sm:$0xff] %vm104, %v130
    %139 = vst.msk [vmem:[%s3 + $0x18] sm:$0xff] %vm104, %v131
    %140 = vst.msk [vmem:[%s3 + $0x20] sm:$0xff] %vm104, %v132
    %141 = vst.msk [vmem:[%s3 + $0x28] sm:$0xff] %vm104, %v133
    %142 = vst.msk [vmem:[%s3 + $0x30] sm:$0xff] %vm104, %v134
    %143 = vst.msk [vmem:[%s3 + $0x38] sm:$0xff] %vm104, %v135
  $region21: #{whisper_encoder_feats.20} parent=0 // pred_fallthru
    _
  // Predicated region
  $region22: #{whisper_encoder_feats.20} parent=0 // pred_check
    _
  $region23: #{whisper_encoder_feats.20} parent=0 // pred_check_branch
    %145 = sbr.rel (0) target = $region25
  $region24: #{whisper_encoder_feats.20} parent=0 // pred_region
    _
  $region25: #{whisper_encoder_feats.20} parent=0 // pred_fallthru
    _
  // Predicated region
  $region26: #{whisper_encoder_feats.20} parent=0 // pred_check
    _
  $region27: #{whisper_encoder_feats.20} parent=0 // pred_check_branch
    %147 = sbr.rel (0) target = $region29
  $region28: #{whisper_encoder_feats.20} parent=0 // pred_region
    _
  $region29: #{whisper_encoder_feats.20} parent=0 // pred_fallthru
    _

// kernel: whisper_encoder_feats.21
$region0: #{whisper_encoder_feats.21}
  #allocation0 [shape = 'u32[]', space=smem, size = 0x4, offset = 0x4, fixed_abs, tag = 'smem constant byte address 0x4 - core index']
  #allocation1 [shape = 'u32[72,128]{1,0:T(1,128)}', space=vmem, size = 0x9000, scoped, tag = 'internal scratch']
  #allocation2 [shape = 'f32[32,1]{1,0:T(8,128)}', space=vmem, size = 0x4000, scoped, tag = 'scratch operand']
  #allocation3 [shape = 'f32[32,1]{1,0:T(8,128)}', space=vmem, size = 0x4000, scoped, tag = 'scratch operand']
  #allocation4 [shape = 'f32[32,8]{1,0:T(8,128)}', space=vmem, size = 0x4000, scoped, tag = 'scratch operand']
  %s0 = inlined_call_operand.vmem [shape: f32[8,32,8], index: 0, kind: input, shape index: {}]
  %s1 = inlined_call_operand.vmem [shape: f32[8,32,8], index: 1, kind: input, shape index: {}]
  %s2 = inlined_call_operand.vmem [shape: f32[8,32,8], index: 2, kind: input, shape index: {}]
  %s3 = inlined_call_operand.vmem [shape: f32[8,32,8], index: 3, kind: output, shape index: {}]
  %s4 = sld [smem:[#allocation0]]
  $region53: #{whisper_encoder_feats.21} parent=0
    _
  %s6 = ssub.s32 1, %s4
  %s7 = scalar_select 0, %s6, %s4
  loop: start=0, step=1, limit=10
  $region2: #{whisper_encoder_feats.21} parent=0 // loop_pre_header
    _
  $region3: #{whisper_encoder_feats.21} parent=0 // loop_header
    %s9 = sphi 0, %s13
    %p10 = scmp.ge.s32.totalorder %s9, 10
    %s16 = sphi 0, %s35
    %s17 = sphi 0, %s31
    %s18 = sphi 0, %s27
    %s19 = sphi 0, %s16
    %s20 = sphi 0, %s17
    %s21 = sphi 0, %s18
    %s22 = sphi 0, %s19
    %s23 = sphi 0, %s20
    %s24 = sphi 0, %s21
    %s40 = sphi 0, %s42
    %s43 = sphi 0, %s40
    %s44 = sphi 0, %s43
    %s60 = sphi 0, %s44
    %s68 = sphi 0, %s70
    %s71 = sphi 0, %s68
    %s72 = sphi 0, %s71
    %s88 = sphi 0, %s72
    %s96 = sphi 0, %s98
    %s99 = sphi 0, %s96
    %s100 = sphi 0, %s99
    %s116 = sphi 0, %s100
    %s124 = sphi 0, %s126
    %s127 = sphi 0, %s124
    %s128 = sphi 0, %s127
    %s144 = sphi 0, %s128
  $region4: #{whisper_encoder_feats.21} parent=0 // loop_header_branch
    %12 = sbr.rel (%p10) target = $region8
  $region5: #{whisper_encoder_feats.21} parent=0 // loop_body
    %s14 = ssub.s32 %s9, 1
    %s15 = ssub.s32 %s9, 2
    %s25 = sadd.s32 1, %s18
    %p26 = scmp.ge.s32.totalorder %s25, 1
    %s27 = scalar_select %p26, 0, %s25
    %s28 = sadd.s32 1, %s17
    %s29 = scalar_select %p26, %s28, %s17
    %p30 = scmp.ge.s32.totalorder %s29, 1
    %s31 = scalar_select %p30, 0, %s29
    %s32 = sadd.s32 1, %s16
    %s33 = scalar_select %p30, %s32, %s16
    %p34 = scmp.ge.s32.totalorder %s33, 8
    %s35 = scalar_select %p34, 0, %s33
    %s36 = ssub.s32 %s16, %s35
    %s37 = ssub.s32 %s17, %s31
    %s38 = sor.u32 %s36, %s37
    %p39 = scmp.eq.s32.totalorder %s38, 0
    %s41 = sadd.s32 %s40, 1
    %s42 = scalar_select %p39, %s40, %s41
    %p45 = pneg %p39
    %p46 = scmp.eq.s32.totalorder %s9, 7
    %p47 = por %p45, %p46
    %p48 = scmp.ne.s32.totalorder %s40, %s43
    %p49 = scmp.eq.s32.totalorder %s9, 0
    %p50 = por %p48, %p49
    %p51 = scmp.ne.s32.totalorder %s40, %s43
    %p52 = scmp.eq.s32.totalorder %s14, 7
    %p53 = por %p51, %p52
    %p54 = scmp.ne.s32.totalorder %s43, %s44
    %p55 = scmp.eq.s32.totalorder %s14, 0
    %p56 = por %p54, %p55
    %p57 = scmp.ne.s32.totalorder %s43, %s44
    %p58 = scmp.eq.s32.totalorder %s15, 7
    %p59 = por %p57, %p58
    %p61 = scmp.ne.s32.totalorder %s44, %s60
    %p62 = scmp.eq.s32.totalorder %s15, 0
    %p63 = por %p61, %p62
    %s64 = ssub.s32 %s16, %s35
    %s65 = ssub.s32 %s18, %s27
    %s66 = sor.u32 %s64, %s65
    %p67 = scmp.eq.s32.totalorder %s66, 0
    %s69 = sadd.s32 %s68, 1
    %s70 = scalar_select %p67, %s68, %s69
    %p73 = pneg %p67
    %p74 = scmp.eq.s32.totalorder %s9, 7
    %p75 = por %p73, %p74
    %p76 = scmp.ne.s32.totalorder %s68, %s71
    %p77 = scmp.eq.s32.totalorder %s9, 0
    %p78 = por %p76, %p77
    %p79 = scmp.ne.s32.totalorder %s68, %s71
    %p80 = scmp.eq.s32.totalorder %s14, 7
    %p81 = por %p79, %p80
    %p82 = scmp.ne.s32.totalorder %s71, %s72
    %p83 = scmp.eq.s32.totalorder %s14, 0
    %p84 = por %p82, %p83
    %p85 = scmp.ne.s32.totalorder %s71, %s72
    %p86 = scmp.eq.s32.totalorder %s15, 7
    %p87 = por %p85, %p86
    %p89 = scmp.ne.s32.totalorder %s72, %s88
    %p90 = scmp.eq.s32.totalorder %s15, 0
    %p91 = por %p89, %p90
    %s92 = ssub.s32 %s16, %s35
    %s93 = ssub.s32 %s18, %s27
    %s94 = sor.u32 %s92, %s93
    %p95 = scmp.eq.s32.totalorder %s94, 0
    %s97 = sadd.s32 %s96, 1
    %s98 = scalar_select %p95, %s96, %s97
    %p101 = pneg %p95
    %p102 = scmp.eq.s32.totalorder %s9, 7
    %p103 = por %p101, %p102
    %p104 = scmp.ne.s32.totalorder %s96, %s99
    %p105 = scmp.eq.s32.totalorder %s9, 0
    %p106 = por %p104, %p105
    %p107 = scmp.ne.s32.totalorder %s96, %s99
    %p108 = scmp.eq.s32.totalorder %s14, 7
    %p109 = por %p107, %p108
    %p110 = scmp.ne.s32.totalorder %s99, %s100
    %p111 = scmp.eq.s32.totalorder %s14, 0
    %p112 = por %p110, %p111
    %p113 = scmp.ne.s32.totalorder %s99, %s100
    %p114 = scmp.eq.s32.totalorder %s15, 7
    %p115 = por %p113, %p114
    %p117 = scmp.ne.s32.totalorder %s100, %s116
    %p118 = scmp.eq.s32.totalorder %s15, 0
    %p119 = por %p117, %p118
    %s120 = ssub.s32 %s16, %s35
    %s121 = ssub.s32 %s17, %s31
    %s122 = sor.u32 %s120, %s121
    %p123 = scmp.eq.s32.totalorder %s122, 0
    %s125 = sadd.s32 %s124, 1
    %s126 = scalar_select %p123, %s124, %s125
    %p129 = pneg %p123
    %p130 = scmp.eq.s32.totalorder %s9, 7
    %p131 = por %p129, %p130
    %p132 = scmp.ne.s32.totalorder %s124, %s127
    %p133 = scmp.eq.s32.totalorder %s9, 0
    %p134 = por %p132, %p133
    %p135 = scmp.ne.s32.totalorder %s124, %s127
    %p136 = scmp.eq.s32.totalorder %s14, 7
    %p137 = por %p135, %p136
    %p138 = scmp.ne.s32.totalorder %s127, %s128
    %p139 = scmp.eq.s32.totalorder %s14, 0
    %p140 = por %p138, %p139
    %p141 = scmp.ne.s32.totalorder %s127, %s128
    %p142 = scmp.eq.s32.totalorder %s15, 7
    %p143 = por %p141, %p142
    %p145 = scmp.ne.s32.totalorder %s128, %s144
    %p146 = scmp.eq.s32.totalorder %s15, 0
    %p147 = por %p145, %p146
    %p148 = scmp.le.s32.totalorder 1, %s9
    %p149 = scmp.lt.s32.totalorder %s9, 9
    %p150 = pnand %p148, %p149
    %p151 = pneg %p150
    // Predicated region
    $region9: #{whisper_encoder_feats.21} parent=5 // pred_check
      _
    $region10: #{whisper_encoder_feats.21} parent=5 // pred_check_branch
      %153 = sbr.rel (%p150) target = $region12
    $region11: #{whisper_encoder_feats.21} parent=5 // pred_region
      %s154 = ssub.s32 %s9, 1
    $region12: #{whisper_encoder_feats.21} parent=5 // pred_fallthru
      _
    %p155 = scmp.lt.s32.totalorder %s9, 8
    // Predicated region
    $region13: #{whisper_encoder_feats.21} parent=5 // pred_check
      %p156 = pneg %p155
    $region14: #{whisper_encoder_feats.21} parent=5 // pred_check_branch
      %158 = sbr.rel (%p156) target = $region16
    $region15: #{whisper_encoder_feats.21} parent=5 // pred_region
      // Predicated region
      $region17: #{whisper_encoder_feats.21} parent=15 // pred_check
        %p159 = pneg %p50
      $region18: #{whisper_encoder_feats.21} parent=15 // pred_check_branch
        %161 = sbr.rel (%p159) target = $region20
      $region19: #{whisper_encoder_feats.21} parent=15 // pred_region
        %s162 = smul.u32 4, %s17
        %p163 = scmp.lt.s32.totalorder %s16, 7
        %s164 = scalar_select %p163, %s16, 7
        %p165 = scmp.lt.s32.totalorder %s162, 3
        %s166 = scalar_select %p165, %s162, 3
        %s167 = smul.addr %s164, 4
        %s168 = sadd.s32 %s166, %s167
        %s169 = smul.addr %s168, 8
        %s170 = scalar_lea.vmem %s0, %s169
        %s171 = smul.u32 4, %s17
      $region20: #{whisper_encoder_feats.21} parent=15 // pred_fallthru
        _
      // Predicated region
      $region21: #{whisper_encoder_feats.21} parent=15 // pred_check
        %p172 = pneg %p78
      $region22: #{whisper_encoder_feats.21} parent=15 // pred_check_branch
        %174 = sbr.rel (%p172) target = $region24
      $region23: #{whisper_encoder_feats.21} parent=15 // pred_region
        %s175 = smul.u32 4, %s18
        %p176 = scmp.lt.s32.totalorder %s16, 7
        %s177 = scalar_select %p176, %s16, 7
        %p178 = scmp.lt.s32.totalorder %s175, 3
        %s179 = scalar_select %p178, %s175, 3
        %s180 = smul.addr %s177, 4
        %s181 = sadd.s32 %s179, %s180
        %s182 = smul.addr %s181, 8
        %s183 = scalar_lea.vmem %s1, %s182
        %s184 = smul.u32 4, %s18
      $region24: #{whisper_encoder_feats.21} parent=15 // pred_fallthru
        _
      // Predicated region
      $region25: #{whisper_encoder_feats.21} parent=15 // pred_check
        %p185 = pneg %p106
      $region26: #{whisper_encoder_feats.21} parent=15 // pred_check_branch
        %187 = sbr.rel (%p185) target = $region28
      $region27: #{whisper_encoder_feats.21} parent=15 // pred_region
        %s188 = smul.u32 4, %s18
        %p189 = scmp.lt.s32.totalorder %s16, 7
        %s190 = scalar_select %p189, %s16, 7
        %p191 = scmp.lt.s32.totalorder %s188, 3
        %s192 = scalar_select %p191, %s188, 3
        %s193 = smul.addr %s190, 4
        %s194 = sadd.s32 %s192, %s193
        %s195 = smul.addr %s194, 8
        %s196 = scalar_lea.vmem %s2, %s195
        %s197 = smul.u32 4, %s18
      $region28: #{whisper_encoder_feats.21} parent=15 // pred_fallthru
        _
    $region16: #{whisper_encoder_feats.21} parent=5 // pred_fallthru
      _
    %p198 = scmp.le.s32.totalorder 1, %s9
    %p199 = scmp.lt.s32.totalorder %s9, 9
    %p200 = pnand %p198, %p199
    %p201 = pneg %p200
    // Predicated region
    $region29: #{whisper_encoder_feats.21} parent=5 // pred_check
      _
    $region30: #{whisper_encoder_feats.21} parent=5 // pred_check_branch
      %203 = sbr.rel (%p200) target = $region32
    $region31: #{whisper_encoder_feats.21} parent=5 // pred_region
      %s204 = ssub.s32 %s9, 1
      %s205 = smul.u32 4, %s20
      %p206 = scmp.lt.s32.totalorder %s19, 7
      %s207 = scalar_select %p206, %s19, 7
      %p208 = scmp.lt.s32.totalorder %s205, 3
      %s209 = scalar_select %p208, %s205, 3
      %s210 = smul.addr %s207, 4
      %s211 = sadd.s32 %s209, %s210
      %s212 = smul.addr %s211, 8
      %s213 = scalar_lea.vmem %s0, %s212
      %p214 = pneg %p56
      %p215 = pneg %p53
      %s216 = smul.u32 4, %s21
      %p217 = scmp.lt.s32.totalorder %s19, 7
      %s218 = scalar_select %p217, %s19, 7
      %p219 = scmp.lt.s32.totalorder %s216, 3
      %s220 = scalar_select %p219, %s216, 3
      %s221 = smul.addr %s218, 4
      %s222 = sadd.s32 %s220, %s221
      %s223 = smul.addr %s222, 8
      %s224 = scalar_lea.vmem %s1, %s223
      %p225 = pneg %p84
      %p226 = pneg %p81
      %s227 = smul.u32 4, %s21
      %p228 = scmp.lt.s32.totalorder %s19, 7
      %s229 = scalar_select %p228, %s19, 7
      %p230 = scmp.lt.s32.totalorder %s227, 3
      %s231 = scalar_select %p230, %s227, 3
      %s232 = smul.addr %s229, 4
      %s233 = sadd.s32 %s231, %s232
      %s234 = smul.addr %s233, 8
      %s235 = scalar_lea.vmem %s2, %s234
      %p236 = pneg %p112
      %p237 = pneg %p109
      %p238 = pneg %p140
      %p239 = pneg %p137
      %s240 = smul.u32 4, %s20
      %p241 = scmp.lt.s32.totalorder %s19, 7
      %s242 = scalar_select %p241, %s19, 7
      %p243 = scmp.lt.s32.totalorder %s240, 3
      %s244 = scalar_select %p243, %s240, 3
      %s245 = smul.addr %s242, 4
      %s246 = sadd.s32 %s244, %s245
      %s247 = smul.addr %s246, 8
      %s248 = scalar_lea.vmem %s3, %s247
      %s249 = smul.u32 4, %s20
      %p250 = scmp.lt.s32.totalorder %s19, 7
      %s251 = scalar_select %p250, %s19, 7
      %p252 = scmp.lt.s32.totalorder %s249, 3
      %s253 = scalar_select %p252, %s249, 3
      %s254 = smul.addr %s251, 4
      %s255 = sadd.s32 %s253, %s254
      %s256 = smul.addr %s255, 8
      %s257 = scalar_lea.vmem %s0, %s256
      %s258 = smul.u32 4, %s20
      %s259 = smul.u32 4, %s21
      %p260 = scmp.lt.s32.totalorder %s19, 7
      %s261 = scalar_select %p260, %s19, 7
      %p262 = scmp.lt.s32.totalorder %s259, 3
      %s263 = scalar_select %p262, %s259, 3
      %s264 = smul.addr %s261, 4
      %s265 = sadd.s32 %s263, %s264
      %s266 = smul.addr %s265, 8
      %s267 = scalar_lea.vmem %s1, %s266
      %s268 = smul.u32 4, %s21
      %s269 = smul.u32 4, %s21
      %p270 = scmp.lt.s32.totalorder %s19, 7
      %s271 = scalar_select %p270, %s19, 7
      %p272 = scmp.lt.s32.totalorder %s269, 3
      %s273 = scalar_select %p272, %s269, 3
      %s274 = smul.addr %s271, 4
      %s275 = sadd.s32 %s273, %s274
      %s276 = smul.addr %s275, 8
      %s277 = scalar_lea.vmem %s2, %s276
      %s278 = smul.u32 4, %s21
      %s279 = smul.u32 4, %s20
      %p280 = scmp.lt.s32.totalorder %s19, 7
      %s281 = scalar_select %p280, %s19, 7
      %p282 = scmp.lt.s32.totalorder %s279, 3
      %s283 = scalar_select %p282, %s279, 3
      %s284 = smul.addr %s281, 4
      %s285 = sadd.s32 %s283, %s284
      %s286 = smul.addr %s285, 8
      %s287 = scalar_lea.vmem %s3, %s286
      %s288 = smul.u32 4, %s20
      %p290 = scmp.eq.s32.totalorder %s21, 0
      // Predicated region
      $region33: #{whisper_encoder_feats.21} parent=31 // pred_check
        %p291 = pneg %p290
      $region34: #{whisper_encoder_feats.21} parent=31 // pred_check_branch
        %293 = sbr.rel (%p291) target = $region36
      $region35: #{whisper_encoder_feats.21} parent=31 // pred_region
        %vm294 = vcmask 7168
        %295 = vst.msk [vmem:[#allocation2] sm:$0xff] %vm294, -inf
        %296 = vst.msk [vmem:[#allocation2 + $0x8] sm:$0xff] %vm294, -inf
        %297 = vst.msk [vmem:[#allocation2 + $0x10] sm:$0xff] %vm294, -inf
        %298 = vst.msk [vmem:[#allocation2 + $0x18] sm:$0xff] %vm294, -inf
        %299 = vst.msk [vmem:[#allocation3] sm:$0xff] %vm294, 0.0
        %300 = vst.msk [vmem:[#allocation3 + $0x8] sm:$0xff] %vm294, 0.0
        %301 = vst.msk [vmem:[#allocation3 + $0x10] sm:$0xff] %vm294, 0.0
        %302 = vst.msk [vmem:[#allocation3 + $0x18] sm:$0xff] %vm294, 0.0
        %vm303 = vcmask 64512
        %304 = vst.msk [vmem:[#allocation4] sm:$0xff] %vm303, 0.0
        %305 = vst.msk [vmem:[#allocation4 + $0x8] sm:$0xff] %vm303, 0.0
        %306 = vst.msk [vmem:[#allocation4 + $0x10] sm:$0xff] %vm303, 0.0
        %307 = vst.msk [vmem:[#allocation4 + $0x18] sm:$0xff] %vm303, 0.0
      $region36: #{whisper_encoder_feats.21} parent=31 // pred_fallthru
        _
      %v308 = vld [vmem:[%s257] sm:$0xff]
      %v309 = vld [vmem:[%s257 + $0x8] sm:$0xff]
      %v310 = vld [vmem:[%s257 + $0x10] sm:$0xff]
      %v311 = vld [vmem:[%s257 + $0x18] sm:$0xff]
      %v312 = vmul.f32 %v308, 0.35355338
      %v313 = vmul.f32 %v309, 0.35355338
      %v314 = vmul.f32 %v310, 0.35355338
      %v315 = vmul.f32 %v311, 0.35355338
      %v316 = vpack.c.bf16 %v313, %v312
      %v317 = vpack.c.bf16 %v315, %v314
      %v318 = vld [vmem:[%s267] sm:$0xff]
      %v319 = vld [vmem:[%s267 + $0x8] sm:$0xff]
      %v320 = vld [vmem:[%s267 + $0x10] sm:$0xff]
      %v321 = vld [vmem:[%s267 + $0x18] sm:$0xff]
      %v322 = vpack.c.bf16 %v319, %v318
      %v323 = vpack.c.bf16 %v321, %v320
      %vm324 = vcmask 64512
      %v326 = vsel %vm324, %v316, 0
      %v329 = vsel %vm324, %v317, 0
      %v332 = vsel %vm324, %v322, 0
      %v335 = vsel %vm324, %v323, 0
      %337 = vmatpush.bf16.xpose.msra.mxu0 0
      %338 = vmatpush.bf16.xpose.msra.mxu0 0
      %339 = vmatpush.bf16.xpose.msra.mxu0 0
      %340 = vmatpush.bf16.xpose.msra.mxu0 0
      %341 = vmatpush.bf16.xpose.msra.mxu0 0
      %342 = vmatpush.bf16.xpose.msra.mxu0 0
      %343 = vmatpush.bf16.xpose.msra.mxu0 %v335
      %344 = vmatpush.bf16.xpose.msra.mxu0 %v332
      %345 = vmatmul.bf16.gmra.mxu0 %v326
      %v346 = vpop.f32.mrf.mxu0
      %v347 = vadd.f32 0.0, %v346
      %v348 = vpop.f32.mrf.mxu0
      %v349 = vadd.f32 0.0, %v348
      %350 = vmatmul.bf16.gmra.mxu0 %v329
      %v351 = vpop.f32.mrf.mxu0
      %v352 = vadd.f32 0.0, %v351
      %v353 = vpop.f32.mrf.mxu0
      %v354 = vadd.f32 0.0, %v353
      %355 = vdwg.mxu0
      %v356 = vld [vmem:[#allocation2] sm:$0xff]
      %v357 = vld [vmem:[#allocation2 + $0x8] sm:$0xff]
      %v358 = vld [vmem:[#allocation2 + $0x10] sm:$0xff]
      %v359 = vld [vmem:[#allocation2 + $0x18] sm:$0xff]
      %vm360 = vcmask 261120
      %v361 = vsel %vm360, %v347, -inf
      %362 = vmax.xlane.f32.xlu0 %v361
      %v363 = vpop.xlane.xlu0 %362
      %v364 = vsel %vm360, %v349, -inf
      %365 = vmax.xlane.f32.xlu0 %v364
      %v366 = vpop.xlane.xlu0 %365
      %v367 = vsel %vm360, %v352, -inf
      %368 = vmax.xlane.f32.xlu0 %v367
      %v369 = vpop.xlane.xlu0 %368
      %v370 = vsel %vm360, %v354, -inf
      %371 = vmax.xlane.f32.xlu0 %v370
      %v372 = vpop.xlane.xlu0 %371
      %v373 = vmax.f32 %v356, %v363
      %v374 = vmax.f32 %v357, %v366
      %v375 = vmax.f32 %v358, %v369
      %v376 = vmax.f32 %v359, %v372
      %v377 = vsub.f32 %v356, %v373
      %v378 = vsub.f32 %v357, %v374
      %v379 = vsub.f32 %v358, %v375
      %v380 = vsub.f32 %v359, %v376
      %v381 = vmul.f32 %v377, 1.442695
      %v382 = vpow.pop %v381
      %v383 = vmul.f32 %v378, 1.442695
      %v384 = vpow.pop %v383
      %v385 = vmul.f32 %v379, 1.442695
      %v386 = vpow.pop %v385
      %v387 = vmul.f32 %v380, 1.442695
      %v388 = vpow.pop %v387
      %390 = vset.pattern.permute.xlu0 0
      %391 = vperm.xlu0 %390, %v373
      %v392 = vpop.permute.xlu0 %391
      %395 = vset.pattern.permute.xlu0 0
      %396 = vperm.xlu0 %395, %v374
      %v397 = vpop.permute.xlu0 %396
      %400 = vset.pattern.permute.xlu0 0
      %401 = vperm.xlu0 %400, %v375
      %v402 = vpop.permute.xlu0 %401
      %405 = vset.pattern.permute.xlu0 0
      %406 = vperm.xlu0 %405, %v376
      %v407 = vpop.permute.xlu0 %406
      %v409 = vsub.f32 %v347, %v392
      %v410 = vsub.f32 %v349, %v397
      %v411 = vsub.f32 %v352, %v402
      %v412 = vsub.f32 %v354, %v407
      %v413 = vmul.f32 %v409, 1.442695
      %v414 = vpow.pop %v413
      %v415 = vmul.f32 %v410, 1.442695
      %v416 = vpow.pop %v415
      %v417 = vmul.f32 %v411, 1.442695
      %v418 = vpow.pop %v417
      %v419 = vmul.f32 %v412, 1.442695
      %v420 = vpow.pop %v419
      %v421 = vld [vmem:[#allocation3] sm:$0xff]
      %v422 = vld [vmem:[#allocation3 + $0x8] sm:$0xff]
      %v423 = vld [vmem:[#allocation3 + $0x10] sm:$0xff]
      %v424 = vld [vmem:[#allocation3 + $0x18] sm:$0xff]
      %v425 = vmul.f32 %v382, %v421
      %v426 = vmul.f32 %v384, %v422
      %v427 = vmul.f32 %v386, %v423
      %v428 = vmul.f32 %v388, %v424
      %v429 = vsel %vm360, %v414, 0.0
      %430 = vadd.xlane.f32.xlu0 %v429
      %v431 = vpop.xlane.xlu0 %430
      %v432 = vsel %vm360, %v416, 0.0
      %433 = vadd.xlane.f32.xlu0 %v432
      %v434 = vpop.xlane.xlu0 %433
      %v435 = vsel %vm360, %v418, 0.0
      %436 = vadd.xlane.f32.xlu0 %v435
      %v437 = vpop.xlane.xlu0 %436
      %v438 = vsel %vm360, %v420, 0.0
      %439 = vadd.xlane.f32.xlu0 %v438
      %v440 = vpop.xlane.xlu0 %439
      %v441 = vadd.f32 %v425, %v431
      %v442 = vadd.f32 %v426, %v434
      %v443 = vadd.f32 %v427, %v437
      %v444 = vadd.f32 %v428, %v440
      %vm445 = vcmask 7168
      %446 = vst.msk [vmem:[#allocation3] sm:$0xff] %vm445, %v441
      %447 = vst.msk [vmem:[#allocation3 + $0x8] sm:$0xff] %vm445, %v442
      %448 = vst.msk [vmem:[#allocation3 + $0x10] sm:$0xff] %vm445, %v443
      %449 = vst.msk [vmem:[#allocation3 + $0x18] sm:$0xff] %vm445, %v444
      %v450 = vld [vmem:[#allocation4] sm:$0xff]
      %v451 = vld [vmem:[#allocation4 + $0x8] sm:$0xff]
      %v452 = vld [vmem:[#allocation4 + $0x10] sm:$0xff]
      %v453 = vld [vmem:[#allocation4 + $0x18] sm:$0xff]
      %455 = vset.pattern.permute.xlu0 0
      %456 = vperm.xlu0 %455, %v382
      %v457 = vpop.permute.xlu0 %456
      %460 = vset.pattern.permute.xlu0 0
      %461 = vperm.xlu0 %460, %v384
      %v462 = vpop.permute.xlu0 %461
      %465 = vset.pattern.permute.xlu0 0
      %466 = vperm.xlu0 %465, %v386
      %v467 = vpop.permute.xlu0 %466
      %470 = vset.pattern.permute.xlu0 0
      %471 = vperm.xlu0 %470, %v388
      %v472 = vpop.permute.xlu0 %471
      %v474 = vmul.f32 %v457, %v450
      %v475 = vmul.f32 %v462, %v451
      %v476 = vmul.f32 %v467, %v452
      %v477 = vmul.f32 %v472, %v453
      %v478 = vpack.c.bf16 %v416, %v414
      %v479 = vpack.c.bf16 %v420, %v418
      %v480 = vld [vmem:[%s277] sm:$0xff]
      %v481 = vld [vmem:[%s277 + $0x8] sm:$0xff]
      %v482 = vld [vmem:[%s277 + $0x10] sm:$0xff]
      %v483 = vld [vmem:[%s277 + $0x18] sm:$0xff]
      %v484 = vpack.c.bf16 %v481, %v480
      %v485 = vpack.c.bf16 %v483, %v482
      %v487 = vsel %vm360, %v478, 0
      %v490 = vsel %vm360, %v479, 0
      %492 = vmatpush.bf16.msra.mxu0 0
      %493 = vmatpush.bf16.msra.mxu0 0
      %494 = vmatpush.bf16.msra.mxu0 0
      %495 = vmatpush.bf16.msra.mxu0 0
      %496 = vmatpush.bf16.msra.mxu0 0
      %497 = vmatpush.bf16.msra.mxu0 0
      %498 = vmatpush.bf16.msra.mxu0 %v485
      %499 = vmatpush.bf16.msra.mxu0 %v484
      %500 = vmatmul.bf16.gmra.mxu0 %v487
      %v501 = vpop.f32.mrf.mxu0
      %v502 = vadd.f32 0.0, %v501
      %v503 = vpop.f32.mrf.mxu0
      %v504 = vadd.f32 0.0, %v503
      %505 = vmatmul.bf16.gmra.mxu0 %v490
      %v506 = vpop.f32.mrf.mxu0
      %v507 = vadd.f32 0.0, %v506
      %v508 = vpop.f32.mrf.mxu0
      %v509 = vadd.f32 0.0, %v508
      %510 = vdwg.mxu0
      %v511 = vadd.f32 %v474, %v502
      %v512 = vadd.f32 %v475, %v504
      %v513 = vadd.f32 %v476, %v507
      %v514 = vadd.f32 %v477, %v509
      %515 = vst.msk [vmem:[#allocation4] sm:$0xff] %vm324, %v511
      %516 = vst.msk [vmem:[#allocation4 + $0x8] sm:$0xff] %vm324, %v512
      %517 = vst.msk [vmem:[#allocation4 + $0x10] sm:$0xff] %vm324, %v513
      %518 = vst.msk [vmem:[#allocation4 + $0x18] sm:$0xff] %vm324, %v514
      %519 = vst.msk [vmem:[#allocation2] sm:$0xff] %vm445, %v373
      %520 = vst.msk [vmem:[#allocation2 + $0x8] sm:$0xff] %vm445, %v374
      %521 = vst.msk [vmem:[#allocation2 + $0x10] sm:$0xff] %vm445, %v375
      %522 = vst.msk [vmem:[#allocation2 + $0x18] sm:$0xff] %vm445, %v376
      // Predicated region
      $region37: #{whisper_encoder_feats.21} parent=31 // pred_check
        %p523 = pneg %p290
      $region38: #{whisper_encoder_feats.21} parent=31 // pred_check_branch
        %525 = sbr.rel (%p523) target = $region40
      $region39: #{whisper_encoder_feats.21} parent=31 // pred_region
        %v526 = vld [vmem:[#allocation4] sm:$0xff]
        %v527 = vld [vmem:[#allocation4 + $0x8] sm:$0xff]
        %v528 = vld [vmem:[#allocation4 + $0x10] sm:$0xff]
        %v529 = vld [vmem:[#allocation4 + $0x18] sm:$0xff]
        %v530 = vld [vmem:[#allocation3] sm:$0xff]
        %v531 = vld [vmem:[#allocation3 + $0x8] sm:$0xff]
        %v532 = vld [vmem:[#allocation3 + $0x10] sm:$0xff]
        %v533 = vld [vmem:[#allocation3 + $0x18] sm:$0xff]
        %v534 = vrcp.pop %v530
        %v535 = vrcp.pop %v531
        %v536 = vrcp.pop %v532
        %v537 = vrcp.pop %v533
        %539 = vset.pattern.permute.xlu0 0
        %540 = vperm.xlu0 %539, %v534
        %v541 = vpop.permute.xlu0 %540
        %544 = vset.pattern.permute.xlu0 0
        %545 = vperm.xlu0 %544, %v535
        %v546 = vpop.permute.xlu0 %545
        %549 = vset.pattern.permute.xlu0 0
        %550 = vperm.xlu0 %549, %v536
        %v551 = vpop.permute.xlu0 %550
        %554 = vset.pattern.permute.xlu0 0
        %555 = vperm.xlu0 %554, %v537
        %v556 = vpop.permute.xlu0 %555
        %v558 = vmul.f32 %v526, %v541
        %v559 = vmul.f32 %v527, %v546
        %v560 = vmul.f32 %v528, %v551
        %v561 = vmul.f32 %v529, %v556
        %562 = vst.msk [vmem:[%s287] sm:$0xff] %vm324, %v558
        %563 = vst.msk [vmem:[%s287 + $0x8] sm:$0xff] %vm324, %v559
        %564 = vst.msk [vmem:[%s287 + $0x10] sm:$0xff] %vm324, %v560
        %565 = vst.msk [vmem:[%s287 + $0x18] sm:$0xff] %vm324, %v561
      $region40: #{whisper_encoder_feats.21} parent=31 // pred_fallthru
        _
      %s566 = smul.u32 4, %s20
      %p567 = scmp.lt.s32.totalorder %s19, 7
      %s568 = scalar_select %p567, %s19, 7
      %p569 = scmp.lt.s32.totalorder %s566, 3
      %s570 = scalar_select %p569, %s566, 3
      %s571 = smul.addr %s568, 4
      %s572 = sadd.s32 %s570, %s571
      %s573 = smul.addr %s572, 8
      %s574 = scalar_lea.vmem %s3, %s573
      // Predicated region
      $region41: #{whisper_encoder_feats.21} parent=31 // pred_check
        %p575 = pneg %p137
      $region42: #{whisper_encoder_feats.21} parent=31 // pred_check_branch
        %577 = sbr.rel (%p575) target = $region44
      $region43: #{whisper_encoder_feats.21} parent=31 // pred_region
        %s578 = smul.u32 4, %s20
      $region44: #{whisper_encoder_feats.21} parent=31 // pred_fallthru
        _
    $region32: #{whisper_encoder_feats.21} parent=5 // pred_fallthru
      _
    %p579 = scmp.le.s32.totalorder 2, %s9
    // Predicated region
    $region45: #{whisper_encoder_feats.21} parent=5 // pred_check
      %p580 = pneg %p579
    $region46: #{whisper_encoder_feats.21} parent=5 // pred_check_branch
      %582 = sbr.rel (%p580) target = $region48
    $region47: #{whisper_encoder_feats.21} parent=5 // pred_region
      %s583 = ssub.s32 %s9, 2
      // Predicated region
      $region49: #{whisper_encoder_feats.21} parent=47 // pred_check
        %p584 = pneg %p143
      $region50: #{whisper_encoder_feats.21} parent=47 // pred_check_branch
        %586 = sbr.rel (%p584) target = $region52
      $region51: #{whisper_encoder_feats.21} parent=47 // pred_region
        %s587 = smul.u32 4, %s23
        %p588 = scmp.lt.s32.totalorder %s22, 7
        %s589 = scalar_select %p588, %s22, 7
        %p590 = scmp.lt.s32.totalorder %s587, 3
        %s591 = scalar_select %p590, %s587, 3
        %s592 = smul.addr %s589, 4
        %s593 = sadd.s32 %s591, %s592
        %s594 = smul.addr %s593, 8
        %s595 = scalar_lea.vmem %s3, %s594
      $region52: #{whisper_encoder_feats.21} parent=47 // pred_fallthru
        _
    $region48: #{whisper_encoder_feats.21} parent=5 // pred_fallthru
      _
  $region6: #{whisper_encoder_feats.21} parent=0 // loop_footer
    %s13 = sadd.s32 1, %s9
  $region7: #{whisper_encoder_feats.21} parent=0 // loop_footer_branch
    %8 = sbr.rel target = $region3
  $region8: #{whisper_encoder_feats.21} parent=0 // loop_exit
    _

// kernel: whisper_encoder_feats.24
$region0: #{whisper_encoder_feats.24}
  #allocation0 [shape = 'u32[]', space=smem, size = 0x4, offset = 0x4, fixed_abs, tag = 'smem constant byte address 0x4 - core index']
  #allocation1 [shape = 'u32[72,128]{1,0:T(1,128)}', space=vmem, size = 0x9000, scoped, tag = 'internal scratch']
  #allocation2 [shape = 'f32[64,64]{1,0:T(8,128)}', space=vmem, size = 0x8000, scoped, tag = 'scratch operand']
  %s0 = inlined_call_operand.vmem [shape: f32[64,32], index: 0, kind: input, shape index: {}]
  %s1 = inlined_call_operand.vmem [shape: f32[32,64], index: 1, kind: input, shape index: {}]
  %s2 = inlined_call_operand.vmem [shape: f32[1,64], index: 2, kind: input, shape index: {}]
  %s3 = inlined_call_operand.vmem [shape: f32[64,64], index: 3, kind: output, shape index: {}]
  %s4 = sld [smem:[#allocation0]]
  $region30: #{whisper_encoder_feats.24} parent=0
    _
  %s6 = ssub.s32 1, %s4
  %s7 = scalar_select 0, %s6, %s4
  // Predicated region
  $region2: #{whisper_encoder_feats.24} parent=0 // pred_check
    _
  $region3: #{whisper_encoder_feats.24} parent=0 // pred_check_branch
    %9 = sbr.rel (0) target = $region5
  $region4: #{whisper_encoder_feats.24} parent=0 // pred_region
    _
  $region5: #{whisper_encoder_feats.24} parent=0 // pred_fallthru
    _
  // Predicated region
  $region6: #{whisper_encoder_feats.24} parent=0 // pred_check
    _
  $region7: #{whisper_encoder_feats.24} parent=0 // pred_check_branch
    %11 = sbr.rel (0) target = $region9
  $region8: #{whisper_encoder_feats.24} parent=0 // pred_region
    _
  $region9: #{whisper_encoder_feats.24} parent=0 // pred_fallthru
    _
  // Predicated region
  $region10: #{whisper_encoder_feats.24} parent=0 // pred_check
    _
  $region11: #{whisper_encoder_feats.24} parent=0 // pred_check_branch
    %13 = sbr.rel (0) target = $region13
  $region12: #{whisper_encoder_feats.24} parent=0 // pred_region
    _
  $region13: #{whisper_encoder_feats.24} parent=0 // pred_fallthru
    _
  %p15 = scmp.eq.s32.totalorder 0, 0
  // Predicated region
  $region14: #{whisper_encoder_feats.24} parent=0 // pred_check
    %p16 = pneg %p15
  $region15: #{whisper_encoder_feats.24} parent=0 // pred_check_branch
    %18 = sbr.rel (%p16) target = $region17
  $region16: #{whisper_encoder_feats.24} parent=0 // pred_region
    %vm19 = vcmask 523264
    %20 = vst.msk [vmem:[#allocation2] sm:$0xff] %vm19, 0.0
    %21 = vst.msk [vmem:[#allocation2 + $0x8] sm:$0xff] %vm19, 0.0
    %22 = vst.msk [vmem:[#allocation2 + $0x10] sm:$0xff] %vm19, 0.0
    %23 = vst.msk [vmem:[#allocation2 + $0x18] sm:$0xff] %vm19, 0.0
    %24 = vst.msk [vmem:[#allocation2 + $0x20] sm:$0xff] %vm19, 0.0
    %25 = vst.msk [vmem:[#allocation2 + $0x28] sm:$0xff] %vm19, 0.0
    %26 = vst.msk [vmem:[#allocation2 + $0x30] sm:$0xff] %vm19, 0.0
    %27 = vst.msk [vmem:[#allocation2 + $0x38] sm:$0xff] %vm19, 0.0
  $region17: #{whisper_encoder_feats.24} parent=0 // pred_fallthru
    _
  %v28 = vld [vmem:[#allocation2] sm:$0xff]
  %v29 = vld [vmem:[#allocation2 + $0x8] sm:$0xff]
  %v30 = vld [vmem:[#allocation2 + $0x10] sm:$0xff]
  %v31 = vld [vmem:[#allocation2 + $0x18] sm:$0xff]
  %v32 = vld [vmem:[#allocation2 + $0x20] sm:$0xff]
  %v33 = vld [vmem:[#allocation2 + $0x28] sm:$0xff]
  %v34 = vld [vmem:[#allocation2 + $0x30] sm:$0xff]
  %v35 = vld [vmem:[#allocation2 + $0x38] sm:$0xff]
  %v36 = vld [vmem:[%s0] sm:$0xff]
  %v37 = vld [vmem:[%s0 + $0x8] sm:$0xff]
  %v38 = vld [vmem:[%s0 + $0x10] sm:$0xff]
  %v39 = vld [vmem:[%s0 + $0x18] sm:$0xff]
  %v40 = vld [vmem:[%s0 + $0x20] sm:$0xff]
  %v41 = vld [vmem:[%s0 + $0x28] sm:$0xff]
  %v42 = vld [vmem:[%s0 + $0x30] sm:$0xff]
  %v43 = vld [vmem:[%s0 + $0x38] sm:$0xff]
  %v44 = vpack.c.bf16 %v37, %v36
  %v45 = vpack.c.bf16 %v39, %v38
  %v46 = vpack.c.bf16 %v41, %v40
  %v47 = vpack.c.bf16 %v43, %v42
  %v48 = vld [vmem:[%s1] sm:$0xff]
  %v49 = vld [vmem:[%s1 + $0x8] sm:$0xff]
  %v50 = vld [vmem:[%s1 + $0x10] sm:$0xff]
  %v51 = vld [vmem:[%s1 + $0x18] sm:$0xff]
  %v52 = vpack.c.bf16 %v49, %v48
  %v53 = vpack.c.bf16 %v51, %v50
  %vm54 = vcmask 261120
  %v56 = vsel %vm54, %v44, 0
  %v59 = vsel %vm54, %v45, 0
  %v62 = vsel %vm54, %v46, 0
  %v65 = vsel %vm54, %v47, 0
  %67 = vmatpush.bf16.msra.mxu0 0
  %68 = vmatpush.bf16.msra.mxu0 0
  %69 = vmatpush.bf16.msra.mxu0 0
  %70 = vmatpush.bf16.msra.mxu0 0
  %71 = vmatpush.bf16.msra.mxu0 0
  %72 = vmatpush.bf16.msra.mxu0 0
  %73 = vmatpush.bf16.msra.mxu0 %v53
  %74 = vmatpush.bf16.msra.mxu0 %v52
  %75 = vmatmul.bf16.gmra.mxu0 %v56
  %v76 = vpop.f32.mrf.mxu0
  %v77 = vadd.f32 0.0, %v76
  %v78 = vpop.f32.mrf.mxu0
  %v79 = vadd.f32 0.0, %v78
  %80 = vmatmul.bf16.gmra.mxu0 %v59
  %v81 = vpop.f32.mrf.mxu0
  %v82 = vadd.f32 0.0, %v81
  %v83 = vpop.f32.mrf.mxu0
  %v84 = vadd.f32 0.0, %v83
  %85 = vmatmul.bf16.gmra.mxu0 %v62
  %v86 = vpop.f32.mrf.mxu0
  %v87 = vadd.f32 0.0, %v86
  %v88 = vpop.f32.mrf.mxu0
  %v89 = vadd.f32 0.0, %v88
  %90 = vmatmul.bf16.gmra.mxu0 %v65
  %v91 = vpop.f32.mrf.mxu0
  %v92 = vadd.f32 0.0, %v91
  %v93 = vpop.f32.mrf.mxu0
  %v94 = vadd.f32 0.0, %v93
  %95 = vdwg.mxu0
  %v96 = vadd.f32 %v28, %v77
  %v97 = vadd.f32 %v29, %v79
  %v98 = vadd.f32 %v30, %v82
  %v99 = vadd.f32 %v31, %v84
  %v100 = vadd.f32 %v32, %v87
  %v101 = vadd.f32 %v33, %v89
  %v102 = vadd.f32 %v34, %v92
  %v103 = vadd.f32 %v35, %v94
  %vm104 = vcmask 523264
  %105 = vst.msk [vmem:[#allocation2] sm:$0xff] %vm104, %v96
  %106 = vst.msk [vmem:[#allocation2 + $0x8] sm:$0xff] %vm104, %v97
  %107 = vst.msk [vmem:[#allocation2 + $0x10] sm:$0xff] %vm104, %v98
  %108 = vst.msk [vmem:[#allocation2 + $0x18] sm:$0xff] %vm104, %v99
  %109 = vst.msk [vmem:[#allocation2 + $0x20] sm:$0xff] %vm104, %v100
  %110 = vst.msk [vmem:[#allocation2 + $0x28] sm:$0xff] %vm104, %v101
  %111 = vst.msk [vmem:[#allocation2 + $0x30] sm:$0xff] %vm104, %v102
  %112 = vst.msk [vmem:[#allocation2 + $0x38] sm:$0xff] %vm104, %v103
  // Predicated region
  $region18: #{whisper_encoder_feats.24} parent=0 // pred_check
    %p113 = pneg %p15
  $region19: #{whisper_encoder_feats.24} parent=0 // pred_check_branch
    %115 = sbr.rel (%p113) target = $region21
  $region20: #{whisper_encoder_feats.24} parent=0 // pred_region
    %v116 = vld [vmem:[#allocation2] sm:$0xff]
    %v117 = vld [vmem:[#allocation2 + $0x8] sm:$0xff]
    %v118 = vld [vmem:[#allocation2 + $0x10] sm:$0xff]
    %v119 = vld [vmem:[#allocation2 + $0x18] sm:$0xff]
    %v120 = vld [vmem:[#allocation2 + $0x20] sm:$0xff]
    %v121 = vld [vmem:[#allocation2 + $0x28] sm:$0xff]
    %v122 = vld [vmem:[#allocation2 + $0x30] sm:$0xff]
    %v123 = vld [vmem:[#allocation2 + $0x38] sm:$0xff]
    %v124 = vld [vmem:[%s2] sm:$0x1]
    %v126 = vperm.slane %v124, 0
    %v128 = vadd.f32 %v116, %v126
    %v129 = vadd.f32 %v117, %v126
    %v130 = vadd.f32 %v118, %v126
    %v131 = vadd.f32 %v119, %v126
    %v132 = vadd.f32 %v120, %v126
    %v133 = vadd.f32 %v121, %v126
    %v134 = vadd.f32 %v122, %v126
    %v135 = vadd.f32 %v123, %v126
    %v136 = vmul.f32 %v128, 0.5
    %v137 = vmul.f32 %v129, 0.5
    %v138 = vmul.f32 %v130, 0.5
    %v139 = vmul.f32 %v131, 0.5
    %v140 = vmul.f32 %v132, 0.5
    %v141 = vmul.f32 %v133, 0.5
    %v142 = vmul.f32 %v134, 0.5
    %v143 = vmul.f32 %v135, 0.5
    %v144 = vmul.f32 %v128, 0.70710677
    %v145 = vmul.f32 %v129, 0.70710677
    %v146 = vmul.f32 %v130, 0.70710677
    %v147 = vmul.f32 %v131, 0.70710677
    %v148 = vmul.f32 %v132, 0.70710677
    %v149 = vmul.f32 %v133, 0.70710677
    %v150 = vmul.f32 %v134, 0.70710677
    %v151 = vmul.f32 %v135, 0.70710677
    %v152 = vmul.f32 %v144, %v144
    %v153 = vmin.f32 16.0, %v152
    %v154 = vmul.f32 %v153, 2.1237322e-06
    %v155 = vadd.f32 %v154, 0.00028619796
    %v156 = vmul.f32 %v153, %v155
    %v157 = vadd.f32 %v156, 0.0036580483
    %v158 = vmul.f32 %v153, %v157
    %v159 = vadd.f32 %v158, 0.05243302
    %v160 = vmul.f32 %v153, %v159
    %v161 = vadd.f32 %v160, 0.18741608
    %v162 = vmul.f32 %v153, %v161
    %v163 = vadd.f32 %v162, 1.1283791
    %v164 = vmul.f32 %v144, %v163
    %v165 = vmul.f32 %v153, 3.8918573e-05
    %v166 = vadd.f32 %v165, 0.001143296
    %v167 = vmul.f32 %v153, %v166
    %v168 = vadd.f32 %v167, 0.014752088
    %v169 = vmul.f32 %v153, %v168
    %v170 = vadd.f32 %v169, 0.112945676
    %v171 = vmul.f32 %v153, %v170
    %v172 = vadd.f32 %v171, 0.4994258
    %v173 = vmul.f32 %v153, %v172
    %v174 = vadd.f32 %v173, 1.0
    %v175 = vrcp.pop %v174
    %v176 = vmul.f32 %v174, %v175
    %v177 = vsub.f32 1.0, %v176
    %v178 = vmul.f32 %v175, %v177
    %v179 = vadd.f32 %v175, %v178
    %vm180 = vweird.f32 %v174
    %vm181 = vweird.f32 %v175
    %vm182 = vmor %vm180, %vm181
    %v183 = vsel %vm182, %v175, %v179
    %v184 = vand.u32 2147483647, %v174
    %vm185 = vcmp.eq.f32.partialorder %v184, 8.507059e+37
    %v186 = vand.u32 %v174, 2147483648
    %v187 = vor.u32 1.1754944e-38, %v186
    %v188 = vsel %vm185, %v187, %v183
    %v189 = vmul.f32 %v164, %v188
    %v190 = vmin.f32 %v189, 1.0
    %v191 = vmax.f32 %v190, -1.0
    %v192 = vmul.f32 %v145, %v145
    %v193 = vmin.f32 16.0, %v192
    %v194 = vmul.f32 %v193, 2.1237322e-06
    %v195 = vadd.f32 %v194, 0.00028619796
    %v196 = vmul.f32 %v193, %v195
    %v197 = vadd.f32 %v196, 0.0036580483
    %v198 = vmul.f32 %v193, %v197
    %v199 = vadd.f32 %v198, 0.05243302
    %v200 = vmul.f32 %v193, %v199
    %v201 = vadd.f32 %v200, 0.18741608
    %v202 = vmul.f32 %v193, %v201
    %v203 = vadd.f32 %v202, 1.1283791
    %v204 = vmul.f32 %v145, %v203
    %v205 = vmul.f32 %v193, 3.8918573e-05
    %v206 = vadd.f32 %v205, 0.001143296
    %v207 = vmul.f32 %v193, %v206
    %v208 = vadd.f32 %v207, 0.014752088
    %v209 = vmul.f32 %v193, %v208
    %v210 = vadd.f32 %v209, 0.112945676
    %v211 = vmul.f32 %v193, %v210
    %v212 = vadd.f32 %v211, 0.4994258
    %v213 = vmul.f32 %v193, %v212
    %v214 = vadd.f32 %v213, 1.0
    %v215 = vrcp.pop %v214
    %v216 = vmul.f32 %v214, %v215
    %v217 = vsub.f32 1.0, %v216
    %v218 = vmul.f32 %v215, %v217
    %v219 = vadd.f32 %v215, %v218
    %vm220 = vweird.f32 %v214
    %vm221 = vweird.f32 %v215
    %vm222 = vmor %vm220, %vm221
    %v223 = vsel %vm222, %v215, %v219
    %v224 = vand.u32 2147483647, %v214
    %vm225 = vcmp.eq.f32.partialorder %v224, 8.507059e+37
    %v226 = vand.u32 %v214, 2147483648
    %v227 = vor.u32 1.1754944e-38, %v226
    %v228 = vsel %vm225, %v227, %v223
    %v229 = vmul.f32 %v204, %v228
    %v230 = vmin.f32 %v229, 1.0
    %v231 = vmax.f32 %v230, -1.0
    %v232 = vmul.f32 %v146, %v146
    %v233 = vmin.f32 16.0, %v232
    %v234 = vmul.f32 %v233, 2.1237322e-06
    %v235 = vadd.f32 %v234, 0.00028619796
    %v236 = vmul.f32 %v233, %v235
    %v237 = vadd.f32 %v236, 0.0036580483
    %v238 = vmul.f32 %v233, %v237
    %v239 = vadd.f32 %v238, 0.05243302
    %v240 = vmul.f32 %v233, %v239
    %v241 = vadd.f32 %v240, 0.18741608
    %v242 = vmul.f32 %v233, %v241
    %v243 = vadd.f32 %v242, 1.1283791
    %v244 = vmul.f32 %v146, %v243
    %v245 = vmul.f32 %v233, 3.8918573e-05
    %v246 = vadd.f32 %v245, 0.001143296
    %v247 = vmul.f32 %v233, %v246
    %v248 = vadd.f32 %v247, 0.014752088
    %v249 = vmul.f32 %v233, %v248
    %v250 = vadd.f32 %v249, 0.112945676
    %v251 = vmul.f32 %v233, %v250
    %v252 = vadd.f32 %v251, 0.4994258
    %v253 = vmul.f32 %v233, %v252
    %v254 = vadd.f32 %v253, 1.0
    %v255 = vrcp.pop %v254
    %v256 = vmul.f32 %v254, %v255
    %v257 = vsub.f32 1.0, %v256
    %v258 = vmul.f32 %v255, %v257
    %v259 = vadd.f32 %v255, %v258
    %vm260 = vweird.f32 %v254
    %vm261 = vweird.f32 %v255
    %vm262 = vmor %vm260, %vm261
    %v263 = vsel %vm262, %v255, %v259
    %v264 = vand.u32 2147483647, %v254
    %vm265 = vcmp.eq.f32.partialorder %v264, 8.507059e+37
    %v266 = vand.u32 %v254, 2147483648
    %v267 = vor.u32 1.1754944e-38, %v266
    %v268 = vsel %vm265, %v267, %v263
    %v269 = vmul.f32 %v244, %v268
    %v270 = vmin.f32 %v269, 1.0
    %v271 = vmax.f32 %v270, -1.0
    %v272 = vmul.f32 %v147, %v147
    %v273 = vmin.f32 16.0, %v272
    %v274 = vmul.f32 %v273, 2.1237322e-06
    %v275 = vadd.f32 %v274, 0.00028619796
    %v276 = vmul.f32 %v273, %v275
    %v277 = vadd.f32 %v276, 0.0036580483
    %v278 = vmul.f32 %v273, %v277
    %v279 = vadd.f32 %v278, 0.05243302
    %v280 = vmul.f32 %v273, %v279
    %v281 = vadd.f32 %v280, 0.18741608
    %v282 = vmul.f32 %v273, %v281
    %v283 = vadd.f32 %v282, 1.1283791
    %v284 = vmul.f32 %v147, %v283
    %v285 = vmul.f32 %v273, 3.8918573e-05
    %v286 = vadd.f32 %v285, 0.001143296
    %v287 = vmul.f32 %v273, %v286
    %v288 = vadd.f32 %v287, 0.014752088
    %v289 = vmul.f32 %v273, %v288
    %v290 = vadd.f32 %v289, 0.112945676
    %v291 = vmul.f32 %v273, %v290
    %v292 = vadd.f32 %v291, 0.4994258
    %v293 = vmul.f32 %v273, %v292
    %v294 = vadd.f32 %v293, 1.0
    %v295 = vrcp.pop %v294
    %v296 = vmul.f32 %v294, %v295
    %v297 = vsub.f32 1.0, %v296
    %v298 = vmul.f32 %v295, %v297
    %v299 = vadd.f32 %v295, %v298
    %vm300 = vweird.f32 %v294
    %vm301 = vweird.f32 %v295
    %vm302 = vmor %vm300, %vm301
    %v303 = vsel %vm302, %v295, %v299
    %v304 = vand.u32 2147483647, %v294
    %vm305 = vcmp.eq.f32.partialorder %v304, 8.507059e+37
    %v306 = vand.u32 %v294, 2147483648
    %v307 = vor.u32 1.1754944e-38, %v306
    %v308 = vsel %vm305, %v307, %v303
    %v309 = vmul.f32 %v284, %v308
    %v310 = vmin.f32 %v309, 1.0
    %v311 = vmax.f32 %v310, -1.0
    %v312 = vmul.f32 %v148, %v148
    %v313 = vmin.f32 16.0, %v312
    %v314 = vmul.f32 %v313, 2.1237322e-06
    %v315 = vadd.f32 %v314, 0.00028619796
    %v316 = vmul.f32 %v313, %v315
    %v317 = vadd.f32 %v316, 0.0036580483
    %v318 = vmul.f32 %v313, %v317
    %v319 = vadd.f32 %v318, 0.05243302
    %v320 = vmul.f32 %v313, %v319
    %v321 = vadd.f32 %v320, 0.18741608
    %v322 = vmul.f32 %v313, %v321
    %v323 = vadd.f32 %v322, 1.1283791
    %v324 = vmul.f32 %v148, %v323
    %v325 = vmul.f32 %v313, 3.8918573e-05
    %v326 = vadd.f32 %v325, 0.001143296
    %v327 = vmul.f32 %v313, %v326
    %v328 = vadd.f32 %v327, 0.014752088
    %v329 = vmul.f32 %v313, %v328
    %v330 = vadd.f32 %v329, 0.112945676
    %v331 = vmul.f32 %v313, %v330
    %v332 = vadd.f32 %v331, 0.4994258
    %v333 = vmul.f32 %v313, %v332
    %v334 = vadd.f32 %v333, 1.0
    %v335 = vrcp.pop %v334
    %v336 = vmul.f32 %v334, %v335
    %v337 = vsub.f32 1.0, %v336
    %v338 = vmul.f32 %v335, %v337
    %v339 = vadd.f32 %v335, %v338
    %vm340 = vweird.f32 %v334
    %vm341 = vweird.f32 %v335
    %vm342 = vmor %vm340, %vm341
    %v343 = vsel %vm342, %v335, %v339
    %v344 = vand.u32 2147483647, %v334
    %vm345 = vcmp.eq.f32.partialorder %v344, 8.507059e+37
    %v346 = vand.u32 %v334, 2147483648
    %v347 = vor.u32 1.1754944e-38, %v346
    %v348 = vsel %vm345, %v347, %v343
    %v349 = vmul.f32 %v324, %v348
    %v350 = vmin.f32 %v349, 1.0
    %v351 = vmax.f32 %v350, -1.0
    %v352 = vmul.f32 %v149, %v149
    %v353 = vmin.f32 16.0, %v352
    %v354 = vmul.f32 %v353, 2.1237322e-06
    %v355 = vadd.f32 %v354, 0.00028619796
    %v356 = vmul.f32 %v353, %v355
    %v357 = vadd.f32 %v356, 0.0036580483
    %v358 = vmul.f32 %v353, %v357
    %v359 = vadd.f32 %v358, 0.05243302
    %v360 = vmul.f32 %v353, %v359
    %v361 = vadd.f32 %v360, 0.18741608
    %v362 = vmul.f32 %v353, %v361
    %v363 = vadd.f32 %v362, 1.1283791
    %v364 = vmul.f32 %v149, %v363
    %v365 = vmul.f32 %v353, 3.8918573e-05
    %v366 = vadd.f32 %v365, 0.001143296
    %v367 = vmul.f32 %v353, %v366
    %v368 = vadd.f32 %v367, 0.014752088
    %v369 = vmul.f32 %v353, %v368
    %v370 = vadd.f32 %v369, 0.112945676
    %v371 = vmul.f32 %v353, %v370
    %v372 = vadd.f32 %v371, 0.4994258
    %v373 = vmul.f32 %v353, %v372
    %v374 = vadd.f32 %v373, 1.0
    %v375 = vrcp.pop %v374
    %v376 = vmul.f32 %v374, %v375
    %v377 = vsub.f32 1.0, %v376
    %v378 = vmul.f32 %v375, %v377
    %v379 = vadd.f32 %v375, %v378
    %vm380 = vweird.f32 %v374
    %vm381 = vweird.f32 %v375
    %vm382 = vmor %vm380, %vm381
    %v383 = vsel %vm382, %v375, %v379
    %v384 = vand.u32 2147483647, %v374
    %vm385 = vcmp.eq.f32.partialorder %v384, 8.507059e+37
    %v386 = vand.u32 %v374, 2147483648
    %v387 = vor.u32 1.1754944e-38, %v386
    %v388 = vsel %vm385, %v387, %v383
    %v389 = vmul.f32 %v364, %v388
    %v390 = vmin.f32 %v389, 1.0
    %v391 = vmax.f32 %v390, -1.0
    %v392 = vmul.f32 %v150, %v150
    %v393 = vmin.f32 16.0, %v392
    %v394 = vmul.f32 %v393, 2.1237322e-06
    %v395 = vadd.f32 %v394, 0.00028619796
    %v396 = vmul.f32 %v393, %v395
    %v397 = vadd.f32 %v396, 0.0036580483
    %v398 = vmul.f32 %v393, %v397
    %v399 = vadd.f32 %v398, 0.05243302
    %v400 = vmul.f32 %v393, %v399
    %v401 = vadd.f32 %v400, 0.18741608
    %v402 = vmul.f32 %v393, %v401
    %v403 = vadd.f32 %v402, 1.1283791
    %v404 = vmul.f32 %v150, %v403
    %v405 = vmul.f32 %v393, 3.8918573e-05
    %v406 = vadd.f32 %v405, 0.001143296
    %v407 = vmul.f32 %v393, %v406
    %v408 = vadd.f32 %v407, 0.014752088
    %v409 = vmul.f32 %v393, %v408
    %v410 = vadd.f32 %v409, 0.112945676
    %v411 = vmul.f32 %v393, %v410
    %v412 = vadd.f32 %v411, 0.4994258
    %v413 = vmul.f32 %v393, %v412
    %v414 = vadd.f32 %v413, 1.0
    %v415 = vrcp.pop %v414
    %v416 = vmul.f32 %v414, %v415
    %v417 = vsub.f32 1.0, %v416
    %v418 = vmul.f32 %v415, %v417
    %v419 = vadd.f32 %v415, %v418
    %vm420 = vweird.f32 %v414
    %vm421 = vweird.f32 %v415
    %vm422 = vmor %vm420, %vm421
    %v423 = vsel %vm422, %v415, %v419
    %v424 = vand.u32 2147483647, %v414
    %vm425 = vcmp.eq.f32.partialorder %v424, 8.507059e+37
    %v426 = vand.u32 %v414, 2147483648
    %v427 = vor.u32 1.1754944e-38, %v426
    %v428 = vsel %vm425, %v427, %v423
    %v429 = vmul.f32 %v404, %v428
    %v430 = vmin.f32 %v429, 1.0
    %v431 = vmax.f32 %v430, -1.0
    %v432 = vmul.f32 %v151, %v151
    %v433 = vmin.f32 16.0, %v432
    %v434 = vmul.f32 %v433, 2.1237322e-06
    %v435 = vadd.f32 %v434, 0.00028619796
    %v436 = vmul.f32 %v433, %v435
    %v437 = vadd.f32 %v436, 0.0036580483
    %v438 = vmul.f32 %v433, %v437
    %v439 = vadd.f32 %v438, 0.05243302
    %v440 = vmul.f32 %v433, %v439
    %v441 = vadd.f32 %v440, 0.18741608
    %v442 = vmul.f32 %v433, %v441
    %v443 = vadd.f32 %v442, 1.1283791
    %v444 = vmul.f32 %v151, %v443
    %v445 = vmul.f32 %v433, 3.8918573e-05
    %v446 = vadd.f32 %v445, 0.001143296
    %v447 = vmul.f32 %v433, %v446
    %v448 = vadd.f32 %v447, 0.014752088
    %v449 = vmul.f32 %v433, %v448
    %v450 = vadd.f32 %v449, 0.112945676
    %v451 = vmul.f32 %v433, %v450
    %v452 = vadd.f32 %v451, 0.4994258
    %v453 = vmul.f32 %v433, %v452
    %v454 = vadd.f32 %v453, 1.0
    %v455 = vrcp.pop %v454
    %v456 = vmul.f32 %v454, %v455
    %v457 = vsub.f32 1.0, %v456
    %v458 = vmul.f32 %v455, %v457
    %v459 = vadd.f32 %v455, %v458
    %vm460 = vweird.f32 %v454
    %vm461 = vweird.f32 %v455
    %vm462 = vmor %vm460, %vm461
    %v463 = vsel %vm462, %v455, %v459
    %v464 = vand.u32 2147483647, %v454
    %vm465 = vcmp.eq.f32.partialorder %v464, 8.507059e+37
    %v466 = vand.u32 %v454, 2147483648
    %v467 = vor.u32 1.1754944e-38, %v466
    %v468 = vsel %vm465, %v467, %v463
    %v469 = vmul.f32 %v444, %v468
    %v470 = vmin.f32 %v469, 1.0
    %v471 = vmax.f32 %v470, -1.0
    %v472 = vadd.f32 %v191, 1.0
    %v473 = vadd.f32 %v231, 1.0
    %v474 = vadd.f32 %v271, 1.0
    %v475 = vadd.f32 %v311, 1.0
    %v476 = vadd.f32 %v351, 1.0
    %v477 = vadd.f32 %v391, 1.0
    %v478 = vadd.f32 %v431, 1.0
    %v479 = vadd.f32 %v471, 1.0
    %v480 = vmul.f32 %v136, %v472
    %v481 = vmul.f32 %v137, %v473
    %v482 = vmul.f32 %v138, %v474
    %v483 = vmul.f32 %v139, %v475
    %v484 = vmul.f32 %v140, %v476
    %v485 = vmul.f32 %v141, %v477
    %v486 = vmul.f32 %v142, %v478
    %v487 = vmul.f32 %v143, %v479
    %488 = vst.msk [vmem:[%s3] sm:$0xff] %vm104, %v480
    %489 = vst.msk [vmem:[%s3 + $0x8] sm:$0xff] %vm104, %v481
    %490 = vst.msk [vmem:[%s3 + $0x10] sm:$0xff] %vm104, %v482
    %491 = vst.msk [vmem:[%s3 + $0x18] sm:$0xff] %vm104, %v483
    %492 = vst.msk [vmem:[%s3 + $0x20] sm:$0xff] %vm104, %v484
    %493 = vst.msk [vmem:[%s3 + $0x28] sm:$0xff] %vm104, %v485
    %494 = vst.msk [vmem:[%s3 + $0x30] sm:$0xff] %vm104, %v486
    %495 = vst.msk [vmem:[%s3 + $0x38] sm:$0xff] %vm104, %v487
  $region21: #{whisper_encoder_feats.24} parent=0 // pred_fallthru
    _
  // Predicated region
  $region22: #{whisper_encoder_feats.24} parent=0 // pred_check
    _
  $region23: #{whisper_encoder_feats.24} parent=0 // pred_check_branch
    %497 = sbr.rel (0) target = $region25
  $region24: #{whisper_encoder_feats.24} parent=0 // pred_region
    _
  $region25: #{whisper_encoder_feats.24} parent=0 // pred_fallthru
    _
  // Predicated region
  $region26: #{whisper_encoder_feats.24} parent=0 // pred_check
    _
  $region27: #{whisper_encoder_feats.24} parent=0 // pred_check_branch
    %499 = sbr.rel (0) target = $region29
  $region28: #{whisper_encoder_feats.24} parent=0 // pred_region
    _
  $region29: #{whisper_encoder_feats.24} parent=0 // pred_fallthru
    _

// kernel: whisper_encoder_feats.22
$region0: #{whisper_encoder_feats.22}
  #allocation0 [shape = 'u32[]', space=smem, size = 0x4, offset = 0x4, fixed_abs, tag = 'smem constant byte address 0x4 - core index']
  #allocation1 [shape = 'u32[72,128]{1,0:T(1,128)}', space=vmem, size = 0x9000, scoped, tag = 'internal scratch']
  #allocation2 [shape = 'f32[64,32]{1,0:T(8,128)}', space=vmem, size = 0x8000, scoped, tag = 'scratch operand']
  %s0 = inlined_call_operand.vmem [shape: f32[64,32], index: 0, kind: input, shape index: {}]
  %s1 = inlined_call_operand.vmem [shape: f32[32,32], index: 1, kind: input, shape index: {}]
  %s2 = inlined_call_operand.vmem [shape: f32[1,32], index: 2, kind: input, shape index: {}]
  %s3 = inlined_call_operand.vmem [shape: f32[64,32], index: 3, kind: input, shape index: {}]
  %s4 = inlined_call_operand.vmem [shape: f32[64,32], index: 4, kind: output, shape index: {}]
  %s5 = sld [smem:[#allocation0]]
  $region34: #{whisper_encoder_feats.22} parent=0
    _
  %s7 = ssub.s32 1, %s5
  %s8 = scalar_select 0, %s7, %s5
  // Predicated region
  $region2: #{whisper_encoder_feats.22} parent=0 // pred_check
    _
  $region3: #{whisper_encoder_feats.22} parent=0 // pred_check_branch
    %10 = sbr.rel (0) target = $region5
  $region4: #{whisper_encoder_feats.22} parent=0 // pred_region
    _
  $region5: #{whisper_encoder_feats.22} parent=0 // pred_fallthru
    _
  // Predicated region
  $region6: #{whisper_encoder_feats.22} parent=0 // pred_check
    _
  $region7: #{whisper_encoder_feats.22} parent=0 // pred_check_branch
    %12 = sbr.rel (0) target = $region9
  $region8: #{whisper_encoder_feats.22} parent=0 // pred_region
    _
  $region9: #{whisper_encoder_feats.22} parent=0 // pred_fallthru
    _
  // Predicated region
  $region10: #{whisper_encoder_feats.22} parent=0 // pred_check
    _
  $region11: #{whisper_encoder_feats.22} parent=0 // pred_check_branch
    %14 = sbr.rel (0) target = $region13
  $region12: #{whisper_encoder_feats.22} parent=0 // pred_region
    _
  $region13: #{whisper_encoder_feats.22} parent=0 // pred_fallthru
    _
  // Predicated region
  $region14: #{whisper_encoder_feats.22} parent=0 // pred_check
    _
  $region15: #{whisper_encoder_feats.22} parent=0 // pred_check_branch
    %16 = sbr.rel (0) target = $region17
  $region16: #{whisper_encoder_feats.22} parent=0 // pred_region
    _
  $region17: #{whisper_encoder_feats.22} parent=0 // pred_fallthru
    _
  %p18 = scmp.eq.s32.totalorder 0, 0
  // Predicated region
  $region18: #{whisper_encoder_feats.22} parent=0 // pred_check
    %p19 = pneg %p18
  $region19: #{whisper_encoder_feats.22} parent=0 // pred_check_branch
    %21 = sbr.rel (%p19) target = $region21
  $region20: #{whisper_encoder_feats.22} parent=0 // pred_region
    %vm22 = vcmask 261120
    %23 = vst.msk [vmem:[#allocation2] sm:$0xff] %vm22, 0.0
    %24 = vst.msk [vmem:[#allocation2 + $0x8] sm:$0xff] %vm22, 0.0
    %25 = vst.msk [vmem:[#allocation2 + $0x10] sm:$0xff] %vm22, 0.0
    %26 = vst.msk [vmem:[#allocation2 + $0x18] sm:$0xff] %vm22, 0.0
    %27 = vst.msk [vmem:[#allocation2 + $0x20] sm:$0xff] %vm22, 0.0
    %28 = vst.msk [vmem:[#allocation2 + $0x28] sm:$0xff] %vm22, 0.0
    %29 = vst.msk [vmem:[#allocation2 + $0x30] sm:$0xff] %vm22, 0.0
    %30 = vst.msk [vmem:[#allocation2 + $0x38] sm:$0xff] %vm22, 0.0
  $region21: #{whisper_encoder_feats.22} parent=0 // pred_fallthru
    _
  %v31 = vld [vmem:[#allocation2] sm:$0xff]
  %v32 = vld [vmem:[#allocation2 + $0x8] sm:$0xff]
  %v33 = vld [vmem:[#allocation2 + $0x10] sm:$0xff]
  %v34 = vld [vmem:[#allocation2 + $0x18] sm:$0xff]
  %v35 = vld [vmem:[#allocation2 + $0x20] sm:$0xff]
  %v36 = vld [vmem:[#allocation2 + $0x28] sm:$0xff]
  %v37 = vld [vmem:[#allocation2 + $0x30] sm:$0xff]
  %v38 = vld [vmem:[#allocation2 + $0x38] sm:$0xff]
  %v39 = vld [vmem:[%s0] sm:$0xff]
  %v40 = vld [vmem:[%s0 + $0x8] sm:$0xff]
  %v41 = vld [vmem:[%s0 + $0x10] sm:$0xff]
  %v42 = vld [vmem:[%s0 + $0x18] sm:$0xff]
  %v43 = vld [vmem:[%s0 + $0x20] sm:$0xff]
  %v44 = vld [vmem:[%s0 + $0x28] sm:$0xff]
  %v45 = vld [vmem:[%s0 + $0x30] sm:$0xff]
  %v46 = vld [vmem:[%s0 + $0x38] sm:$0xff]
  %v47 = vpack.c.bf16 %v40, %v39
  %v48 = vpack.c.bf16 %v42, %v41
  %v49 = vpack.c.bf16 %v44, %v43
  %v50 = vpack.c.bf16 %v46, %v45
  %v51 = vld [vmem:[%s1] sm:$0xff]
  %v52 = vld [vmem:[%s1 + $0x8] sm:$0xff]
  %v53 = vld [vmem:[%s1 + $0x10] sm:$0xff]
  %v54 = vld [vmem:[%s1 + $0x18] sm:$0xff]
  %v55 = vpack.c.bf16 %v52, %v51
  %v56 = vpack.c.bf16 %v54, %v53
  %vm57 = vcmask 261120
  %v59 = vsel %vm57, %v47, 0
  %v62 = vsel %vm57, %v48, 0
  %v65 = vsel %vm57, %v49, 0
  %v68 = vsel %vm57, %v50, 0
  %70 = vmatpush.bf16.msra.mxu0 0
  %71 = vmatpush.bf16.msra.mxu0 0
  %72 = vmatpush.bf16.msra.mxu0 0
  %73 = vmatpush.bf16.msra.mxu0 0
  %74 = vmatpush.bf16.msra.mxu0 0
  %75 = vmatpush.bf16.msra.mxu0 0
  %76 = vmatpush.bf16.msra.mxu0 %v56
  %77 = vmatpush.bf16.msra.mxu0 %v55
  %78 = vmatmul.bf16.gmra.mxu0 %v59
  %v79 = vpop.f32.mrf.mxu0
  %v80 = vadd.f32 0.0, %v79
  %v81 = vpop.f32.mrf.mxu0
  %v82 = vadd.f32 0.0, %v81
  %83 = vmatmul.bf16.gmra.mxu0 %v62
  %v84 = vpop.f32.mrf.mxu0
  %v85 = vadd.f32 0.0, %v84
  %v86 = vpop.f32.mrf.mxu0
  %v87 = vadd.f32 0.0, %v86
  %88 = vmatmul.bf16.gmra.mxu0 %v65
  %v89 = vpop.f32.mrf.mxu0
  %v90 = vadd.f32 0.0, %v89
  %v91 = vpop.f32.mrf.mxu0
  %v92 = vadd.f32 0.0, %v91
  %93 = vmatmul.bf16.gmra.mxu0 %v68
  %v94 = vpop.f32.mrf.mxu0
  %v95 = vadd.f32 0.0, %v94
  %v96 = vpop.f32.mrf.mxu0
  %v97 = vadd.f32 0.0, %v96
  %98 = vdwg.mxu0
  %v99 = vadd.f32 %v31, %v80
  %v100 = vadd.f32 %v32, %v82
  %v101 = vadd.f32 %v33, %v85
  %v102 = vadd.f32 %v34, %v87
  %v103 = vadd.f32 %v35, %v90
  %v104 = vadd.f32 %v36, %v92
  %v105 = vadd.f32 %v37, %v95
  %v106 = vadd.f32 %v38, %v97
  %107 = vst.msk [vmem:[#allocation2] sm:$0xff] %vm57, %v99
  %108 = vst.msk [vmem:[#allocation2 + $0x8] sm:$0xff] %vm57, %v100
  %109 = vst.msk [vmem:[#allocation2 + $0x10] sm:$0xff] %vm57, %v101
  %110 = vst.msk [vmem:[#allocation2 + $0x18] sm:$0xff] %vm57, %v102
  %111 = vst.msk [vmem:[#allocation2 + $0x20] sm:$0xff] %vm57, %v103
  %112 = vst.msk [vmem:[#allocation2 + $0x28] sm:$0xff] %vm57, %v104
  %113 = vst.msk [vmem:[#allocation2 + $0x30] sm:$0xff] %vm57, %v105
  %114 = vst.msk [vmem:[#allocation2 + $0x38] sm:$0xff] %vm57, %v106
  // Predicated region
  $region22: #{whisper_encoder_feats.22} parent=0 // pred_check
    %p115 = pneg %p18
  $region23: #{whisper_encoder_feats.22} parent=0 // pred_check_branch
    %117 = sbr.rel (%p115) target = $region25
  $region24: #{whisper_encoder_feats.22} parent=0 // pred_region
    %v118 = vld [vmem:[#allocation2] sm:$0xff]
    %v119 = vld [vmem:[#allocation2 + $0x8] sm:$0xff]
    %v120 = vld [vmem:[#allocation2 + $0x10] sm:$0xff]
    %v121 = vld [vmem:[#allocation2 + $0x18] sm:$0xff]
    %v122 = vld [vmem:[#allocation2 + $0x20] sm:$0xff]
    %v123 = vld [vmem:[#allocation2 + $0x28] sm:$0xff]
    %v124 = vld [vmem:[#allocation2 + $0x30] sm:$0xff]
    %v125 = vld [vmem:[#allocation2 + $0x38] sm:$0xff]
    %v126 = vld [vmem:[%s2] sm:$0x1]
    %v128 = vperm.slane %v126, 0
    %v130 = vadd.f32 %v118, %v128
    %v131 = vadd.f32 %v119, %v128
    %v132 = vadd.f32 %v120, %v128
    %v133 = vadd.f32 %v121, %v128
    %v134 = vadd.f32 %v122, %v128
    %v135 = vadd.f32 %v123, %v128
    %v136 = vadd.f32 %v124, %v128
    %v137 = vadd.f32 %v125, %v128
    %v138 = vld [vmem:[%s3] sm:$0xff]
    %v139 = vld [vmem:[%s3 + $0x8] sm:$0xff]
    %v140 = vld [vmem:[%s3 + $0x10] sm:$0xff]
    %v141 = vld [vmem:[%s3 + $0x18] sm:$0xff]
    %v142 = vld [vmem:[%s3 + $0x20] sm:$0xff]
    %v143 = vld [vmem:[%s3 + $0x28] sm:$0xff]
    %v144 = vld [vmem:[%s3 + $0x30] sm:$0xff]
    %v145 = vld [vmem:[%s3 + $0x38] sm:$0xff]
    %v146 = vadd.f32 %v130, %v138
    %v147 = vadd.f32 %v131, %v139
    %v148 = vadd.f32 %v132, %v140
    %v149 = vadd.f32 %v133, %v141
    %v150 = vadd.f32 %v134, %v142
    %v151 = vadd.f32 %v135, %v143
    %v152 = vadd.f32 %v136, %v144
    %v153 = vadd.f32 %v137, %v145
    %154 = vst.msk [vmem:[%s4] sm:$0xff] %vm57, %v146
    %155 = vst.msk [vmem:[%s4 + $0x8] sm:$0xff] %vm57, %v147
    %156 = vst.msk [vmem:[%s4 + $0x10] sm:$0xff] %vm57, %v148
    %157 = vst.msk [vmem:[%s4 + $0x18] sm:$0xff] %vm57, %v149
    %158 = vst.msk [vmem:[%s4 + $0x20] sm:$0xff] %vm57, %v150
    %159 = vst.msk [vmem:[%s4 + $0x28] sm:$0xff] %vm57, %v151
    %160 = vst.msk [vmem:[%s4 + $0x30] sm:$0xff] %vm57, %v152
    %161 = vst.msk [vmem:[%s4 + $0x38] sm:$0xff] %vm57, %v153
  $region25: #{whisper_encoder_feats.22} parent=0 // pred_fallthru
    _
  // Predicated region
  $region26: #{whisper_encoder_feats.22} parent=0 // pred_check
    _
  $region27: #{whisper_encoder_feats.22} parent=0 // pred_check_branch
    %163 = sbr.rel (0) target = $region29
  $region28: #{whisper_encoder_feats.22} parent=0 // pred_region
    _
  $region29: #{whisper_encoder_feats.22} parent=0 // pred_fallthru
    _
  // Predicated region
  $region30: #{whisper_encoder_feats.22} parent=0 // pred_check
    _
  $region31: #{whisper_encoder_feats.22} parent=0 // pred_check_branch
    %165 = sbr.rel (0) target = $region33
  $region32: #{whisper_encoder_feats.22} parent=0 // pred_region
    _
  $region33: #{whisper_encoder_feats.22} parent=0 // pred_fallthru
    _

// kernel: whisper_encoder_feats.25
$region0: #{whisper_encoder_feats.25}
  #allocation0 [shape = 'u32[]', space=smem, size = 0x4, offset = 0x4, fixed_abs, tag = 'smem constant byte address 0x4 - core index']
  #allocation1 [shape = 'u32[72,128]{1,0:T(1,128)}', space=vmem, size = 0x9000, scoped, tag = 'internal scratch']
  #allocation2 [shape = 'f32[64,32]{1,0:T(8,128)}', space=vmem, size = 0x8000, scoped, tag = 'scratch operand']
  %s0 = inlined_call_operand.vmem [shape: f32[64,64], index: 0, kind: input, shape index: {}]
  %s1 = inlined_call_operand.vmem [shape: f32[64,32], index: 1, kind: input, shape index: {}]
  %s2 = inlined_call_operand.vmem [shape: f32[1,32], index: 2, kind: input, shape index: {}]
  %s3 = inlined_call_operand.vmem [shape: f32[64,32], index: 3, kind: input, shape index: {}]
  %s4 = inlined_call_operand.vmem [shape: f32[64,32], index: 4, kind: output, shape index: {}]
  %s5 = sld [smem:[#allocation0]]
  $region34: #{whisper_encoder_feats.25} parent=0
    _
  %s7 = ssub.s32 1, %s5
  %s8 = scalar_select 0, %s7, %s5
  // Predicated region
  $region2: #{whisper_encoder_feats.25} parent=0 // pred_check
    _
  $region3: #{whisper_encoder_feats.25} parent=0 // pred_check_branch
    %10 = sbr.rel (0) target = $region5
  $region4: #{whisper_encoder_feats.25} parent=0 // pred_region
    _
  $region5: #{whisper_encoder_feats.25} parent=0 // pred_fallthru
    _
  // Predicated region
  $region6: #{whisper_encoder_feats.25} parent=0 // pred_check
    _
  $region7: #{whisper_encoder_feats.25} parent=0 // pred_check_branch
    %12 = sbr.rel (0) target = $region9
  $region8: #{whisper_encoder_feats.25} parent=0 // pred_region
    _
  $region9: #{whisper_encoder_feats.25} parent=0 // pred_fallthru
    _
  // Predicated region
  $region10: #{whisper_encoder_feats.25} parent=0 // pred_check
    _
  $region11: #{whisper_encoder_feats.25} parent=0 // pred_check_branch
    %14 = sbr.rel (0) target = $region13
  $region12: #{whisper_encoder_feats.25} parent=0 // pred_region
    _
  $region13: #{whisper_encoder_feats.25} parent=0 // pred_fallthru
    _
  // Predicated region
  $region14: #{whisper_encoder_feats.25} parent=0 // pred_check
    _
  $region15: #{whisper_encoder_feats.25} parent=0 // pred_check_branch
    %16 = sbr.rel (0) target = $region17
  $region16: #{whisper_encoder_feats.25} parent=0 // pred_region
    _
  $region17: #{whisper_encoder_feats.25} parent=0 // pred_fallthru
    _
  %p18 = scmp.eq.s32.totalorder 0, 0
  // Predicated region
  $region18: #{whisper_encoder_feats.25} parent=0 // pred_check
    %p19 = pneg %p18
  $region19: #{whisper_encoder_feats.25} parent=0 // pred_check_branch
    %21 = sbr.rel (%p19) target = $region21
  $region20: #{whisper_encoder_feats.25} parent=0 // pred_region
    %vm22 = vcmask 261120
    %23 = vst.msk [vmem:[#allocation2] sm:$0xff] %vm22, 0.0
    %24 = vst.msk [vmem:[#allocation2 + $0x8] sm:$0xff] %vm22, 0.0
    %25 = vst.msk [vmem:[#allocation2 + $0x10] sm:$0xff] %vm22, 0.0
    %26 = vst.msk [vmem:[#allocation2 + $0x18] sm:$0xff] %vm22, 0.0
    %27 = vst.msk [vmem:[#allocation2 + $0x20] sm:$0xff] %vm22, 0.0
    %28 = vst.msk [vmem:[#allocation2 + $0x28] sm:$0xff] %vm22, 0.0
    %29 = vst.msk [vmem:[#allocation2 + $0x30] sm:$0xff] %vm22, 0.0
    %30 = vst.msk [vmem:[#allocation2 + $0x38] sm:$0xff] %vm22, 0.0
  $region21: #{whisper_encoder_feats.25} parent=0 // pred_fallthru
    _
  %v31 = vld [vmem:[#allocation2] sm:$0xff]
  %v32 = vld [vmem:[#allocation2 + $0x8] sm:$0xff]
  %v33 = vld [vmem:[#allocation2 + $0x10] sm:$0xff]
  %v34 = vld [vmem:[#allocation2 + $0x18] sm:$0xff]
  %v35 = vld [vmem:[#allocation2 + $0x20] sm:$0xff]
  %v36 = vld [vmem:[#allocation2 + $0x28] sm:$0xff]
  %v37 = vld [vmem:[#allocation2 + $0x30] sm:$0xff]
  %v38 = vld [vmem:[#allocation2 + $0x38] sm:$0xff]
  %v39 = vld [vmem:[%s0] sm:$0xff]
  %v40 = vld [vmem:[%s0 + $0x8] sm:$0xff]
  %v41 = vld [vmem:[%s0 + $0x10] sm:$0xff]
  %v42 = vld [vmem:[%s0 + $0x18] sm:$0xff]
  %v43 = vld [vmem:[%s0 + $0x20] sm:$0xff]
  %v44 = vld [vmem:[%s0 + $0x28] sm:$0xff]
  %v45 = vld [vmem:[%s0 + $0x30] sm:$0xff]
  %v46 = vld [vmem:[%s0 + $0x38] sm:$0xff]
  %v47 = vpack.c.bf16 %v40, %v39
  %v48 = vpack.c.bf16 %v42, %v41
  %v49 = vpack.c.bf16 %v44, %v43
  %v50 = vpack.c.bf16 %v46, %v45
  %v51 = vld [vmem:[%s1] sm:$0xff]
  %v52 = vld [vmem:[%s1 + $0x8] sm:$0xff]
  %v53 = vld [vmem:[%s1 + $0x10] sm:$0xff]
  %v54 = vld [vmem:[%s1 + $0x18] sm:$0xff]
  %v55 = vld [vmem:[%s1 + $0x20] sm:$0xff]
  %v56 = vld [vmem:[%s1 + $0x28] sm:$0xff]
  %v57 = vld [vmem:[%s1 + $0x30] sm:$0xff]
  %v58 = vld [vmem:[%s1 + $0x38] sm:$0xff]
  %v59 = vpack.c.bf16 %v52, %v51
  %v60 = vpack.c.bf16 %v54, %v53
  %v61 = vpack.c.bf16 %v56, %v55
  %v62 = vpack.c.bf16 %v58, %v57
  %vm63 = vcmask 523264
  %v65 = vsel %vm63, %v47, 0
  %v68 = vsel %vm63, %v48, 0
  %v71 = vsel %vm63, %v49, 0
  %v74 = vsel %vm63, %v50, 0
  %76 = vmatpush.bf16.msra.mxu0 0
  %77 = vmatpush.bf16.msra.mxu0 0
  %78 = vmatpush.bf16.msra.mxu0 0
  %79 = vmatpush.bf16.msra.mxu0 0
  %80 = vmatpush.bf16.msra.mxu0 %v62
  %81 = vmatpush.bf16.msra.mxu0 %v61
  %82 = vmatpush.bf16.msra.mxu0 %v60
  %83 = vmatpush.bf16.msra.mxu0 %v59
  %84 = vmatmul.bf16.gmra.mxu0 %v65
  %v85 = vpop.f32.mrf.mxu0
  %v86 = vadd.f32 0.0, %v85
  %v87 = vpop.f32.mrf.mxu0
  %v88 = vadd.f32 0.0, %v87
  %89 = vmatmul.bf16.gmra.mxu0 %v68
  %v90 = vpop.f32.mrf.mxu0
  %v91 = vadd.f32 0.0, %v90
  %v92 = vpop.f32.mrf.mxu0
  %v93 = vadd.f32 0.0, %v92
  %94 = vmatmul.bf16.gmra.mxu0 %v71
  %v95 = vpop.f32.mrf.mxu0
  %v96 = vadd.f32 0.0, %v95
  %v97 = vpop.f32.mrf.mxu0
  %v98 = vadd.f32 0.0, %v97
  %99 = vmatmul.bf16.gmra.mxu0 %v74
  %v100 = vpop.f32.mrf.mxu0
  %v101 = vadd.f32 0.0, %v100
  %v102 = vpop.f32.mrf.mxu0
  %v103 = vadd.f32 0.0, %v102
  %104 = vdwg.mxu0
  %v105 = vadd.f32 %v31, %v86
  %v106 = vadd.f32 %v32, %v88
  %v107 = vadd.f32 %v33, %v91
  %v108 = vadd.f32 %v34, %v93
  %v109 = vadd.f32 %v35, %v96
  %v110 = vadd.f32 %v36, %v98
  %v111 = vadd.f32 %v37, %v101
  %v112 = vadd.f32 %v38, %v103
  %vm113 = vcmask 261120
  %114 = vst.msk [vmem:[#allocation2] sm:$0xff] %vm113, %v105
  %115 = vst.msk [vmem:[#allocation2 + $0x8] sm:$0xff] %vm113, %v106
  %116 = vst.msk [vmem:[#allocation2 + $0x10] sm:$0xff] %vm113, %v107
  %117 = vst.msk [vmem:[#allocation2 + $0x18] sm:$0xff] %vm113, %v108
  %118 = vst.msk [vmem:[#allocation2 + $0x20] sm:$0xff] %vm113, %v109
  %119 = vst.msk [vmem:[#allocation2 + $0x28] sm:$0xff] %vm113, %v110
  %120 = vst.msk [vmem:[#allocation2 + $0x30] sm:$0xff] %vm113, %v111
  %121 = vst.msk [vmem:[#allocation2 + $0x38] sm:$0xff] %vm113, %v112
  // Predicated region
  $region22: #{whisper_encoder_feats.25} parent=0 // pred_check
    %p122 = pneg %p18
  $region23: #{whisper_encoder_feats.25} parent=0 // pred_check_branch
    %124 = sbr.rel (%p122) target = $region25
  $region24: #{whisper_encoder_feats.25} parent=0 // pred_region
    %v125 = vld [vmem:[#allocation2] sm:$0xff]
    %v126 = vld [vmem:[#allocation2 + $0x8] sm:$0xff]
    %v127 = vld [vmem:[#allocation2 + $0x10] sm:$0xff]
    %v128 = vld [vmem:[#allocation2 + $0x18] sm:$0xff]
    %v129 = vld [vmem:[#allocation2 + $0x20] sm:$0xff]
    %v130 = vld [vmem:[#allocation2 + $0x28] sm:$0xff]
    %v131 = vld [vmem:[#allocation2 + $0x30] sm:$0xff]
    %v132 = vld [vmem:[#allocation2 + $0x38] sm:$0xff]
    %v133 = vld [vmem:[%s2] sm:$0x1]
    %v135 = vperm.slane %v133, 0
    %v137 = vadd.f32 %v125, %v135
    %v138 = vadd.f32 %v126, %v135
    %v139 = vadd.f32 %v127, %v135
    %v140 = vadd.f32 %v128, %v135
    %v141 = vadd.f32 %v129, %v135
    %v142 = vadd.f32 %v130, %v135
    %v143 = vadd.f32 %v131, %v135
    %v144 = vadd.f32 %v132, %v135
    %v145 = vld [vmem:[%s3] sm:$0xff]
    %v146 = vld [vmem:[%s3 + $0x8] sm:$0xff]
    %v147 = vld [vmem:[%s3 + $0x10] sm:$0xff]
    %v148 = vld [vmem:[%s3 + $0x18] sm:$0xff]
    %v149 = vld [vmem:[%s3 + $0x20] sm:$0xff]
    %v150 = vld [vmem:[%s3 + $0x28] sm:$0xff]
    %v151 = vld [vmem:[%s3 + $0x30] sm:$0xff]
    %v152 = vld [vmem:[%s3 + $0x38] sm:$0xff]
    %v153 = vadd.f32 %v137, %v145
    %v154 = vadd.f32 %v138, %v146
    %v155 = vadd.f32 %v139, %v147
    %v156 = vadd.f32 %v140, %v148
    %v157 = vadd.f32 %v141, %v149
    %v158 = vadd.f32 %v142, %v150
    %v159 = vadd.f32 %v143, %v151
    %v160 = vadd.f32 %v144, %v152
    %161 = vst.msk [vmem:[%s4] sm:$0xff] %vm113, %v153
    %162 = vst.msk [vmem:[%s4 + $0x8] sm:$0xff] %vm113, %v154
    %163 = vst.msk [vmem:[%s4 + $0x10] sm:$0xff] %vm113, %v155
    %164 = vst.msk [vmem:[%s4 + $0x18] sm:$0xff] %vm113, %v156
    %165 = vst.msk [vmem:[%s4 + $0x20] sm:$0xff] %vm113, %v157
    %166 = vst.msk [vmem:[%s4 + $0x28] sm:$0xff] %vm113, %v158
    %167 = vst.msk [vmem:[%s4 + $0x30] sm:$0xff] %vm113, %v159
    %168 = vst.msk [vmem:[%s4 + $0x38] sm:$0xff] %vm113, %v160
  $region25: #{whisper_encoder_feats.25} parent=0 // pred_fallthru
    _
  // Predicated region
  $region26: #{whisper_encoder_feats.25} parent=0 // pred_check
    _
  $region27: #{whisper_encoder_feats.25} parent=0 // pred_check_branch
    %170 = sbr.rel (0) target = $region29
  $region28: #{whisper_encoder_feats.25} parent=0 // pred_region
    _
  $region29: #{whisper_encoder_feats.25} parent=0 // pred_fallthru
    _
  // Predicated region
  $region30: #{whisper_encoder_feats.25} parent=0 // pred_check
    _
  $region31: #{whisper_encoder_feats.25} parent=0 // pred_check_branch
    %172 = sbr.rel (0) target = $region33
  $region32: #{whisper_encoder_feats.25} parent=0 // pred_region
    _
  $region33: #{whisper_encoder_feats.25} parent=0 // pred_fallthru
    _

// kernel: whisper_encoder_feats.33
$region0: #{whisper_encoder_feats.33}
  #allocation0 [shape = 'u32[]', space=smem, size = 0x4, offset = 0x4, fixed_abs, tag = 'smem constant byte address 0x4 - core index']
  #allocation1 [shape = 'u32[72,128]{1,0:T(1,128)}', space=vmem, size = 0x9000, scoped, tag = 'internal scratch']
  %s0 = inlined_call_operand.vmem [shape: f32[64,32], index: 0, kind: input, shape index: {}]
  %s1 = inlined_call_operand.vmem [shape: f32[1,32], index: 1, kind: input, shape index: {}]
  %s2 = inlined_call_operand.vmem [shape: f32[1,32], index: 2, kind: input, shape index: {}]
  %s3 = inlined_call_operand.hbm [shape: f32[64,32], index: 3, kind: output, shape index: {}]
  %s4 = sld [smem:[#allocation0]]
  $region22: #{whisper_encoder_feats.33} parent=0
    _
  %s6 = ssub.s32 1, %s4
  %s7 = scalar_select 0, %s6, %s4
  $region1: #{whisper_encoder_feats.33} parent=0
    #allocation2 [shape = 'u8[32768]{0}', space=vmem, size = 0x8000, scoped, tag = 'output window, operand 0, single buffered']
    #allocation3 [shape = 's32[1]{0}', space=sflag, size = 0x4, scoped, tag = 'scoped memory for whisper_encoder_feats.33']
    %8 = vsyncpa [#allocation3], 0
    // Predicated region
    $region2: #{whisper_encoder_feats.33} parent=1 // pred_check
      _
    $region3: #{whisper_encoder_feats.33} parent=1 // pred_check_branch
      %10 = sbr.rel (0) target = $region5
    $region4: #{whisper_encoder_feats.33} parent=1 // pred_region
      _
    $region5: #{whisper_encoder_feats.33} parent=1 // pred_fallthru
      _
    // Predicated region
    $region6: #{whisper_encoder_feats.33} parent=1 // pred_check
      _
    $region7: #{whisper_encoder_feats.33} parent=1 // pred_check_branch
      %12 = sbr.rel (0) target = $region9
    $region8: #{whisper_encoder_feats.33} parent=1 // pred_region
      _
    $region9: #{whisper_encoder_feats.33} parent=1 // pred_fallthru
      _
    // Predicated region
    $region10: #{whisper_encoder_feats.33} parent=1 // pred_check
      _
    $region11: #{whisper_encoder_feats.33} parent=1 // pred_check_branch
      %14 = sbr.rel (0) target = $region13
    $region12: #{whisper_encoder_feats.33} parent=1 // pred_region
      _
    $region13: #{whisper_encoder_feats.33} parent=1 // pred_fallthru
      _
    %v15 = vld [vmem:[%s0] sm:$0xff]
    %v16 = vld [vmem:[%s0 + $0x8] sm:$0xff]
    %v17 = vld [vmem:[%s0 + $0x10] sm:$0xff]
    %v18 = vld [vmem:[%s0 + $0x18] sm:$0xff]
    %v19 = vld [vmem:[%s0 + $0x20] sm:$0xff]
    %v20 = vld [vmem:[%s0 + $0x28] sm:$0xff]
    %v21 = vld [vmem:[%s0 + $0x30] sm:$0xff]
    %v22 = vld [vmem:[%s0 + $0x38] sm:$0xff]
    %vm23 = vcmask 261120
    %v24 = vsel %vm23, %v15, 0.0
    %25 = vadd.xlane.f32.xlu0 %v24
    %v26 = vpop.xlane.xlu0 %25
    %v27 = vsel %vm23, %v16, 0.0
    %28 = vadd.xlane.f32.xlu0 %v27
    %v29 = vpop.xlane.xlu0 %28
    %v30 = vsel %vm23, %v17, 0.0
    %31 = vadd.xlane.f32.xlu0 %v30
    %v32 = vpop.xlane.xlu0 %31
    %v33 = vsel %vm23, %v18, 0.0
    %34 = vadd.xlane.f32.xlu0 %v33
    %v35 = vpop.xlane.xlu0 %34
    %v36 = vsel %vm23, %v19, 0.0
    %37 = vadd.xlane.f32.xlu0 %v36
    %v38 = vpop.xlane.xlu0 %37
    %v39 = vsel %vm23, %v20, 0.0
    %40 = vadd.xlane.f32.xlu0 %v39
    %v41 = vpop.xlane.xlu0 %40
    %v42 = vsel %vm23, %v21, 0.0
    %43 = vadd.xlane.f32.xlu0 %v42
    %v44 = vpop.xlane.xlu0 %43
    %v45 = vsel %vm23, %v22, 0.0
    %46 = vadd.xlane.f32.xlu0 %v45
    %v47 = vpop.xlane.xlu0 %46
    %v48 = vrcp.pop 32.0
    %v49 = vmul.f32 32.0, %v48
    %v50 = vsub.f32 1.0, %v49
    %v51 = vmul.f32 %v48, %v50
    %v52 = vadd.f32 %v48, %v51
    %vm53 = vweird.f32 %v48
    %v54 = vsel %vm53, %v48, %v52
    %v55 = vmul.f32 %v26, %v54
    %v56 = vmul.f32 %v29, %v54
    %v57 = vmul.f32 %v32, %v54
    %v58 = vmul.f32 %v35, %v54
    %v59 = vmul.f32 %v38, %v54
    %v60 = vmul.f32 %v41, %v54
    %v61 = vmul.f32 %v44, %v54
    %v62 = vmul.f32 %v47, %v54
    %v63 = vsub.f32 %v15, %v55
    %v64 = vsub.f32 %v16, %v56
    %v65 = vsub.f32 %v17, %v57
    %v66 = vsub.f32 %v18, %v58
    %v67 = vsub.f32 %v19, %v59
    %v68 = vsub.f32 %v20, %v60
    %v69 = vsub.f32 %v21, %v61
    %v70 = vsub.f32 %v22, %v62
    %v71 = vmul.f32 %v63, %v63
    %v72 = vmul.f32 %v64, %v64
    %v73 = vmul.f32 %v65, %v65
    %v74 = vmul.f32 %v66, %v66
    %v75 = vmul.f32 %v67, %v67
    %v76 = vmul.f32 %v68, %v68
    %v77 = vmul.f32 %v69, %v69
    %v78 = vmul.f32 %v70, %v70
    %v79 = vsel %vm23, %v71, 0.0
    %80 = vadd.xlane.f32.xlu0 %v79
    %v81 = vpop.xlane.xlu0 %80
    %v82 = vsel %vm23, %v72, 0.0
    %83 = vadd.xlane.f32.xlu0 %v82
    %v84 = vpop.xlane.xlu0 %83
    %v85 = vsel %vm23, %v73, 0.0
    %86 = vadd.xlane.f32.xlu0 %v85
    %v87 = vpop.xlane.xlu0 %86
    %v88 = vsel %vm23, %v74, 0.0
    %89 = vadd.xlane.f32.xlu0 %v88
    %v90 = vpop.xlane.xlu0 %89
    %v91 = vsel %vm23, %v75, 0.0
    %92 = vadd.xlane.f32.xlu0 %v91
    %v93 = vpop.xlane.xlu0 %92
    %v94 = vsel %vm23, %v76, 0.0
    %95 = vadd.xlane.f32.xlu0 %v94
    %v96 = vpop.xlane.xlu0 %95
    %v97 = vsel %vm23, %v77, 0.0
    %98 = vadd.xlane.f32.xlu0 %v97
    %v99 = vpop.xlane.xlu0 %98
    %v100 = vsel %vm23, %v78, 0.0
    %101 = vadd.xlane.f32.xlu0 %v100
    %v102 = vpop.xlane.xlu0 %101
    %v103 = vmul.f32 %v81, %v54
    %v104 = vmul.f32 %v84, %v54
    %v105 = vmul.f32 %v87, %v54
    %v106 = vmul.f32 %v90, %v54
    %v107 = vmul.f32 %v93, %v54
    %v108 = vmul.f32 %v96, %v54
    %v109 = vmul.f32 %v99, %v54
    %v110 = vmul.f32 %v102, %v54
    %v111 = vadd.f32 %v103, 1e-05
    %v112 = vadd.f32 %v104, 1e-05
    %v113 = vadd.f32 %v105, 1e-05
    %v114 = vadd.f32 %v106, 1e-05
    %v115 = vadd.f32 %v107, 1e-05
    %v116 = vadd.f32 %v108, 1e-05
    %v117 = vadd.f32 %v109, 1e-05
    %v118 = vadd.f32 %v110, 1e-05
    %v119 = vrsqrt.pop %v111
    %v120 = vmul.f32 %v119, %v111
    %v121 = vmul.f32 %v120, %v119
    %v122 = vmul.f32 0.5, %v121
    %v123 = vsub.f32 1.5, %v122
    %v124 = vmul.f32 %v119, %v123
    %vm125 = vweird.f32 %v111
    %vm126 = vweird.f32 %v119
    %vm127 = vmor %vm125, %vm126
    %v128 = vsel %vm127, %v119, %v124
    %v129 = vrsqrt.pop %v112
    %v130 = vmul.f32 %v129, %v112
    %v131 = vmul.f32 %v130, %v129
    %v132 = vmul.f32 0.5, %v131
    %v133 = vsub.f32 1.5, %v132
    %v134 = vmul.f32 %v129, %v133
    %vm135 = vweird.f32 %v112
    %vm136 = vweird.f32 %v129
    %vm137 = vmor %vm135, %vm136
    %v138 = vsel %vm137, %v129, %v134
    %v139 = vrsqrt.pop %v113
    %v140 = vmul.f32 %v139, %v113
    %v141 = vmul.f32 %v140, %v139
    %v142 = vmul.f32 0.5, %v141
    %v143 = vsub.f32 1.5, %v142
    %v144 = vmul.f32 %v139, %v143
    %vm145 = vweird.f32 %v113
    %vm146 = vweird.f32 %v139
    %vm147 = vmor %vm145, %vm146
    %v148 = vsel %vm147, %v139, %v144
    %v149 = vrsqrt.pop %v114
    %v150 = vmul.f32 %v149, %v114
    %v151 = vmul.f32 %v150, %v149
    %v152 = vmul.f32 0.5, %v151
    %v153 = vsub.f32 1.5, %v152
    %v154 = vmul.f32 %v149, %v153
    %vm155 = vweird.f32 %v114
    %vm156 = vweird.f32 %v149
    %vm157 = vmor %vm155, %vm156
    %v158 = vsel %vm157, %v149, %v154
    %v159 = vrsqrt.pop %v115
    %v160 = vmul.f32 %v159, %v115
    %v161 = vmul.f32 %v160, %v159
    %v162 = vmul.f32 0.5, %v161
    %v163 = vsub.f32 1.5, %v162
    %v164 = vmul.f32 %v159, %v163
    %vm165 = vweird.f32 %v115
    %vm166 = vweird.f32 %v159
    %vm167 = vmor %vm165, %vm166
    %v168 = vsel %vm167, %v159, %v164
    %v169 = vrsqrt.pop %v116
    %v170 = vmul.f32 %v169, %v116
    %v171 = vmul.f32 %v170, %v169
    %v172 = vmul.f32 0.5, %v171
    %v173 = vsub.f32 1.5, %v172
    %v174 = vmul.f32 %v169, %v173
    %vm175 = vweird.f32 %v116
    %vm176 = vweird.f32 %v169
    %vm177 = vmor %vm175, %vm176
    %v178 = vsel %vm177, %v169, %v174
    %v179 = vrsqrt.pop %v117
    %v180 = vmul.f32 %v179, %v117
    %v181 = vmul.f32 %v180, %v179
    %v182 = vmul.f32 0.5, %v181
    %v183 = vsub.f32 1.5, %v182
    %v184 = vmul.f32 %v179, %v183
    %vm185 = vweird.f32 %v117
    %vm186 = vweird.f32 %v179
    %vm187 = vmor %vm185, %vm186
    %v188 = vsel %vm187, %v179, %v184
    %v189 = vrsqrt.pop %v118
    %v190 = vmul.f32 %v189, %v118
    %v191 = vmul.f32 %v190, %v189
    %v192 = vmul.f32 0.5, %v191
    %v193 = vsub.f32 1.5, %v192
    %v194 = vmul.f32 %v189, %v193
    %vm195 = vweird.f32 %v118
    %vm196 = vweird.f32 %v189
    %vm197 = vmor %vm195, %vm196
    %v198 = vsel %vm197, %v189, %v194
    %v199 = vmul.f32 %v63, %v128
    %v200 = vmul.f32 %v64, %v138
    %v201 = vmul.f32 %v65, %v148
    %v202 = vmul.f32 %v66, %v158
    %v203 = vmul.f32 %v67, %v168
    %v204 = vmul.f32 %v68, %v178
    %v205 = vmul.f32 %v69, %v188
    %v206 = vmul.f32 %v70, %v198
    %v207 = vld [vmem:[%s1] sm:$0x1]
    %v209 = vperm.slane %v207, 0
    %v211 = vmul.f32 %v199, %v209
    %v212 = vmul.f32 %v200, %v209
    %v213 = vmul.f32 %v201, %v209
    %v214 = vmul.f32 %v202, %v209
    %v215 = vmul.f32 %v203, %v209
    %v216 = vmul.f32 %v204, %v209
    %v217 = vmul.f32 %v205, %v209
    %v218 = vmul.f32 %v206, %v209
    %v219 = vld [vmem:[%s2] sm:$0x1]
    %v221 = vperm.slane %v219, 0
    %v223 = vadd.f32 %v211, %v221
    %v224 = vadd.f32 %v212, %v221
    %v225 = vadd.f32 %v213, %v221
    %v226 = vadd.f32 %v214, %v221
    %v227 = vadd.f32 %v215, %v221
    %v228 = vadd.f32 %v216, %v221
    %v229 = vadd.f32 %v217, %v221
    %v230 = vadd.f32 %v218, %v221
    %231 = vst.msk [vmem:[#allocation2] sm:$0xff] %vm23, %v223
    %232 = vst.msk [vmem:[#allocation2 + $0x8] sm:$0xff] %vm23, %v224
    %233 = vst.msk [vmem:[#allocation2 + $0x10] sm:$0xff] %vm23, %v225
    %234 = vst.msk [vmem:[#allocation2 + $0x18] sm:$0xff] %vm23, %v226
    %235 = vst.msk [vmem:[#allocation2 + $0x20] sm:$0xff] %vm23, %v227
    %236 = vst.msk [vmem:[#allocation2 + $0x28] sm:$0xff] %vm23, %v228
    %237 = vst.msk [vmem:[#allocation2 + $0x30] sm:$0xff] %vm23, %v229
    %238 = vst.msk [vmem:[#allocation2 + $0x38] sm:$0xff] %vm23, %v230
    // Predicated region
    $region14: #{whisper_encoder_feats.33} parent=1 // pred_check
      _
    $region15: #{whisper_encoder_feats.33} parent=1 // pred_check_branch
      %240 = sbr.rel (0) target = $region17
    $region16: #{whisper_encoder_feats.33} parent=1 // pred_region
      %242 = vsyncadd [#allocation3], 0
      %s243 = sshll.u32 [#allocation2], 4
      %s244 = int_to_ptr.vmem [resolvable:$true] %s243
      %s245 = sshll.u32 %s3, 4
      %s246 = int_to_ptr.hbm [resolvable:$true] %s245
      %251 = dma.vmem_to_hbm [thread:$0]  %s244, 1024, %s246, [#allocation3], 128, 128, 8
    $region17: #{whisper_encoder_feats.33} parent=1 // pred_fallthru
      _
    // Predicated region
    $region18: #{whisper_encoder_feats.33} parent=1 // pred_check
      _
    $region19: #{whisper_encoder_feats.33} parent=1 // pred_check_branch
      %253 = sbr.rel (0) target = $region21
    $region20: #{whisper_encoder_feats.33} parent=1 // pred_region
      %255 = dma.done [#allocation3], 1024
    $region21: #{whisper_encoder_feats.33} parent=1 // pred_fallthru
      _
    %256 = vsyncpa [#allocation3], 1

</llo_original>
